<compile_context>
chip_gen: v5e
topology: v5e:2x2
jax: 0.10.0
libtpu: 0.0.40
codegen_flags: <defaults>
</compile_context>

<pallas_src>
import math
from functools import partial

import jax
import jax.numpy as jnp
import numpy as np
from jax.experimental import pallas as pl
from jax.experimental.pallas import tpu as pltpu


# --------------------------------------------------------------------------- helpers

def _full_spec(shape):
    nd = len(shape)
    return pl.BlockSpec(shape, lambda i, _nd=nd: (0,) * _nd)


def _phase_widen_weight(w_pt, s, k):
    """Phase-decompose a ConvTranspose2d(stride=s, padding=k//2, output_padding=s-1) weight.

    w_pt: (Cin, Cout, k, k) (PyTorch layout).  Returns Wt (T*T, Cin, s*s*Cout), T=2, with

      y[n, co, s*oy+ph, s*ox+pw] = b[co]
          + sum_{dh,dw,ci} xpad[n, oy+dh, ox+dw, ci] * Wt[dh*T+dw, ci, (ph*s+pw)*Cout+co]

    where xpad is the NHWC input zero-padded by one trailing row/col.
    """
    assert s == 2 and k == 3, "phase decomposition specialised to stride=2, kernel=3"
    Cin, Cout = w_pt.shape[0], w_pt.shape[1]
    p = k // 2
    T = 2
    w_pt = w_pt.astype(jnp.float32)
    Wt = jnp.zeros((T * T, Cin, s * s * Cout), jnp.float32)
    for dh in range(T):
        for dw in range(T):
            for ph in range(s):
                for pw in range(s):
                    kh = ph + p - s * dh
                    kw = pw + p - s * dw
                    if 0 <= kh < k and 0 <= kw < k:
                        col = (ph * s + pw) * Cout
                        Wt = Wt.at[dh * T + dw, :, col:col + Cout].set(w_pt[:, :, kh, kw])
    return Wt


# --------------------------------------------------------------------------- fused kernel

def _fused_synthesis_kernel(xp_ref, w1_ref, b1_ref, g1_ref, bt1_ref, w2_ref, b2_ref,
                            out_ref, y1p_ref, *, N, H, W, Cin, C1, C2, s):
    """deconv1 (phase-decomposed) -> GDN -> deconv2 (phase-decomposed), all resident in VMEM."""
    M = N * H * W
    T = 2

    # ----- layer 1: stride-2 ConvTranspose2d as T*T stride-1 channel matmuls; the wide RHS
    #       carries all s*s output phases in its columns.
    w1 = w1_ref[...]                                        # (T*T, Cin, s*s*C1)
    acc1 = jnp.zeros((M, s * s * C1), jnp.float32)
    for dh in range(T):
        for dw in range(T):
            patch = xp_ref[:, dh:dh + H, dw:dw + W, :].reshape(M, Cin)
            acc1 = acc1 + jnp.dot(patch, w1[dh * T + dw],
                                  preferred_element_type=jnp.float32)
    acc1 = acc1 + b1_ref[...]

    # ----- fused GDN epilogue on the live accumulator (block-diagonal gamma over phases;
    #       the rsqrt runs on the EUP slot).
    norm = jnp.dot(acc1 * acc1, g1_ref[...],
                   preferred_element_type=jnp.float32) + bt1_ref[...]
    y1 = acc1 * jax.lax.rsqrt(norm)                         # (M, s*s*C1)

    # ----- scatter the s*s phase planes into a zero-padded coarse-grid VMEM scratch.
    #       The trailing pad row/col supplies the boundary zeros for layer 2's taps.
    y1p_ref[...] = jnp.zeros_like(y1p_ref)
    for qh in range(s):
        for qw in range(s):
            c0 = (qh * s + qw) * C1
            y1p_ref[qh * s + qw, :, 0:H, 0:W, :] = y1[:, c0:c0 + C1].reshape(N, H, W, C1)

    # ----- layer 2: same phase decomposition, reading the phase planes directly.
    #       Output rows are grouped by the parity (th, tw) of the layer-2 coarse position.
    w2 = w2_ref[...]                                        # (T*T, C1, s*s*C2)
    b2 = b2_ref[...]
    for th in range(s):
        for tw in range(s):
            acc2 = jnp.zeros((M, s * s * C2), jnp.float32)
            for dh in range(T):
                for dw in range(T):
                    qh, sh = (th + dh) % s, (th + dh) // s
                    qw, sw = (tw + dw) % s, (tw + dw) // s
                    patch = y1p_ref[qh * s + qw, :, sh:sh + H, sw:sw + W, :].reshape(M, C1)
                    acc2 = acc2 + jnp.dot(patch, w2[dh * T + dw],
                                          preferred_element_type=jnp.float32)
            out_ref[th * s + tw, :, :] = acc2 + b2


# --------------------------------------------------------------------------- wrapper

def synthesis_transform_pallas(x_nchw, params, kernel):
    """Forward pass of SynthesisTransform (NCHW in / NCHW out) as one fused Pallas kernel."""
    # TODO(synk): generalise the fused kernel beyond the 2-layer / stride-2 / kernel-3 config
    #             (deeper nets chain the same phase-decomposed layer body; production sizes
    #             additionally tile the grid over output rows and cast MXU operands to bf16).
    assert len(params) == 2 and kernel == 3
    l1, l2 = params
    assert l1["stride"] == 2 and l2["stride"] == 2
    s = 2
    N, Cin, H, W = x_nchw.shape
    C1 = l1["w"].shape[1]
    C2 = l2["w"].shape[1]
    M = N * H * W

    # NCHW -> NHWC + one trailing zero row/col (phase taps look one coarse pixel ahead).
    x_nhwc = jnp.transpose(x_nchw, (0, 2, 3, 1)).astype(jnp.float32)
    xp = jnp.pad(x_nhwc, ((0, 0), (0, 1), (0, 1), (0, 0)))

    # Phase-decomposed weights / biases (wide layout: columns = (phase, channel)).
    w1 = _phase_widen_weight(l1["w"], s, kernel)                          # (4, Cin, 4*C1)
    b1 = jnp.tile(l1["b"].astype(jnp.float32), s * s)[None, :]            # (1, 4*C1)
    g1 = jnp.kron(jnp.eye(s * s, dtype=jnp.float32),
                  l1["gdn_gamma"].T.astype(jnp.float32))                  # (4*C1, 4*C1)
    bt1 = jnp.tile(l1["gdn_beta"].astype(jnp.float32), s * s)[None, :]    # (1, 4*C1)
    w2 = _phase_widen_weight(l2["w"], s, kernel)                          # (4, C1, 4*C2)
    b2 = jnp.tile(l2["b"].astype(jnp.float32), s * s)[None, :]            # (1, 4*C2)

    out = pl.pallas_call(
        partial(_fused_synthesis_kernel, N=N, H=H, W=W, Cin=Cin, C1=C1, C2=C2, s=s),
        grid=(1,),
        in_specs=[_full_spec(xp.shape), _full_spec(w1.shape), _full_spec(b1.shape),
                  _full_spec(g1.shape), _full_spec(bt1.shape),
                  _full_spec(w2.shape), _full_spec(b2.shape)],
        out_specs=_full_spec((s * s, M, s * s * C2)),
        out_shape=jax.ShapeDtypeStruct((s * s, M, s * s * C2), jnp.float32),
        scratch_shapes=[pltpu.VMEM((s * s, N, H + 1, W + 1, C1), jnp.float32)],
        compiler_params=pltpu.CompilerParams(dimension_semantics=("arbitrary",)),
    )(xp, w1, b1, g1, bt1, w2, b2)

    # Reassemble: out[th*2+tw, n*H*W + a*W + b, (ph*2+pw)*C2 + co]
    #             == y[n, co, 4a + 2*th + ph, 4b + 2*tw + pw].
    o = out.reshape(s, s, N, H, W, s, s, C2)
    y = jnp.transpose(o, (2, 7, 3, 0, 5, 4, 1, 6)).reshape(N, C2, s * s * H, s * s * W)
    return y


# --------------------------------------------------------------------------- init (mirrors the module)

def init_synthesis_params(key, strides, kernel, latent_channels, inter_channels, out_channels):
    """ConvTranspose2d weight (Cin,Cout,k,k): xavier_normal_(gain=sqrt(2)); bias = 0.01.
    GDN: beta = 1.0, gamma = 0.1 * I (standard GDN init)."""
    params = []
    n = len(strides)
    for i, s in enumerate(strides):
        cin = latent_channels if i == 0 else inter_channels
        cout = out_channels if i == n - 1 else inter_channels
        fan_in = cout * kernel * kernel    # torch: dim-1 of (Cin,Cout,k,k) * receptive field
        fan_out = cin * kernel * kernel
        std = math.sqrt(2.0) * math.sqrt(2.0 / (fan_in + fan_out))
        key, wk = jax.random.split(key)
        w = std * jax.random.normal(wk, (cin, cout, kernel, kernel), dtype=jnp.float32)
        b = jnp.full((cout,), 0.01, dtype=jnp.float32)
        layer = {"w": w, "b": b, "stride": s}
        if i < n - 1:
            layer["gdn_beta"] = jnp.ones((cout,), dtype=jnp.float32)
            layer["gdn_gamma"] = 0.1 * jnp.eye(cout, dtype=jnp.float32)
        params.append(layer)
    return params


# --------------------------------------------------------------------------- pure-JAX reference (verification only)

def _ref_conv_transpose(x_nchw, w_pt, bias, s, k):
    p = k // 2
    op = s - 1
    pad = k - 1 - p
    w_oihw = jnp.transpose(jnp.flip(w_pt, axis=(2, 3)), (1, 0, 2, 3))
    y = jax.lax.conv_general_dilated(
        x_nchw, w_oihw, window_strides=(1, 1),
        padding=[(pad, pad + op), (pad, pad + op)],
        lhs_dilation=(s, s),
        dimension_numbers=("NCHW", "OIHW", "NCHW"))
    return y + bias.reshape(1, -1, 1, 1)


def _ref_gdn(x_nchw, gamma, beta):
    norm = jnp.einsum("nchw,dc->ndhw", x_nchw * x_nchw, gamma) + beta.reshape(1, -1, 1, 1)
    return x_nchw / jnp.sqrt(norm)


def _ref_forward(x_nchw, params, kernel):
    x = x_nchw
    for layer in params:
        x = _ref_conv_transpose(x, layer["w"], layer["b"], layer["stride"], kernel)
        if "gdn_beta" in layer:
            x = _ref_gdn(x, layer["gdn_gamma"], layer["gdn_beta"])
    return x


# --------------------------------------------------------------------------- main

if __name__ == "__main__":
    STRIDES = (2, 2)
    KERNEL = 3
    LATENT_CHANNELS = 4
    INTER_CHANNELS = 8
    OUT_CHANNELS = 3

    key = jax.random.PRNGKey(0)
    key, xk = jax.random.split(key)
    x = jax.random.normal(xk, (2, LATENT_CHANNELS, 8, 8), dtype=jnp.float32)   # NCHW

    params = init_synthesis_params(key, STRIDES, KERNEL, LATENT_CHANNELS,
                                   INTER_CHANNELS, OUT_CHANNELS)

    fwd = jax.jit(lambda inp: synthesis_transform_pallas(inp, params, KERNEL))
    y = jax.block_until_ready(fwd(x))

    y_ref = jax.block_until_ready(_ref_forward(x, params, KERNEL))
    assert y.shape == (2, OUT_CHANNELS, 32, 32), y.shape
    max_err = float(np.max(np.abs(np.asarray(y) - np.asarray(y_ref))))
    assert np.allclose(np.asarray(y), np.asarray(y_ref), rtol=5e-4, atol=1e-5), max_err
    print("KERNEL_OK")
</pallas_src>

<mosaic_0001>
module attributes {stable_mosaic.version = 11 : i64} {
  func.func @_fused_synthesis_kernel(%arg0: i32, %arg1: memref<2x9x9x4xf32, #tpu.memory_space<vmem>>, %arg2: memref<4x4x32xf32, #tpu.memory_space<vmem>>, %arg3: memref<1x32xf32, #tpu.memory_space<vmem>>, %arg4: memref<32x32xf32, #tpu.memory_space<vmem>>, %arg5: memref<1x32xf32, #tpu.memory_space<vmem>>, %arg6: memref<4x8x12xf32, #tpu.memory_space<vmem>>, %arg7: memref<1x12xf32, #tpu.memory_space<vmem>>, %arg8: memref<4x128x12xf32, #tpu.memory_space<vmem>>, %arg9: memref<4x2x9x9x8xf32, #tpu.memory_space<vmem>>) attributes {dimension_semantics = [#tpu.dimension_semantics<arbitrary>], iteration_bounds = array<i64: 1>, scalar_prefetch = 0 : i64, scratch_operands = 1 : i64, tpu.core_type = #tpu.core_type<tc>, window_params = [{pipeline_mode = #tpu.pipeline_mode<synchronous>, transform_indices = @transform_0, window_bounds = array<i64: 2, 9, 9, 4>}, {pipeline_mode = #tpu.pipeline_mode<synchronous>, transform_indices = @transform_1, window_bounds = array<i64: 4, 4, 32>}, {pipeline_mode = #tpu.pipeline_mode<synchronous>, transform_indices = @transform_2, window_bounds = array<i64: 1, 32>}, {pipeline_mode = #tpu.pipeline_mode<synchronous>, transform_indices = @transform_3, window_bounds = array<i64: 32, 32>}, {pipeline_mode = #tpu.pipeline_mode<synchronous>, transform_indices = @transform_4, window_bounds = array<i64: 1, 32>}, {pipeline_mode = #tpu.pipeline_mode<synchronous>, transform_indices = @transform_5, window_bounds = array<i64: 4, 8, 12>}, {pipeline_mode = #tpu.pipeline_mode<synchronous>, transform_indices = @transform_6, window_bounds = array<i64: 1, 12>}, {pipeline_mode = #tpu.pipeline_mode<synchronous>, transform_indices = @transform_7, window_bounds = array<i64: 4, 128, 12>}]} {
    %c0 = arith.constant 0 : index
    %c0_0 = arith.constant 0 : index
    %c0_1 = arith.constant 0 : index
    %0 = vector.load %arg2[%c0, %c0_0, %c0_1] : memref<4x4x32xf32, #tpu.memory_space<vmem>>, vector<4x4x32xf32>
    %cst = arith.constant 0.000000e+00 : f32
    %1 = vector.broadcast %cst : f32 to vector<128x32xf32>
    %c0_2 = arith.constant 0 : index
    %c0_3 = arith.constant 0 : index
    %c0_4 = arith.constant 0 : index
    %c0_5 = arith.constant 0 : index
    %2 = vector.load %arg1[%c0_2, %c0_3, %c0_4, %c0_5] : memref<2x9x9x4xf32, #tpu.memory_space<vmem>>, vector<2x8x8x4xf32>
    %3 = vector.shape_cast %2 : vector<2x8x8x4xf32> to vector<128x4xf32>
    %4 = vector.extract_strided_slice %0 {offsets = [0, 0, 0], sizes = [1, 4, 32], strides = [1, 1, 1]} : vector<4x4x32xf32> to vector<1x4x32xf32>
    %5 = vector.shape_cast %4 : vector<1x4x32xf32> to vector<4x32xf32>
    %cst_6 = arith.constant dense<0.000000e+00> : vector<128x32xf32>
    %6 = tpu.matmul %3, %5, %cst_6 {dimension_numbers = #tpu.dot_dimension_numbers<[1], [0], [0], [1], [0, 0, 1, 1], [], []>} : vector<128x4xf32>, vector<4x32xf32>, vector<128x32xf32> -> vector<128x32xf32>
    %7 = arith.addf %1, %6 : vector<128x32xf32>
    %c0_7 = arith.constant 0 : index
    %c0_8 = arith.constant 0 : index
    %c1 = arith.constant 1 : index
    %c0_9 = arith.constant 0 : index
    %8 = vector.load %arg1[%c0_7, %c0_8, %c1, %c0_9] : memref<2x9x9x4xf32, #tpu.memory_space<vmem>>, vector<2x8x8x4xf32>
    %9 = vector.shape_cast %8 : vector<2x8x8x4xf32> to vector<128x4xf32>
    %10 = vector.extract_strided_slice %0 {offsets = [1, 0, 0], sizes = [1, 4, 32], strides = [1, 1, 1]} : vector<4x4x32xf32> to vector<1x4x32xf32>
    %11 = vector.shape_cast %10 : vector<1x4x32xf32> to vector<4x32xf32>
    %cst_10 = arith.constant dense<0.000000e+00> : vector<128x32xf32>
    %12 = tpu.matmul %9, %11, %cst_10 {dimension_numbers = #tpu.dot_dimension_numbers<[1], [0], [0], [1], [0, 0, 1, 1], [], []>} : vector<128x4xf32>, vector<4x32xf32>, vector<128x32xf32> -> vector<128x32xf32>
    %13 = arith.addf %7, %12 : vector<128x32xf32>
    %c0_11 = arith.constant 0 : index
    %c1_12 = arith.constant 1 : index
    %c0_13 = arith.constant 0 : index
    %c0_14 = arith.constant 0 : index
    %14 = vector.load %arg1[%c0_11, %c1_12, %c0_13, %c0_14] : memref<2x9x9x4xf32, #tpu.memory_space<vmem>>, vector<2x8x8x4xf32>
    %15 = vector.shape_cast %14 : vector<2x8x8x4xf32> to vector<128x4xf32>
    %16 = vector.extract_strided_slice %0 {offsets = [2, 0, 0], sizes = [1, 4, 32], strides = [1, 1, 1]} : vector<4x4x32xf32> to vector<1x4x32xf32>
    %17 = vector.shape_cast %16 : vector<1x4x32xf32> to vector<4x32xf32>
    %cst_15 = arith.constant dense<0.000000e+00> : vector<128x32xf32>
    %18 = tpu.matmul %15, %17, %cst_15 {dimension_numbers = #tpu.dot_dimension_numbers<[1], [0], [0], [1], [0, 0, 1, 1], [], []>} : vector<128x4xf32>, vector<4x32xf32>, vector<128x32xf32> -> vector<128x32xf32>
    %19 = arith.addf %13, %18 : vector<128x32xf32>
    %c0_16 = arith.constant 0 : index
    %c1_17 = arith.constant 1 : index
    %c1_18 = arith.constant 1 : index
    %c0_19 = arith.constant 0 : index
    %20 = vector.load %arg1[%c0_16, %c1_17, %c1_18, %c0_19] : memref<2x9x9x4xf32, #tpu.memory_space<vmem>>, vector<2x8x8x4xf32>
    %21 = vector.shape_cast %20 : vector<2x8x8x4xf32> to vector<128x4xf32>
    %22 = vector.extract_strided_slice %0 {offsets = [3, 0, 0], sizes = [1, 4, 32], strides = [1, 1, 1]} : vector<4x4x32xf32> to vector<1x4x32xf32>
    %23 = vector.shape_cast %22 : vector<1x4x32xf32> to vector<4x32xf32>
    %cst_20 = arith.constant dense<0.000000e+00> : vector<128x32xf32>
    %24 = tpu.matmul %21, %23, %cst_20 {dimension_numbers = #tpu.dot_dimension_numbers<[1], [0], [0], [1], [0, 0, 1, 1], [], []>} : vector<128x4xf32>, vector<4x32xf32>, vector<128x32xf32> -> vector<128x32xf32>
    %25 = arith.addf %19, %24 : vector<128x32xf32>
    %c0_21 = arith.constant 0 : index
    %c0_22 = arith.constant 0 : index
    %26 = vector.load %arg3[%c0_21, %c0_22] : memref<1x32xf32, #tpu.memory_space<vmem>>, vector<1x32xf32>
    %27 = vector.broadcast %26 : vector<1x32xf32> to vector<128x32xf32>
    %28 = arith.addf %25, %27 : vector<128x32xf32>
    %29 = arith.mulf %28, %28 : vector<128x32xf32>
    %c0_23 = arith.constant 0 : index
    %c0_24 = arith.constant 0 : index
    %30 = vector.load %arg4[%c0_23, %c0_24] : memref<32x32xf32, #tpu.memory_space<vmem>>, vector<32x32xf32>
    %cst_25 = arith.constant dense<0.000000e+00> : vector<128x32xf32>
    %31 = tpu.matmul %29, %30, %cst_25 {dimension_numbers = #tpu.dot_dimension_numbers<[1], [0], [0], [1], [0, 0, 1, 1], [], []>} : vector<128x32xf32>, vector<32x32xf32>, vector<128x32xf32> -> vector<128x32xf32>
    %c0_26 = arith.constant 0 : index
    %c0_27 = arith.constant 0 : index
    %32 = vector.load %arg5[%c0_26, %c0_27] : memref<1x32xf32, #tpu.memory_space<vmem>>, vector<1x32xf32>
    %33 = vector.broadcast %32 : vector<1x32xf32> to vector<128x32xf32>
    %34 = arith.addf %31, %33 : vector<128x32xf32>
    %35 = math.rsqrt %34 : vector<128x32xf32>
    %36 = arith.mulf %28, %35 : vector<128x32xf32>
    %cst_28 = arith.constant 0.000000e+00 : f32
    %37 = vector.broadcast %cst_28 : f32 to vector<4x2x9x9x8xf32>
    %c0_29 = arith.constant 0 : index
    %c0_30 = arith.constant 0 : index
    %c0_31 = arith.constant 0 : index
    %c0_32 = arith.constant 0 : index
    %c0_33 = arith.constant 0 : index
    %38 = vector.load %arg9[%c0_29, %c0_30, %c0_31, %c0_32, %c0_33] : memref<4x2x9x9x8xf32, #tpu.memory_space<vmem>>, vector<4x2x9x9x8xf32>
    tpu.vector_store %arg9[%c0_29, %c0_30, %c0_31, %c0_32, %c0_33], %37 {strides = array<i32>} : memref<4x2x9x9x8xf32, #tpu.memory_space<vmem>>, vector<4x2x9x9x8xf32>,
    %39 = vector.extract_strided_slice %36 {offsets = [0, 0], sizes = [128, 8], strides = [1, 1]} : vector<128x32xf32> to vector<128x8xf32>
    %40 = vector.shape_cast %39 : vector<128x8xf32> to vector<2x8x8x8xf32>
    %c0_34 = arith.constant 0 : index
    %c0_35 = arith.constant 0 : index
    %c0_36 = arith.constant 0 : index
    %c0_37 = arith.constant 0 : index
    %c0_38 = arith.constant 0 : index
    %41 = vector.load %arg9[%c0_34, %c0_35, %c0_36, %c0_37, %c0_38] : memref<4x2x9x9x8xf32, #tpu.memory_space<vmem>>, vector<1x2x8x8x8xf32>
    %42 = vector.shape_cast %41 : vector<1x2x8x8x8xf32> to vector<2x8x8x8xf32>
    %43 = vector.shape_cast %40 : vector<2x8x8x8xf32> to vector<1x2x8x8x8xf32>
    tpu.vector_store %arg9[%c0_34, %c0_35, %c0_36, %c0_37, %c0_38], %43 {strides = array<i32>} : memref<4x2x9x9x8xf32, #tpu.memory_space<vmem>>, vector<1x2x8x8x8xf32>,
    %44 = vector.extract_strided_slice %36 {offsets = [0, 8], sizes = [128, 8], strides = [1, 1]} : vector<128x32xf32> to vector<128x8xf32>
    %45 = vector.shape_cast %44 : vector<128x8xf32> to vector<2x8x8x8xf32>
    %c1_39 = arith.constant 1 : index
    %c0_40 = arith.constant 0 : index
    %c0_41 = arith.constant 0 : index
    %c0_42 = arith.constant 0 : index
    %c0_43 = arith.constant 0 : index
    %46 = vector.load %arg9[%c1_39, %c0_40, %c0_41, %c0_42, %c0_43] : memref<4x2x9x9x8xf32, #tpu.memory_space<vmem>>, vector<1x2x8x8x8xf32>
    %47 = vector.shape_cast %46 : vector<1x2x8x8x8xf32> to vector<2x8x8x8xf32>
    %48 = vector.shape_cast %45 : vector<2x8x8x8xf32> to vector<1x2x8x8x8xf32>
    tpu.vector_store %arg9[%c1_39, %c0_40, %c0_41, %c0_42, %c0_43], %48 {strides = array<i32>} : memref<4x2x9x9x8xf32, #tpu.memory_space<vmem>>, vector<1x2x8x8x8xf32>,
    %49 = vector.extract_strided_slice %36 {offsets = [0, 16], sizes = [128, 8], strides = [1, 1]} : vector<128x32xf32> to vector<128x8xf32>
    %50 = vector.shape_cast %49 : vector<128x8xf32> to vector<2x8x8x8xf32>
    %c2 = arith.constant 2 : index
    %c0_44 = arith.constant 0 : index
    %c0_45 = arith.constant 0 : index
    %c0_46 = arith.constant 0 : index
    %c0_47 = arith.constant 0 : index
    %51 = vector.load %arg9[%c2, %c0_44, %c0_45, %c0_46, %c0_47] : memref<4x2x9x9x8xf32, #tpu.memory_space<vmem>>, vector<1x2x8x8x8xf32>
    %52 = vector.shape_cast %51 : vector<1x2x8x8x8xf32> to vector<2x8x8x8xf32>
    %53 = vector.shape_cast %50 : vector<2x8x8x8xf32> to vector<1x2x8x8x8xf32>
    tpu.vector_store %arg9[%c2, %c0_44, %c0_45, %c0_46, %c0_47], %53 {strides = array<i32>} : memref<4x2x9x9x8xf32, #tpu.memory_space<vmem>>, vector<1x2x8x8x8xf32>,
    %54 = vector.extract_strided_slice %36 {offsets = [0, 24], sizes = [128, 8], strides = [1, 1]} : vector<128x32xf32> to vector<128x8xf32>
    %55 = vector.shape_cast %54 : vector<128x8xf32> to vector<2x8x8x8xf32>
    %c3 = arith.constant 3 : index
    %c0_48 = arith.constant 0 : index
    %c0_49 = arith.constant 0 : index
    %c0_50 = arith.constant 0 : index
    %c0_51 = arith.constant 0 : index
    %56 = vector.load %arg9[%c3, %c0_48, %c0_49, %c0_50, %c0_51] : memref<4x2x9x9x8xf32, #tpu.memory_space<vmem>>, vector<1x2x8x8x8xf32>
    %57 = vector.shape_cast %56 : vector<1x2x8x8x8xf32> to vector<2x8x8x8xf32>
    %58 = vector.shape_cast %55 : vector<2x8x8x8xf32> to vector<1x2x8x8x8xf32>
    tpu.vector_store %arg9[%c3, %c0_48, %c0_49, %c0_50, %c0_51], %58 {strides = array<i32>} : memref<4x2x9x9x8xf32, #tpu.memory_space<vmem>>, vector<1x2x8x8x8xf32>,
    %c0_52 = arith.constant 0 : index
    %c0_53 = arith.constant 0 : index
    %c0_54 = arith.constant 0 : index
    %59 = vector.load %arg6[%c0_52, %c0_53, %c0_54] : memref<4x8x12xf32, #tpu.memory_space<vmem>>, vector<4x8x12xf32>
    %c0_55 = arith.constant 0 : index
    %c0_56 = arith.constant 0 : index
    %60 = vector.load %arg7[%c0_55, %c0_56] : memref<1x12xf32, #tpu.memory_space<vmem>>, vector<1x12xf32>
    %cst_57 = arith.constant 0.000000e+00 : f32
    %61 = vector.broadcast %cst_57 : f32 to vector<128x12xf32>
    %c0_58 = arith.constant 0 : index
    %c0_59 = arith.constant 0 : index
    %c0_60 = arith.constant 0 : index
    %c0_61 = arith.constant 0 : index
    %c0_62 = arith.constant 0 : index
    %62 = vector.load %arg9[%c0_58, %c0_59, %c0_60, %c0_61, %c0_62] : memref<4x2x9x9x8xf32, #tpu.memory_space<vmem>>, vector<1x2x8x8x8xf32>
    %63 = vector.shape_cast %62 : vector<1x2x8x8x8xf32> to vector<2x8x8x8xf32>
    %64 = vector.shape_cast %63 : vector<2x8x8x8xf32> to vector<128x8xf32>
    %65 = vector.extract_strided_slice %59 {offsets = [0, 0, 0], sizes = [1, 8, 12], strides = [1, 1, 1]} : vector<4x8x12xf32> to vector<1x8x12xf32>
    %66 = vector.shape_cast %65 : vector<1x8x12xf32> to vector<8x12xf32>
    %cst_63 = arith.constant dense<0.000000e+00> : vector<128x12xf32>
    %67 = tpu.matmul %64, %66, %cst_63 {dimension_numbers = #tpu.dot_dimension_numbers<[1], [0], [0], [1], [0, 0, 1, 1], [], []>} : vector<128x8xf32>, vector<8x12xf32>, vector<128x12xf32> -> vector<128x12xf32>
    %68 = arith.addf %61, %67 : vector<128x12xf32>
    %c1_64 = arith.constant 1 : index
    %c0_65 = arith.constant 0 : index
    %c0_66 = arith.constant 0 : index
    %c0_67 = arith.constant 0 : index
    %c0_68 = arith.constant 0 : index
    %69 = vector.load %arg9[%c1_64, %c0_65, %c0_66, %c0_67, %c0_68] : memref<4x2x9x9x8xf32, #tpu.memory_space<vmem>>, vector<1x2x8x8x8xf32>
    %70 = vector.shape_cast %69 : vector<1x2x8x8x8xf32> to vector<2x8x8x8xf32>
    %71 = vector.shape_cast %70 : vector<2x8x8x8xf32> to vector<128x8xf32>
    %72 = vector.extract_strided_slice %59 {offsets = [1, 0, 0], sizes = [1, 8, 12], strides = [1, 1, 1]} : vector<4x8x12xf32> to vector<1x8x12xf32>
    %73 = vector.shape_cast %72 : vector<1x8x12xf32> to vector<8x12xf32>
    %cst_69 = arith.constant dense<0.000000e+00> : vector<128x12xf32>
    %74 = tpu.matmul %71, %73, %cst_69 {dimension_numbers = #tpu.dot_dimension_numbers<[1], [0], [0], [1], [0, 0, 1, 1], [], []>} : vector<128x8xf32>, vector<8x12xf32>, vector<128x12xf32> -> vector<128x12xf32>
    %75 = arith.addf %68, %74 : vector<128x12xf32>
    %c2_70 = arith.constant 2 : index
    %c0_71 = arith.constant 0 : index
    %c0_72 = arith.constant 0 : index
    %c0_73 = arith.constant 0 : index
    %c0_74 = arith.constant 0 : index
    %76 = vector.load %arg9[%c2_70, %c0_71, %c0_72, %c0_73, %c0_74] : memref<4x2x9x9x8xf32, #tpu.memory_space<vmem>>, vector<1x2x8x8x8xf32>
    %77 = vector.shape_cast %76 : vector<1x2x8x8x8xf32> to vector<2x8x8x8xf32>
    %78 = vector.shape_cast %77 : vector<2x8x8x8xf32> to vector<128x8xf32>
    %79 = vector.extract_strided_slice %59 {offsets = [2, 0, 0], sizes = [1, 8, 12], strides = [1, 1, 1]} : vector<4x8x12xf32> to vector<1x8x12xf32>
    %80 = vector.shape_cast %79 : vector<1x8x12xf32> to vector<8x12xf32>
    %cst_75 = arith.constant dense<0.000000e+00> : vector<128x12xf32>
    %81 = tpu.matmul %78, %80, %cst_75 {dimension_numbers = #tpu.dot_dimension_numbers<[1], [0], [0], [1], [0, 0, 1, 1], [], []>} : vector<128x8xf32>, vector<8x12xf32>, vector<128x12xf32> -> vector<128x12xf32>
    %82 = arith.addf %75, %81 : vector<128x12xf32>
    %c3_76 = arith.constant 3 : index
    %c0_77 = arith.constant 0 : index
    %c0_78 = arith.constant 0 : index
    %c0_79 = arith.constant 0 : index
    %c0_80 = arith.constant 0 : index
    %83 = vector.load %arg9[%c3_76, %c0_77, %c0_78, %c0_79, %c0_80] : memref<4x2x9x9x8xf32, #tpu.memory_space<vmem>>, vector<1x2x8x8x8xf32>
    %84 = vector.shape_cast %83 : vector<1x2x8x8x8xf32> to vector<2x8x8x8xf32>
    %85 = vector.shape_cast %84 : vector<2x8x8x8xf32> to vector<128x8xf32>
    %86 = vector.extract_strided_slice %59 {offsets = [3, 0, 0], sizes = [1, 8, 12], strides = [1, 1, 1]} : vector<4x8x12xf32> to vector<1x8x12xf32>
    %87 = vector.shape_cast %86 : vector<1x8x12xf32> to vector<8x12xf32>
    %cst_81 = arith.constant dense<0.000000e+00> : vector<128x12xf32>
    %88 = tpu.matmul %85, %87, %cst_81 {dimension_numbers = #tpu.dot_dimension_numbers<[1], [0], [0], [1], [0, 0, 1, 1], [], []>} : vector<128x8xf32>, vector<8x12xf32>, vector<128x12xf32> -> vector<128x12xf32>
    %89 = arith.addf %82, %88 : vector<128x12xf32>
    %90 = vector.broadcast %60 : vector<1x12xf32> to vector<128x12xf32>
    %91 = arith.addf %89, %90 : vector<128x12xf32>
    %c0_82 = arith.constant 0 : index
    %c0_83 = arith.constant 0 : index
    %c0_84 = arith.constant 0 : index
    %92 = vector.load %arg8[%c0_82, %c0_83, %c0_84] : memref<4x128x12xf32, #tpu.memory_space<vmem>>, vector<1x128x12xf32>
    %93 = vector.shape_cast %92 : vector<1x128x12xf32> to vector<128x12xf32>
    %94 = vector.shape_cast %91 : vector<128x12xf32> to vector<1x128x12xf32>
    tpu.vector_store %arg8[%c0_82, %c0_83, %c0_84], %94 {strides = array<i32>} : memref<4x128x12xf32, #tpu.memory_space<vmem>>, vector<1x128x12xf32>,
    %cst_85 = arith.constant 0.000000e+00 : f32
    %95 = vector.broadcast %cst_85 : f32 to vector<128x12xf32>
    %c1_86 = arith.constant 1 : index
    %c0_87 = arith.constant 0 : index
    %c0_88 = arith.constant 0 : index
    %c0_89 = arith.constant 0 : index
    %c0_90 = arith.constant 0 : index
    %96 = vector.load %arg9[%c1_86, %c0_87, %c0_88, %c0_89, %c0_90] : memref<4x2x9x9x8xf32, #tpu.memory_space<vmem>>, vector<1x2x8x8x8xf32>
    %97 = vector.shape_cast %96 : vector<1x2x8x8x8xf32> to vector<2x8x8x8xf32>
    %98 = vector.shape_cast %97 : vector<2x8x8x8xf32> to vector<128x8xf32>
    %99 = vector.extract_strided_slice %59 {offsets = [0, 0, 0], sizes = [1, 8, 12], strides = [1, 1, 1]} : vector<4x8x12xf32> to vector<1x8x12xf32>
    %100 = vector.shape_cast %99 : vector<1x8x12xf32> to vector<8x12xf32>
    %cst_91 = arith.constant dense<0.000000e+00> : vector<128x12xf32>
    %101 = tpu.matmul %98, %100, %cst_91 {dimension_numbers = #tpu.dot_dimension_numbers<[1], [0], [0], [1], [0, 0, 1, 1], [], []>} : vector<128x8xf32>, vector<8x12xf32>, vector<128x12xf32> -> vector<128x12xf32>
    %102 = arith.addf %95, %101 : vector<128x12xf32>
    %c0_92 = arith.constant 0 : index
    %c0_93 = arith.constant 0 : index
    %c0_94 = arith.constant 0 : index
    %c1_95 = arith.constant 1 : index
    %c0_96 = arith.constant 0 : index
    %103 = vector.load %arg9[%c0_92, %c0_93, %c0_94, %c1_95, %c0_96] : memref<4x2x9x9x8xf32, #tpu.memory_space<vmem>>, vector<1x2x8x8x8xf32>
    %104 = vector.shape_cast %103 : vector<1x2x8x8x8xf32> to vector<2x8x8x8xf32>
    %105 = vector.shape_cast %104 : vector<2x8x8x8xf32> to vector<128x8xf32>
    %106 = vector.extract_strided_slice %59 {offsets = [1, 0, 0], sizes = [1, 8, 12], strides = [1, 1, 1]} : vector<4x8x12xf32> to vector<1x8x12xf32>
    %107 = vector.shape_cast %106 : vector<1x8x12xf32> to vector<8x12xf32>
    %cst_97 = arith.constant dense<0.000000e+00> : vector<128x12xf32>
    %108 = tpu.matmul %105, %107, %cst_97 {dimension_numbers = #tpu.dot_dimension_numbers<[1], [0], [0], [1], [0, 0, 1, 1], [], []>} : vector<128x8xf32>, vector<8x12xf32>, vector<128x12xf32> -> vector<128x12xf32>
    %109 = arith.addf %102, %108 : vector<128x12xf32>
    %c3_98 = arith.constant 3 : index
    %c0_99 = arith.constant 0 : index
    %c0_100 = arith.constant 0 : index
    %c0_101 = arith.constant 0 : index
    %c0_102 = arith.constant 0 : index
    %110 = vector.load %arg9[%c3_98, %c0_99, %c0_100, %c0_101, %c0_102] : memref<4x2x9x9x8xf32, #tpu.memory_space<vmem>>, vector<1x2x8x8x8xf32>
    %111 = vector.shape_cast %110 : vector<1x2x8x8x8xf32> to vector<2x8x8x8xf32>
    %112 = vector.shape_cast %111 : vector<2x8x8x8xf32> to vector<128x8xf32>
    %113 = vector.extract_strided_slice %59 {offsets = [2, 0, 0], sizes = [1, 8, 12], strides = [1, 1, 1]} : vector<4x8x12xf32> to vector<1x8x12xf32>
    %114 = vector.shape_cast %113 : vector<1x8x12xf32> to vector<8x12xf32>
    %cst_103 = arith.constant dense<0.000000e+00> : vector<128x12xf32>
    %115 = tpu.matmul %112, %114, %cst_103 {dimension_numbers = #tpu.dot_dimension_numbers<[1], [0], [0], [1], [0, 0, 1, 1], [], []>} : vector<128x8xf32>, vector<8x12xf32>, vector<128x12xf32> -> vector<128x12xf32>
    %116 = arith.addf %109, %115 : vector<128x12xf32>
    %c2_104 = arith.constant 2 : index
    %c0_105 = arith.constant 0 : index
    %c0_106 = arith.constant 0 : index
    %c1_107 = arith.constant 1 : index
    %c0_108 = arith.constant 0 : index
    %117 = vector.load %arg9[%c2_104, %c0_105, %c0_106, %c1_107, %c0_108] : memref<4x2x9x9x8xf32, #tpu.memory_space<vmem>>, vector<1x2x8x8x8xf32>
    %118 = vector.shape_cast %117 : vector<1x2x8x8x8xf32> to vector<2x8x8x8xf32>
    %119 = vector.shape_cast %118 : vector<2x8x8x8xf32> to vector<128x8xf32>
    %120 = vector.extract_strided_slice %59 {offsets = [3, 0, 0], sizes = [1, 8, 12], strides = [1, 1, 1]} : vector<4x8x12xf32> to vector<1x8x12xf32>
    %121 = vector.shape_cast %120 : vector<1x8x12xf32> to vector<8x12xf32>
    %cst_109 = arith.constant dense<0.000000e+00> : vector<128x12xf32>
    %122 = tpu.matmul %119, %121, %cst_109 {dimension_numbers = #tpu.dot_dimension_numbers<[1], [0], [0], [1], [0, 0, 1, 1], [], []>} : vector<128x8xf32>, vector<8x12xf32>, vector<128x12xf32> -> vector<128x12xf32>
    %123 = arith.addf %116, %122 : vector<128x12xf32>
    %124 = vector.broadcast %60 : vector<1x12xf32> to vector<128x12xf32>
    %125 = arith.addf %123, %124 : vector<128x12xf32>
    %c1_110 = arith.constant 1 : index
    %c0_111 = arith.constant 0 : index
    %c0_112 = arith.constant 0 : index
    %126 = vector.load %arg8[%c1_110, %c0_111, %c0_112] : memref<4x128x12xf32, #tpu.memory_space<vmem>>, vector<1x128x12xf32>
    %127 = vector.shape_cast %126 : vector<1x128x12xf32> to vector<128x12xf32>
    %128 = vector.shape_cast %125 : vector<128x12xf32> to vector<1x128x12xf32>
    tpu.vector_store %arg8[%c1_110, %c0_111, %c0_112], %128 {strides = array<i32>} : memref<4x128x12xf32, #tpu.memory_space<vmem>>, vector<1x128x12xf32>,
    %cst_113 = arith.constant 0.000000e+00 : f32
    %129 = vector.broadcast %cst_113 : f32 to vector<128x12xf32>
    %c2_114 = arith.constant 2 : index
    %c0_115 = arith.constant 0 : index
    %c0_116 = arith.constant 0 : index
    %c0_117 = arith.constant 0 : index
    %c0_118 = arith.constant 0 : index
    %130 = vector.load %arg9[%c2_114, %c0_115, %c0_116, %c0_117, %c0_118] : memref<4x2x9x9x8xf32, #tpu.memory_space<vmem>>, vector<1x2x8x8x8xf32>
    %131 = vector.shape_cast %130 : vector<1x2x8x8x8xf32> to vector<2x8x8x8xf32>
    %132 = vector.shape_cast %131 : vector<2x8x8x8xf32> to vector<128x8xf32>
    %133 = vector.extract_strided_slice %59 {offsets = [0, 0, 0], sizes = [1, 8, 12], strides = [1, 1, 1]} : vector<4x8x12xf32> to vector<1x8x12xf32>
    %134 = vector.shape_cast %133 : vector<1x8x12xf32> to vector<8x12xf32>
    %cst_119 = arith.constant dense<0.000000e+00> : vector<128x12xf32>
    %135 = tpu.matmul %132, %134, %cst_119 {dimension_numbers = #tpu.dot_dimension_numbers<[1], [0], [0], [1], [0, 0, 1, 1], [], []>} : vector<128x8xf32>, vector<8x12xf32>, vector<128x12xf32> -> vector<128x12xf32>
    %136 = arith.addf %129, %135 : vector<128x12xf32>
    %c3_120 = arith.constant 3 : index
    %c0_121 = arith.constant 0 : index
    %c0_122 = arith.constant 0 : index
    %c0_123 = arith.constant 0 : index
    %c0_124 = arith.constant 0 : index
    %137 = vector.load %arg9[%c3_120, %c0_121, %c0_122, %c0_123, %c0_124] : memref<4x2x9x9x8xf32, #tpu.memory_space<vmem>>, vector<1x2x8x8x8xf32>
    %138 = vector.shape_cast %137 : vector<1x2x8x8x8xf32> to vector<2x8x8x8xf32>
    %139 = vector.shape_cast %138 : vector<2x8x8x8xf32> to vector<128x8xf32>
    %140 = vector.extract_strided_slice %59 {offsets = [1, 0, 0], sizes = [1, 8, 12], strides = [1, 1, 1]} : vector<4x8x12xf32> to vector<1x8x12xf32>
    %141 = vector.shape_cast %140 : vector<1x8x12xf32> to vector<8x12xf32>
    %cst_125 = arith.constant dense<0.000000e+00> : vector<128x12xf32>
    %142 = tpu.matmul %139, %141, %cst_125 {dimension_numbers = #tpu.dot_dimension_numbers<[1], [0], [0], [1], [0, 0, 1, 1], [], []>} : vector<128x8xf32>, vector<8x12xf32>, vector<128x12xf32> -> vector<128x12xf32>
    %143 = arith.addf %136, %142 : vector<128x12xf32>
    %c0_126 = arith.constant 0 : index
    %c0_127 = arith.constant 0 : index
    %c1_128 = arith.constant 1 : index
    %c0_129 = arith.constant 0 : index
    %c0_130 = arith.constant 0 : index
    %144 = vector.load %arg9[%c0_126, %c0_127, %c1_128, %c0_129, %c0_130] : memref<4x2x9x9x8xf32, #tpu.memory_space<vmem>>, vector<1x2x8x8x8xf32>
    %145 = vector.shape_cast %144 : vector<1x2x8x8x8xf32> to vector<2x8x8x8xf32>
    %146 = vector.shape_cast %145 : vector<2x8x8x8xf32> to vector<128x8xf32>
    %147 = vector.extract_strided_slice %59 {offsets = [2, 0, 0], sizes = [1, 8, 12], strides = [1, 1, 1]} : vector<4x8x12xf32> to vector<1x8x12xf32>
    %148 = vector.shape_cast %147 : vector<1x8x12xf32> to vector<8x12xf32>
    %cst_131 = arith.constant dense<0.000000e+00> : vector<128x12xf32>
    %149 = tpu.matmul %146, %148, %cst_131 {dimension_numbers = #tpu.dot_dimension_numbers<[1], [0], [0], [1], [0, 0, 1, 1], [], []>} : vector<128x8xf32>, vector<8x12xf32>, vector<128x12xf32> -> vector<128x12xf32>
    %150 = arith.addf %143, %149 : vector<128x12xf32>
    %c1_132 = arith.constant 1 : index
    %c0_133 = arith.constant 0 : index
    %c1_134 = arith.constant 1 : index
    %c0_135 = arith.constant 0 : index
    %c0_136 = arith.constant 0 : index
    %151 = vector.load %arg9[%c1_132, %c0_133, %c1_134, %c0_135, %c0_136] : memref<4x2x9x9x8xf32, #tpu.memory_space<vmem>>, vector<1x2x8x8x8xf32>
    %152 = vector.shape_cast %151 : vector<1x2x8x8x8xf32> to vector<2x8x8x8xf32>
    %153 = vector.shape_cast %152 : vector<2x8x8x8xf32> to vector<128x8xf32>
    %154 = vector.extract_strided_slice %59 {offsets = [3, 0, 0], sizes = [1, 8, 12], strides = [1, 1, 1]} : vector<4x8x12xf32> to vector<1x8x12xf32>
    %155 = vector.shape_cast %154 : vector<1x8x12xf32> to vector<8x12xf32>
    %cst_137 = arith.constant dense<0.000000e+00> : vector<128x12xf32>
    %156 = tpu.matmul %153, %155, %cst_137 {dimension_numbers = #tpu.dot_dimension_numbers<[1], [0], [0], [1], [0, 0, 1, 1], [], []>} : vector<128x8xf32>, vector<8x12xf32>, vector<128x12xf32> -> vector<128x12xf32>
    %157 = arith.addf %150, %156 : vector<128x12xf32>
    %158 = vector.broadcast %60 : vector<1x12xf32> to vector<128x12xf32>
    %159 = arith.addf %157, %158 : vector<128x12xf32>
    %c2_138 = arith.constant 2 : index
    %c0_139 = arith.constant 0 : index
    %c0_140 = arith.constant 0 : index
    %160 = vector.load %arg8[%c2_138, %c0_139, %c0_140] : memref<4x128x12xf32, #tpu.memory_space<vmem>>, vector<1x128x12xf32>
    %161 = vector.shape_cast %160 : vector<1x128x12xf32> to vector<128x12xf32>
    %162 = vector.shape_cast %159 : vector<128x12xf32> to vector<1x128x12xf32>
    tpu.vector_store %arg8[%c2_138, %c0_139, %c0_140], %162 {strides = array<i32>} : memref<4x128x12xf32, #tpu.memory_space<vmem>>, vector<1x128x12xf32>,
    %cst_141 = arith.constant 0.000000e+00 : f32
    %163 = vector.broadcast %cst_141 : f32 to vector<128x12xf32>
    %c3_142 = arith.constant 3 : index
    %c0_143 = arith.constant 0 : index
    %c0_144 = arith.constant 0 : index
    %c0_145 = arith.constant 0 : index
    %c0_146 = arith.constant 0 : index
    %164 = vector.load %arg9[%c3_142, %c0_143, %c0_144, %c0_145, %c0_146] : memref<4x2x9x9x8xf32, #tpu.memory_space<vmem>>, vector<1x2x8x8x8xf32>
    %165 = vector.shape_cast %164 : vector<1x2x8x8x8xf32> to vector<2x8x8x8xf32>
    %166 = vector.shape_cast %165 : vector<2x8x8x8xf32> to vector<128x8xf32>
    %167 = vector.extract_strided_slice %59 {offsets = [0, 0, 0], sizes = [1, 8, 12], strides = [1, 1, 1]} : vector<4x8x12xf32> to vector<1x8x12xf32>
    %168 = vector.shape_cast %167 : vector<1x8x12xf32> to vector<8x12xf32>
    %cst_147 = arith.constant dense<0.000000e+00> : vector<128x12xf32>
    %169 = tpu.matmul %166, %168, %cst_147 {dimension_numbers = #tpu.dot_dimension_numbers<[1], [0], [0], [1], [0, 0, 1, 1], [], []>} : vector<128x8xf32>, vector<8x12xf32>, vector<128x12xf32> -> vector<128x12xf32>
    %170 = arith.addf %163, %169 : vector<128x12xf32>
    %c2_148 = arith.constant 2 : index
    %c0_149 = arith.constant 0 : index
    %c0_150 = arith.constant 0 : index
    %c1_151 = arith.constant 1 : index
    %c0_152 = arith.constant 0 : index
    %171 = vector.load %arg9[%c2_148, %c0_149, %c0_150, %c1_151, %c0_152] : memref<4x2x9x9x8xf32, #tpu.memory_space<vmem>>, vector<1x2x8x8x8xf32>
    %172 = vector.shape_cast %171 : vector<1x2x8x8x8xf32> to vector<2x8x8x8xf32>
    %173 = vector.shape_cast %172 : vector<2x8x8x8xf32> to vector<128x8xf32>
    %174 = vector.extract_strided_slice %59 {offsets = [1, 0, 0], sizes = [1, 8, 12], strides = [1, 1, 1]} : vector<4x8x12xf32> to vector<1x8x12xf32>
    %175 = vector.shape_cast %174 : vector<1x8x12xf32> to vector<8x12xf32>
    %cst_153 = arith.constant dense<0.000000e+00> : vector<128x12xf32>
    %176 = tpu.matmul %173, %175, %cst_153 {dimension_numbers = #tpu.dot_dimension_numbers<[1], [0], [0], [1], [0, 0, 1, 1], [], []>} : vector<128x8xf32>, vector<8x12xf32>, vector<128x12xf32> -> vector<128x12xf32>
    %177 = arith.addf %170, %176 : vector<128x12xf32>
    %c1_154 = arith.constant 1 : index
    %c0_155 = arith.constant 0 : index
    %c1_156 = arith.constant 1 : index
    %c0_157 = arith.constant 0 : index
    %c0_158 = arith.constant 0 : index
    %178 = vector.load %arg9[%c1_154, %c0_155, %c1_156, %c0_157, %c0_158] : memref<4x2x9x9x8xf32, #tpu.memory_space<vmem>>, vector<1x2x8x8x8xf32>
    %179 = vector.shape_cast %178 : vector<1x2x8x8x8xf32> to vector<2x8x8x8xf32>
    %180 = vector.shape_cast %179 : vector<2x8x8x8xf32> to vector<128x8xf32>
    %181 = vector.extract_strided_slice %59 {offsets = [2, 0, 0], sizes = [1, 8, 12], strides = [1, 1, 1]} : vector<4x8x12xf32> to vector<1x8x12xf32>
    %182 = vector.shape_cast %181 : vector<1x8x12xf32> to vector<8x12xf32>
    %cst_159 = arith.constant dense<0.000000e+00> : vector<128x12xf32>
    %183 = tpu.matmul %180, %182, %cst_159 {dimension_numbers = #tpu.dot_dimension_numbers<[1], [0], [0], [1], [0, 0, 1, 1], [], []>} : vector<128x8xf32>, vector<8x12xf32>, vector<128x12xf32> -> vector<128x12xf32>
    %184 = arith.addf %177, %183 : vector<128x12xf32>
    %c0_160 = arith.constant 0 : index
    %c0_161 = arith.constant 0 : index
    %c1_162 = arith.constant 1 : index
    %c1_163 = arith.constant 1 : index
    %c0_164 = arith.constant 0 : index
    %185 = vector.load %arg9[%c0_160, %c0_161, %c1_162, %c1_163, %c0_164] : memref<4x2x9x9x8xf32, #tpu.memory_space<vmem>>, vector<1x2x8x8x8xf32>
    %186 = vector.shape_cast %185 : vector<1x2x8x8x8xf32> to vector<2x8x8x8xf32>
    %187 = vector.shape_cast %186 : vector<2x8x8x8xf32> to vector<128x8xf32>
    %188 = vector.extract_strided_slice %59 {offsets = [3, 0, 0], sizes = [1, 8, 12], strides = [1, 1, 1]} : vector<4x8x12xf32> to vector<1x8x12xf32>
    %189 = vector.shape_cast %188 : vector<1x8x12xf32> to vector<8x12xf32>
    %cst_165 = arith.constant dense<0.000000e+00> : vector<128x12xf32>
    %190 = tpu.matmul %187, %189, %cst_165 {dimension_numbers = #tpu.dot_dimension_numbers<[1], [0], [0], [1], [0, 0, 1, 1], [], []>} : vector<128x8xf32>, vector<8x12xf32>, vector<128x12xf32> -> vector<128x12xf32>
    %191 = arith.addf %184, %190 : vector<128x12xf32>
    %192 = vector.broadcast %60 : vector<1x12xf32> to vector<128x12xf32>
    %193 = arith.addf %191, %192 : vector<128x12xf32>
    %c3_166 = arith.constant 3 : index
    %c0_167 = arith.constant 0 : index
    %c0_168 = arith.constant 0 : index
    %194 = vector.load %arg8[%c3_166, %c0_167, %c0_168] : memref<4x128x12xf32, #tpu.memory_space<vmem>>, vector<1x128x12xf32>
    %195 = vector.shape_cast %194 : vector<1x128x12xf32> to vector<128x12xf32>
    %196 = vector.shape_cast %193 : vector<128x12xf32> to vector<1x128x12xf32>
    tpu.vector_store %arg8[%c3_166, %c0_167, %c0_168], %196 {strides = array<i32>} : memref<4x128x12xf32, #tpu.memory_space<vmem>>, vector<1x128x12xf32>,
    return
  }
  func.func @transform_0(%arg0: i32) -> (i32, i32, i32, i32) {
    %c0_i32 = arith.constant 0 : i32
    %c0_i32_0 = arith.constant 0 : i32
    %c0_i32_1 = arith.constant 0 : i32
    %c0_i32_2 = arith.constant 0 : i32
    %c0_i32_3 = arith.constant 0 : i32
    return %c0_i32, %c0_i32_0, %c0_i32_1, %c0_i32_2 : i32, i32, i32, i32
  }
  func.func @transform_1(%arg0: i32) -> (i32, i32, i32) {
    %c0_i32 = arith.constant 0 : i32
    %c0_i32_0 = arith.constant 0 : i32
    %c0_i32_1 = arith.constant 0 : i32
    %c0_i32_2 = arith.constant 0 : i32
    return %c0_i32, %c0_i32_0, %c0_i32_1 : i32, i32, i32
  }
  func.func @transform_2(%arg0: i32) -> (i32, i32) {
    %c0_i32 = arith.constant 0 : i32
    %c0_i32_0 = arith.constant 0 : i32
    %c0_i32_1 = arith.constant 0 : i32
    return %c0_i32, %c0_i32_0 : i32, i32
  }
  func.func @transform_3(%arg0: i32) -> (i32, i32) {
    %c0_i32 = arith.constant 0 : i32
    %c0_i32_0 = arith.constant 0 : i32
    %c0_i32_1 = arith.constant 0 : i32
    return %c0_i32, %c0_i32_0 : i32, i32
  }
  func.func @transform_4(%arg0: i32) -> (i32, i32) {
    %c0_i32 = arith.constant 0 : i32
    %c0_i32_0 = arith.constant 0 : i32
    %c0_i32_1 = arith.constant 0 : i32
    return %c0_i32, %c0_i32_0 : i32, i32
  }
  func.func @transform_5(%arg0: i32) -> (i32, i32, i32) {
    %c0_i32 = arith.constant 0 : i32
    %c0_i32_0 = arith.constant 0 : i32
    %c0_i32_1 = arith.constant 0 : i32
    %c0_i32_2 = arith.constant 0 : i32
    return %c0_i32, %c0_i32_0, %c0_i32_1 : i32, i32, i32
  }
  func.func @transform_6(%arg0: i32) -> (i32, i32) {
    %c0_i32 = arith.constant 0 : i32
    %c0_i32_0 = arith.constant 0 : i32
    %c0_i32_1 = arith.constant 0 : i32
    return %c0_i32, %c0_i32_0 : i32, i32
  }
  func.func @transform_7(%arg0: i32) -> (i32, i32, i32) {
    %c0_i32 = arith.constant 0 : i32
    %c0_i32_0 = arith.constant 0 : i32
    %c0_i32_1 = arith.constant 0 : i32
    %c0_i32_2 = arith.constant 0 : i32
    return %c0_i32, %c0_i32_0, %c0_i32_1 : i32, i32, i32
  }
}

</mosaic_0001>

<llo_original>
// kernel: tile.3
$region0: #{tile.3}
  #allocation0 [shape = 's32[1]{0}', space=sflag, size = 0x4, scoped, tag = 'scoped memory for tile.3']
  %s0 = inlined_call_operand.<no memory space> [shape: f32[], index: 0, kind: input, shape index: {}]
  %s1 = inlined_call_operand.vmem [shape: f32[1,32], index: 1, kind: output, shape index: {}]
  %v2 = vstv %s0
  %3 = vst [vmem:[%s1] sm:$0x1] %v2

// kernel: _lambda_.1
$region0: #{_lambda_.1}
  #allocation0 [shape = 'u32[]', space=smem, size = 0x4, offset = 0x4, fixed_abs, tag = 'smem constant byte address 0x4 - core index']
  #allocation1 [shape = 'u32[72,128]{1,0:T(1,128)}', space=vmem, size = 0x9000, scoped, tag = 'internal scratch']
  #allocation2 [shape = 'f32[4,2,9,9,8]{4,3,2,1,0:T(8,128)}', space=vmem, size = 0x90000, scoped, tag = 'scratch operand']
  %s0 = inlined_call_operand.vmem [shape: f32[2,9,9,4], index: 0, kind: input, shape index: {}]
  %s1 = inlined_call_operand.vmem [shape: f32[4,4,32], index: 1, kind: input, shape index: {}]
  %s2 = inlined_call_operand.vmem [shape: f32[1,32], index: 2, kind: input, shape index: {}]
  %s3 = inlined_call_operand.vmem [shape: f32[32,32], index: 3, kind: input, shape index: {}]
  %s4 = inlined_call_operand.vmem [shape: f32[1,32], index: 4, kind: input, shape index: {}]
  %s5 = inlined_call_operand.vmem [shape: f32[4,8,12], index: 5, kind: input, shape index: {}]
  %s6 = inlined_call_operand.vmem [shape: f32[1,12], index: 6, kind: input, shape index: {}]
  %s7 = inlined_call_operand.vmem [shape: f32[4,128,12], index: 7, kind: output, shape index: {}]
  %s8 = sld [smem:[#allocation0]]
  $region38: #{_lambda_.1} parent=0
    _
  %s10 = ssub.s32 1, %s8
  %s11 = scalar_select 0, %s10, %s8
  // Predicated region
  $region2: #{_lambda_.1} parent=0 // pred_check
    _
  $region3: #{_lambda_.1} parent=0 // pred_check_branch
    %13 = sbr.rel (0) target = $region5
  $region4: #{_lambda_.1} parent=0 // pred_region
    _
  $region5: #{_lambda_.1} parent=0 // pred_fallthru
    _
  // Predicated region
  $region6: #{_lambda_.1} parent=0 // pred_check
    _
  $region7: #{_lambda_.1} parent=0 // pred_check_branch
    %15 = sbr.rel (0) target = $region9
  $region8: #{_lambda_.1} parent=0 // pred_region
    _
  $region9: #{_lambda_.1} parent=0 // pred_fallthru
    _
  // Predicated region
  $region10: #{_lambda_.1} parent=0 // pred_check
    _
  $region11: #{_lambda_.1} parent=0 // pred_check_branch
    %17 = sbr.rel (0) target = $region13
  $region12: #{_lambda_.1} parent=0 // pred_region
    _
  $region13: #{_lambda_.1} parent=0 // pred_fallthru
    _
  // Predicated region
  $region14: #{_lambda_.1} parent=0 // pred_check
    _
  $region15: #{_lambda_.1} parent=0 // pred_check_branch
    %19 = sbr.rel (0) target = $region17
  $region16: #{_lambda_.1} parent=0 // pred_region
    _
  $region17: #{_lambda_.1} parent=0 // pred_fallthru
    _
  // Predicated region
  $region18: #{_lambda_.1} parent=0 // pred_check
    _
  $region19: #{_lambda_.1} parent=0 // pred_check_branch
    %21 = sbr.rel (0) target = $region21
  $region20: #{_lambda_.1} parent=0 // pred_region
    _
  $region21: #{_lambda_.1} parent=0 // pred_fallthru
    _
  // Predicated region
  $region22: #{_lambda_.1} parent=0 // pred_check
    _
  $region23: #{_lambda_.1} parent=0 // pred_check_branch
    %23 = sbr.rel (0) target = $region25
  $region24: #{_lambda_.1} parent=0 // pred_region
    _
  $region25: #{_lambda_.1} parent=0 // pred_fallthru
    _
  // Predicated region
  $region26: #{_lambda_.1} parent=0 // pred_check
    _
  $region27: #{_lambda_.1} parent=0 // pred_check_branch
    %25 = sbr.rel (0) target = $region29
  $region28: #{_lambda_.1} parent=0 // pred_region
    _
  $region29: #{_lambda_.1} parent=0 // pred_fallthru
    _
  %v26 = vld [vmem:[%s1] sm:$0xf]
  %v27 = vld [vmem:[%s1 + $0x4] sm:$0xf]
  %v28 = vld [vmem:[%s1 + $0x8] sm:$0xf]
  %v29 = vld [vmem:[%s1 + $0xc] sm:$0xf]
  %v30 = vld [vmem:[%s0] sm:$0xff]
  %v31 = vld [vmem:[%s0 + $0x10] sm:$0xff]
  %v32 = vld [vmem:[%s0 + $0x20] sm:$0xff]
  %v33 = vld [vmem:[%s0 + $0x30] sm:$0xff]
  %v34 = vld [vmem:[%s0 + $0x40] sm:$0xff]
  %v35 = vld [vmem:[%s0 + $0x50] sm:$0xff]
  %v36 = vld [vmem:[%s0 + $0x60] sm:$0xff]
  %v37 = vld [vmem:[%s0 + $0x70] sm:$0xff]
  %v38 = vld [vmem:[%s0 + $0x90] sm:$0xff]
  %v39 = vld [vmem:[%s0 + $0xa0] sm:$0xff]
  %v40 = vld [vmem:[%s0 + $0xb0] sm:$0xff]
  %v41 = vld [vmem:[%s0 + $0xc0] sm:$0xff]
  %v42 = vld [vmem:[%s0 + $0xd0] sm:$0xff]
  %v43 = vld [vmem:[%s0 + $0xe0] sm:$0xff]
  %v44 = vld [vmem:[%s0 + $0xf0] sm:$0xff]
  %v45 = vld [vmem:[%s0 + $0x100] sm:$0xff]
  %v46 = vld [vmem:[%s0 + $0x1] sm:$0xff]
  %v47 = vld [vmem:[%s0 + $0x11] sm:$0xff]
  %v48 = vld [vmem:[%s0 + $0x21] sm:$0xff]
  %v49 = vld [vmem:[%s0 + $0x31] sm:$0xff]
  %v50 = vld [vmem:[%s0 + $0x41] sm:$0xff]
  %v51 = vld [vmem:[%s0 + $0x51] sm:$0xff]
  %v52 = vld [vmem:[%s0 + $0x61] sm:$0xff]
  %v53 = vld [vmem:[%s0 + $0x71] sm:$0xff]
  %v54 = vld [vmem:[%s0 + $0x91] sm:$0xff]
  %v55 = vld [vmem:[%s0 + $0xa1] sm:$0xff]
  %v56 = vld [vmem:[%s0 + $0xb1] sm:$0xff]
  %v57 = vld [vmem:[%s0 + $0xc1] sm:$0xff]
  %v58 = vld [vmem:[%s0 + $0xd1] sm:$0xff]
  %v59 = vld [vmem:[%s0 + $0xe1] sm:$0xff]
  %v60 = vld [vmem:[%s0 + $0xf1] sm:$0xff]
  %v61 = vld [vmem:[%s0 + $0x101] sm:$0xff]
  %vm62 = vcmask 31744
  %v64 = vsel %vm62, %v46, 0
  %v67 = vsel %vm62, %v47, 0
  %v70 = vsel %vm62, %v48, 0
  %v73 = vsel %vm62, %v49, 0
  %v76 = vsel %vm62, %v50, 0
  %v79 = vsel %vm62, %v51, 0
  %v82 = vsel %vm62, %v52, 0
  %v85 = vsel %vm62, %v53, 0
  %v88 = vsel %vm62, %v54, 0
  %v91 = vsel %vm62, %v55, 0
  %v94 = vsel %vm62, %v56, 0
  %v97 = vsel %vm62, %v57, 0
  %v100 = vsel %vm62, %v58, 0
  %v103 = vsel %vm62, %v59, 0
  %v106 = vsel %vm62, %v60, 0
  %v109 = vsel %vm62, %v61, 0
  %vm111 = vcmask 1043456
  %v113 = vsel %vm111, %v27, 0
  %115 = vmatpush.msra.mxu0 0.0
  %116 = vmatpush.msra.mxu0 0.0
  %117 = vmatpush.msra.mxu0 0.0
  %118 = vmatpush.msra.mxu0 0.0
  %119 = vmatpush.msra.mxu0 0.0
  %120 = vmatpush.msra.mxu0 0.0
  %121 = vmatpush.msra.mxu0 0.0
  %122 = vmatpush.msra.mxu0 0.0
  %123 = vmatpush.msra.mxu0 0.0
  %124 = vmatpush.msra.mxu0 0.0
  %125 = vmatpush.msra.mxu0 0.0
  %126 = vmatpush.msra.mxu0 0.0
  %127 = vmatpush.msra.mxu0 0.0
  %128 = vmatpush.msra.mxu0 0.0
  %129 = vmatpush.msra.mxu0 0.0
  %130 = vmatpush.msra.mxu0 %v113
  %131 = vmatmul.f32.gmra.mxu0 %v64
  %v132 = vpop.f32.mrf.mxu0
  %v133 = vadd.f32 0.0, %v132
  %134 = vmatmul.f32.gmra.mxu0 %v67
  %v135 = vpop.f32.mrf.mxu0
  %v136 = vadd.f32 0.0, %v135
  %137 = vmatmul.f32.gmra.mxu0 %v70
  %v138 = vpop.f32.mrf.mxu0
  %v139 = vadd.f32 0.0, %v138
  %140 = vmatmul.f32.gmra.mxu0 %v73
  %v141 = vpop.f32.mrf.mxu0
  %v142 = vadd.f32 0.0, %v141
  %143 = vmatmul.f32.gmra.mxu0 %v76
  %v144 = vpop.f32.mrf.mxu0
  %v145 = vadd.f32 0.0, %v144
  %146 = vmatmul.f32.gmra.mxu0 %v79
  %v147 = vpop.f32.mrf.mxu0
  %v148 = vadd.f32 0.0, %v147
  %149 = vmatmul.f32.gmra.mxu0 %v82
  %v150 = vpop.f32.mrf.mxu0
  %v151 = vadd.f32 0.0, %v150
  %152 = vmatmul.f32.gmra.mxu0 %v85
  %v153 = vpop.f32.mrf.mxu0
  %v154 = vadd.f32 0.0, %v153
  %155 = vmatmul.f32.gmra.mxu0 %v88
  %v156 = vpop.f32.mrf.mxu0
  %v157 = vadd.f32 0.0, %v156
  %158 = vmatmul.f32.gmra.mxu0 %v91
  %v159 = vpop.f32.mrf.mxu0
  %v160 = vadd.f32 0.0, %v159
  %161 = vmatmul.f32.gmra.mxu0 %v94
  %v162 = vpop.f32.mrf.mxu0
  %v163 = vadd.f32 0.0, %v162
  %164 = vmatmul.f32.gmra.mxu0 %v97
  %v165 = vpop.f32.mrf.mxu0
  %v166 = vadd.f32 0.0, %v165
  %167 = vmatmul.f32.gmra.mxu0 %v100
  %v168 = vpop.f32.mrf.mxu0
  %v169 = vadd.f32 0.0, %v168
  %170 = vmatmul.f32.gmra.mxu0 %v103
  %v171 = vpop.f32.mrf.mxu0
  %v172 = vadd.f32 0.0, %v171
  %173 = vmatmul.f32.gmra.mxu0 %v106
  %v174 = vpop.f32.mrf.mxu0
  %v175 = vadd.f32 0.0, %v174
  %176 = vmatmul.f32.gmra.mxu0 %v109
  %v177 = vpop.f32.mrf.mxu0
  %v178 = vadd.f32 0.0, %v177
  %179 = vdwg.mxu0
  %v181 = vsel %vm62, %v30, 0
  %v184 = vsel %vm62, %v31, 0
  %v187 = vsel %vm62, %v32, 0
  %v190 = vsel %vm62, %v33, 0
  %v193 = vsel %vm62, %v34, 0
  %v196 = vsel %vm62, %v35, 0
  %v199 = vsel %vm62, %v36, 0
  %v202 = vsel %vm62, %v37, 0
  %v205 = vsel %vm62, %v38, 0
  %v208 = vsel %vm62, %v39, 0
  %v211 = vsel %vm62, %v40, 0
  %v214 = vsel %vm62, %v41, 0
  %v217 = vsel %vm62, %v42, 0
  %v220 = vsel %vm62, %v43, 0
  %v223 = vsel %vm62, %v44, 0
  %v226 = vsel %vm62, %v45, 0
  %v229 = vsel %vm111, %v26, 0
  %231 = vmatpush.msra.mxu0 0.0
  %232 = vmatpush.msra.mxu0 0.0
  %233 = vmatpush.msra.mxu0 0.0
  %234 = vmatpush.msra.mxu0 0.0
  %235 = vmatpush.msra.mxu0 0.0
  %236 = vmatpush.msra.mxu0 0.0
  %237 = vmatpush.msra.mxu0 0.0
  %238 = vmatpush.msra.mxu0 0.0
  %239 = vmatpush.msra.mxu0 0.0
  %240 = vmatpush.msra.mxu0 0.0
  %241 = vmatpush.msra.mxu0 0.0
  %242 = vmatpush.msra.mxu0 0.0
  %243 = vmatpush.msra.mxu0 0.0
  %244 = vmatpush.msra.mxu0 0.0
  %245 = vmatpush.msra.mxu0 0.0
  %246 = vmatpush.msra.mxu0 %v229
  %247 = vmatmul.f32.gmra.mxu0 %v181
  %v248 = vpop.f32.mrf.mxu0
  %v249 = vadd.f32 %v133, %v248
  %250 = vmatmul.f32.gmra.mxu0 %v184
  %v251 = vpop.f32.mrf.mxu0
  %v252 = vadd.f32 %v136, %v251
  %253 = vmatmul.f32.gmra.mxu0 %v187
  %v254 = vpop.f32.mrf.mxu0
  %v255 = vadd.f32 %v139, %v254
  %256 = vmatmul.f32.gmra.mxu0 %v190
  %v257 = vpop.f32.mrf.mxu0
  %v258 = vadd.f32 %v142, %v257
  %259 = vmatmul.f32.gmra.mxu0 %v193
  %v260 = vpop.f32.mrf.mxu0
  %v261 = vadd.f32 %v145, %v260
  %262 = vmatmul.f32.gmra.mxu0 %v196
  %v263 = vpop.f32.mrf.mxu0
  %v264 = vadd.f32 %v148, %v263
  %265 = vmatmul.f32.gmra.mxu0 %v199
  %v266 = vpop.f32.mrf.mxu0
  %v267 = vadd.f32 %v151, %v266
  %268 = vmatmul.f32.gmra.mxu0 %v202
  %v269 = vpop.f32.mrf.mxu0
  %v270 = vadd.f32 %v154, %v269
  %271 = vmatmul.f32.gmra.mxu0 %v205
  %v272 = vpop.f32.mrf.mxu0
  %v273 = vadd.f32 %v157, %v272
  %274 = vmatmul.f32.gmra.mxu0 %v208
  %v275 = vpop.f32.mrf.mxu0
  %v276 = vadd.f32 %v160, %v275
  %277 = vmatmul.f32.gmra.mxu0 %v211
  %v278 = vpop.f32.mrf.mxu0
  %v279 = vadd.f32 %v163, %v278
  %280 = vmatmul.f32.gmra.mxu0 %v214
  %v281 = vpop.f32.mrf.mxu0
  %v282 = vadd.f32 %v166, %v281
  %283 = vmatmul.f32.gmra.mxu0 %v217
  %v284 = vpop.f32.mrf.mxu0
  %v285 = vadd.f32 %v169, %v284
  %286 = vmatmul.f32.gmra.mxu0 %v220
  %v287 = vpop.f32.mrf.mxu0
  %v288 = vadd.f32 %v172, %v287
  %289 = vmatmul.f32.gmra.mxu0 %v223
  %v290 = vpop.f32.mrf.mxu0
  %v291 = vadd.f32 %v175, %v290
  %292 = vmatmul.f32.gmra.mxu0 %v226
  %v293 = vpop.f32.mrf.mxu0
  %v294 = vadd.f32 %v178, %v293
  %295 = vdwg.mxu0
  %s296 = scalar_lea.vmem %s0, 16
  %v297 = vld [vmem:[%s296] sm:$0xff]
  %v298 = vld [vmem:[%s296 + $0x10] sm:$0xff]
  %v299 = vld [vmem:[%s296 + $0x20] sm:$0xff]
  %v300 = vld [vmem:[%s296 + $0x30] sm:$0xff]
  %v301 = vld [vmem:[%s296 + $0x40] sm:$0xff]
  %v302 = vld [vmem:[%s296 + $0x50] sm:$0xff]
  %v303 = vld [vmem:[%s296 + $0x60] sm:$0xff]
  %v304 = vld [vmem:[%s296 + $0x70] sm:$0xff]
  %v305 = vld [vmem:[%s296 + $0x90] sm:$0xff]
  %v306 = vld [vmem:[%s296 + $0xa0] sm:$0xff]
  %v307 = vld [vmem:[%s296 + $0xb0] sm:$0xff]
  %v308 = vld [vmem:[%s296 + $0xc0] sm:$0xff]
  %v309 = vld [vmem:[%s296 + $0xd0] sm:$0xff]
  %v310 = vld [vmem:[%s296 + $0xe0] sm:$0xff]
  %v311 = vld [vmem:[%s296 + $0xf0] sm:$0xff]
  %v312 = vld [vmem:[%s296 + $0x100] sm:$0xff]
  %v314 = vsel %vm62, %v297, 0
  %v317 = vsel %vm62, %v298, 0
  %v320 = vsel %vm62, %v299, 0
  %v323 = vsel %vm62, %v300, 0
  %v326 = vsel %vm62, %v301, 0
  %v329 = vsel %vm62, %v302, 0
  %v332 = vsel %vm62, %v303, 0
  %v335 = vsel %vm62, %v304, 0
  %v338 = vsel %vm62, %v305, 0
  %v341 = vsel %vm62, %v306, 0
  %v344 = vsel %vm62, %v307, 0
  %v347 = vsel %vm62, %v308, 0
  %v350 = vsel %vm62, %v309, 0
  %v353 = vsel %vm62, %v310, 0
  %v356 = vsel %vm62, %v311, 0
  %v359 = vsel %vm62, %v312, 0
  %v362 = vsel %vm111, %v28, 0
  %364 = vmatpush.msra.mxu0 0.0
  %365 = vmatpush.msra.mxu0 0.0
  %366 = vmatpush.msra.mxu0 0.0
  %367 = vmatpush.msra.mxu0 0.0
  %368 = vmatpush.msra.mxu0 0.0
  %369 = vmatpush.msra.mxu0 0.0
  %370 = vmatpush.msra.mxu0 0.0
  %371 = vmatpush.msra.mxu0 0.0
  %372 = vmatpush.msra.mxu0 0.0
  %373 = vmatpush.msra.mxu0 0.0
  %374 = vmatpush.msra.mxu0 0.0
  %375 = vmatpush.msra.mxu0 0.0
  %376 = vmatpush.msra.mxu0 0.0
  %377 = vmatpush.msra.mxu0 0.0
  %378 = vmatpush.msra.mxu0 0.0
  %379 = vmatpush.msra.mxu0 %v362
  %380 = vmatmul.f32.gmra.mxu0 %v314
  %v381 = vpop.f32.mrf.mxu0
  %v382 = vadd.f32 0.0, %v381
  %383 = vmatmul.f32.gmra.mxu0 %v317
  %v384 = vpop.f32.mrf.mxu0
  %v385 = vadd.f32 0.0, %v384
  %386 = vmatmul.f32.gmra.mxu0 %v320
  %v387 = vpop.f32.mrf.mxu0
  %v388 = vadd.f32 0.0, %v387
  %389 = vmatmul.f32.gmra.mxu0 %v323
  %v390 = vpop.f32.mrf.mxu0
  %v391 = vadd.f32 0.0, %v390
  %392 = vmatmul.f32.gmra.mxu0 %v326
  %v393 = vpop.f32.mrf.mxu0
  %v394 = vadd.f32 0.0, %v393
  %395 = vmatmul.f32.gmra.mxu0 %v329
  %v396 = vpop.f32.mrf.mxu0
  %v397 = vadd.f32 0.0, %v396
  %398 = vmatmul.f32.gmra.mxu0 %v332
  %v399 = vpop.f32.mrf.mxu0
  %v400 = vadd.f32 0.0, %v399
  %401 = vmatmul.f32.gmra.mxu0 %v335
  %v402 = vpop.f32.mrf.mxu0
  %v403 = vadd.f32 0.0, %v402
  %404 = vmatmul.f32.gmra.mxu0 %v338
  %v405 = vpop.f32.mrf.mxu0
  %v406 = vadd.f32 0.0, %v405
  %407 = vmatmul.f32.gmra.mxu0 %v341
  %v408 = vpop.f32.mrf.mxu0
  %v409 = vadd.f32 0.0, %v408
  %410 = vmatmul.f32.gmra.mxu0 %v344
  %v411 = vpop.f32.mrf.mxu0
  %v412 = vadd.f32 0.0, %v411
  %413 = vmatmul.f32.gmra.mxu0 %v347
  %v414 = vpop.f32.mrf.mxu0
  %v415 = vadd.f32 0.0, %v414
  %416 = vmatmul.f32.gmra.mxu0 %v350
  %v417 = vpop.f32.mrf.mxu0
  %v418 = vadd.f32 0.0, %v417
  %419 = vmatmul.f32.gmra.mxu0 %v353
  %v420 = vpop.f32.mrf.mxu0
  %v421 = vadd.f32 0.0, %v420
  %422 = vmatmul.f32.gmra.mxu0 %v356
  %v423 = vpop.f32.mrf.mxu0
  %v424 = vadd.f32 0.0, %v423
  %425 = vmatmul.f32.gmra.mxu0 %v359
  %v426 = vpop.f32.mrf.mxu0
  %v427 = vadd.f32 0.0, %v426
  %428 = vdwg.mxu0
  %v429 = vadd.f32 %v249, %v382
  %v430 = vadd.f32 %v252, %v385
  %v431 = vadd.f32 %v255, %v388
  %v432 = vadd.f32 %v258, %v391
  %v433 = vadd.f32 %v261, %v394
  %v434 = vadd.f32 %v264, %v397
  %v435 = vadd.f32 %v267, %v400
  %v436 = vadd.f32 %v270, %v403
  %v437 = vadd.f32 %v273, %v406
  %v438 = vadd.f32 %v276, %v409
  %v439 = vadd.f32 %v279, %v412
  %v440 = vadd.f32 %v282, %v415
  %v441 = vadd.f32 %v285, %v418
  %v442 = vadd.f32 %v288, %v421
  %v443 = vadd.f32 %v291, %v424
  %v444 = vadd.f32 %v294, %v427
  %v445 = vld [vmem:[%s296 + $0x1] sm:$0xff]
  %v446 = vld [vmem:[%s296 + $0x11] sm:$0xff]
  %v447 = vld [vmem:[%s296 + $0x21] sm:$0xff]
  %v448 = vld [vmem:[%s296 + $0x31] sm:$0xff]
  %v449 = vld [vmem:[%s296 + $0x41] sm:$0xff]
  %v450 = vld [vmem:[%s296 + $0x51] sm:$0xff]
  %v451 = vld [vmem:[%s296 + $0x61] sm:$0xff]
  %v452 = vld [vmem:[%s296 + $0x71] sm:$0xff]
  %v453 = vld [vmem:[%s296 + $0x91] sm:$0xff]
  %v454 = vld [vmem:[%s296 + $0xa1] sm:$0xff]
  %v455 = vld [vmem:[%s296 + $0xb1] sm:$0xff]
  %v456 = vld [vmem:[%s296 + $0xc1] sm:$0xff]
  %v457 = vld [vmem:[%s296 + $0xd1] sm:$0xff]
  %v458 = vld [vmem:[%s296 + $0xe1] sm:$0xff]
  %v459 = vld [vmem:[%s296 + $0xf1] sm:$0xff]
  %v460 = vld [vmem:[%s296 + $0x101] sm:$0xff]
  %v462 = vsel %vm62, %v445, 0
  %v465 = vsel %vm62, %v446, 0
  %v468 = vsel %vm62, %v447, 0
  %v471 = vsel %vm62, %v448, 0
  %v474 = vsel %vm62, %v449, 0
  %v477 = vsel %vm62, %v450, 0
  %v480 = vsel %vm62, %v451, 0
  %v483 = vsel %vm62, %v452, 0
  %v486 = vsel %vm62, %v453, 0
  %v489 = vsel %vm62, %v454, 0
  %v492 = vsel %vm62, %v455, 0
  %v495 = vsel %vm62, %v456, 0
  %v498 = vsel %vm62, %v457, 0
  %v501 = vsel %vm62, %v458, 0
  %v504 = vsel %vm62, %v459, 0
  %v507 = vsel %vm62, %v460, 0
  %v510 = vsel %vm111, %v29, 0
  %512 = vmatpush.msra.mxu0 0.0
  %513 = vmatpush.msra.mxu0 0.0
  %514 = vmatpush.msra.mxu0 0.0
  %515 = vmatpush.msra.mxu0 0.0
  %516 = vmatpush.msra.mxu0 0.0
  %517 = vmatpush.msra.mxu0 0.0
  %518 = vmatpush.msra.mxu0 0.0
  %519 = vmatpush.msra.mxu0 0.0
  %520 = vmatpush.msra.mxu0 0.0
  %521 = vmatpush.msra.mxu0 0.0
  %522 = vmatpush.msra.mxu0 0.0
  %523 = vmatpush.msra.mxu0 0.0
  %524 = vmatpush.msra.mxu0 0.0
  %525 = vmatpush.msra.mxu0 0.0
  %526 = vmatpush.msra.mxu0 0.0
  %527 = vmatpush.msra.mxu0 %v510
  %528 = vmatmul.f32.gmra.mxu0 %v462
  %v529 = vpop.f32.mrf.mxu0
  %v530 = vadd.f32 0.0, %v529
  %531 = vmatmul.f32.gmra.mxu0 %v465
  %v532 = vpop.f32.mrf.mxu0
  %v533 = vadd.f32 0.0, %v532
  %534 = vmatmul.f32.gmra.mxu0 %v468
  %v535 = vpop.f32.mrf.mxu0
  %v536 = vadd.f32 0.0, %v535
  %537 = vmatmul.f32.gmra.mxu0 %v471
  %v538 = vpop.f32.mrf.mxu0
  %v539 = vadd.f32 0.0, %v538
  %540 = vmatmul.f32.gmra.mxu0 %v474
  %v541 = vpop.f32.mrf.mxu0
  %v542 = vadd.f32 0.0, %v541
  %543 = vmatmul.f32.gmra.mxu0 %v477
  %v544 = vpop.f32.mrf.mxu0
  %v545 = vadd.f32 0.0, %v544
  %546 = vmatmul.f32.gmra.mxu0 %v480
  %v547 = vpop.f32.mrf.mxu0
  %v548 = vadd.f32 0.0, %v547
  %549 = vmatmul.f32.gmra.mxu0 %v483
  %v550 = vpop.f32.mrf.mxu0
  %v551 = vadd.f32 0.0, %v550
  %552 = vmatmul.f32.gmra.mxu0 %v486
  %v553 = vpop.f32.mrf.mxu0
  %v554 = vadd.f32 0.0, %v553
  %555 = vmatmul.f32.gmra.mxu0 %v489
  %v556 = vpop.f32.mrf.mxu0
  %v557 = vadd.f32 0.0, %v556
  %558 = vmatmul.f32.gmra.mxu0 %v492
  %v559 = vpop.f32.mrf.mxu0
  %v560 = vadd.f32 0.0, %v559
  %561 = vmatmul.f32.gmra.mxu0 %v495
  %v562 = vpop.f32.mrf.mxu0
  %v563 = vadd.f32 0.0, %v562
  %564 = vmatmul.f32.gmra.mxu0 %v498
  %v565 = vpop.f32.mrf.mxu0
  %v566 = vadd.f32 0.0, %v565
  %567 = vmatmul.f32.gmra.mxu0 %v501
  %v568 = vpop.f32.mrf.mxu0
  %v569 = vadd.f32 0.0, %v568
  %570 = vmatmul.f32.gmra.mxu0 %v504
  %v571 = vpop.f32.mrf.mxu0
  %v572 = vadd.f32 0.0, %v571
  %573 = vmatmul.f32.gmra.mxu0 %v507
  %v574 = vpop.f32.mrf.mxu0
  %v575 = vadd.f32 0.0, %v574
  %576 = vdwg.mxu0
  %v577 = vadd.f32 %v429, %v530
  %v578 = vadd.f32 %v430, %v533
  %v579 = vadd.f32 %v431, %v536
  %v580 = vadd.f32 %v432, %v539
  %v581 = vadd.f32 %v433, %v542
  %v582 = vadd.f32 %v434, %v545
  %v583 = vadd.f32 %v435, %v548
  %v584 = vadd.f32 %v436, %v551
  %v585 = vadd.f32 %v437, %v554
  %v586 = vadd.f32 %v438, %v557
  %v587 = vadd.f32 %v439, %v560
  %v588 = vadd.f32 %v440, %v563
  %v589 = vadd.f32 %v441, %v566
  %v590 = vadd.f32 %v442, %v569
  %v591 = vadd.f32 %v443, %v572
  %v592 = vadd.f32 %v444, %v575
  %v593 = vld [vmem:[%s2] sm:$0x1]
  %v595 = vperm.slane %v593, 0
  %v597 = vadd.f32 %v577, %v595
  %v598 = vadd.f32 %v578, %v595
  %v599 = vadd.f32 %v579, %v595
  %v600 = vadd.f32 %v580, %v595
  %v601 = vadd.f32 %v581, %v595
  %v602 = vadd.f32 %v582, %v595
  %v603 = vadd.f32 %v583, %v595
  %v604 = vadd.f32 %v584, %v595
  %v605 = vadd.f32 %v585, %v595
  %v606 = vadd.f32 %v586, %v595
  %v607 = vadd.f32 %v587, %v595
  %v608 = vadd.f32 %v588, %v595
  %v609 = vadd.f32 %v589, %v595
  %v610 = vadd.f32 %v590, %v595
  %v611 = vadd.f32 %v591, %v595
  %v612 = vadd.f32 %v592, %v595
  %v613 = vmul.f32 %v597, %v597
  %v614 = vmul.f32 %v598, %v598
  %v615 = vmul.f32 %v599, %v599
  %v616 = vmul.f32 %v600, %v600
  %v617 = vmul.f32 %v601, %v601
  %v618 = vmul.f32 %v602, %v602
  %v619 = vmul.f32 %v603, %v603
  %v620 = vmul.f32 %v604, %v604
  %v621 = vmul.f32 %v605, %v605
  %v622 = vmul.f32 %v606, %v606
  %v623 = vmul.f32 %v607, %v607
  %v624 = vmul.f32 %v608, %v608
  %v625 = vmul.f32 %v609, %v609
  %v626 = vmul.f32 %v610, %v610
  %v627 = vmul.f32 %v611, %v611
  %v628 = vmul.f32 %v612, %v612
  %v629 = vld [vmem:[%s3] sm:$0xff]
  %v630 = vld [vmem:[%s3 + $0x8] sm:$0xff]
  %v631 = vld [vmem:[%s3 + $0x10] sm:$0xff]
  %v632 = vld [vmem:[%s3 + $0x18] sm:$0xff]
  %v633 = vld [vmem:[%s4] sm:$0x1]
  %v635 = vperm.slane %v633, 0
  %vm637 = vcmask 261120
  %v639 = vsel %vm637, %v613, 0
  %v642 = vsel %vm637, %v614, 0
  %v645 = vsel %vm637, %v615, 0
  %v648 = vsel %vm637, %v616, 0
  %v651 = vsel %vm637, %v617, 0
  %v654 = vsel %vm637, %v618, 0
  %v657 = vsel %vm637, %v619, 0
  %v660 = vsel %vm637, %v620, 0
  %v663 = vsel %vm637, %v621, 0
  %v666 = vsel %vm637, %v622, 0
  %v669 = vsel %vm637, %v623, 0
  %v672 = vsel %vm637, %v624, 0
  %v675 = vsel %vm637, %v625, 0
  %v678 = vsel %vm637, %v626, 0
  %v681 = vsel %vm637, %v627, 0
  %v684 = vsel %vm637, %v628, 0
  %686 = vmatpush.msra.mxu0 0.0
  %687 = vmatpush.msra.mxu0 0.0
  %688 = vmatpush.msra.mxu0 0.0
  %689 = vmatpush.msra.mxu0 0.0
  %690 = vmatpush.msra.mxu0 0.0
  %691 = vmatpush.msra.mxu0 0.0
  %692 = vmatpush.msra.mxu0 0.0
  %693 = vmatpush.msra.mxu0 0.0
  %694 = vmatpush.msra.mxu0 0.0
  %695 = vmatpush.msra.mxu0 0.0
  %696 = vmatpush.msra.mxu0 0.0
  %697 = vmatpush.msra.mxu0 0.0
  %698 = vmatpush.msra.mxu0 %v632
  %699 = vmatpush.msra.mxu0 %v631
  %700 = vmatpush.msra.mxu0 %v630
  %701 = vmatpush.msra.mxu0 %v629
  %702 = vmatmul.f32.gmra.mxu0 %v639
  %v703 = vpop.f32.mrf.mxu0
  %v704 = vadd.f32 %v635, %v703
  %705 = vmatmul.f32.gmra.mxu0 %v642
  %v706 = vpop.f32.mrf.mxu0
  %v707 = vadd.f32 %v635, %v706
  %708 = vmatmul.f32.gmra.mxu0 %v645
  %v709 = vpop.f32.mrf.mxu0
  %v710 = vadd.f32 %v635, %v709
  %711 = vmatmul.f32.gmra.mxu0 %v648
  %v712 = vpop.f32.mrf.mxu0
  %v713 = vadd.f32 %v635, %v712
  %714 = vmatmul.f32.gmra.mxu0 %v651
  %v715 = vpop.f32.mrf.mxu0
  %v716 = vadd.f32 %v635, %v715
  %717 = vmatmul.f32.gmra.mxu0 %v654
  %v718 = vpop.f32.mrf.mxu0
  %v719 = vadd.f32 %v635, %v718
  %720 = vmatmul.f32.gmra.mxu0 %v657
  %v721 = vpop.f32.mrf.mxu0
  %v722 = vadd.f32 %v635, %v721
  %723 = vmatmul.f32.gmra.mxu0 %v660
  %v724 = vpop.f32.mrf.mxu0
  %v725 = vadd.f32 %v635, %v724
  %726 = vmatmul.f32.gmra.mxu0 %v663
  %v727 = vpop.f32.mrf.mxu0
  %v728 = vadd.f32 %v635, %v727
  %729 = vmatmul.f32.gmra.mxu0 %v666
  %v730 = vpop.f32.mrf.mxu0
  %v731 = vadd.f32 %v635, %v730
  %732 = vmatmul.f32.gmra.mxu0 %v669
  %v733 = vpop.f32.mrf.mxu0
  %v734 = vadd.f32 %v635, %v733
  %735 = vmatmul.f32.gmra.mxu0 %v672
  %v736 = vpop.f32.mrf.mxu0
  %v737 = vadd.f32 %v635, %v736
  %738 = vmatmul.f32.gmra.mxu0 %v675
  %v739 = vpop.f32.mrf.mxu0
  %v740 = vadd.f32 %v635, %v739
  %741 = vmatmul.f32.gmra.mxu0 %v678
  %v742 = vpop.f32.mrf.mxu0
  %v743 = vadd.f32 %v635, %v742
  %744 = vmatmul.f32.gmra.mxu0 %v681
  %v745 = vpop.f32.mrf.mxu0
  %v746 = vadd.f32 %v635, %v745
  %747 = vmatmul.f32.gmra.mxu0 %v684
  %v748 = vpop.f32.mrf.mxu0
  %v749 = vadd.f32 %v635, %v748
  %750 = vdwg.mxu0
  %v751 = vrsqrt.pop %v704
  %v752 = vmul.f32 %v751, %v704
  %v753 = vmul.f32 %v752, %v751
  %v754 = vmul.f32 0.5, %v753
  %v755 = vsub.f32 1.5, %v754
  %v756 = vmul.f32 %v751, %v755
  %vm757 = vweird.f32 %v704
  %vm758 = vweird.f32 %v751
  %vm759 = vmor %vm757, %vm758
  %v760 = vsel %vm759, %v751, %v756
  %v761 = vrsqrt.pop %v707
  %v762 = vmul.f32 %v761, %v707
  %v763 = vmul.f32 %v762, %v761
  %v764 = vmul.f32 0.5, %v763
  %v765 = vsub.f32 1.5, %v764
  %v766 = vmul.f32 %v761, %v765
  %vm767 = vweird.f32 %v707
  %vm768 = vweird.f32 %v761
  %vm769 = vmor %vm767, %vm768
  %v770 = vsel %vm769, %v761, %v766
  %v771 = vrsqrt.pop %v710
  %v772 = vmul.f32 %v771, %v710
  %v773 = vmul.f32 %v772, %v771
  %v774 = vmul.f32 0.5, %v773
  %v775 = vsub.f32 1.5, %v774
  %v776 = vmul.f32 %v771, %v775
  %vm777 = vweird.f32 %v710
  %vm778 = vweird.f32 %v771
  %vm779 = vmor %vm777, %vm778
  %v780 = vsel %vm779, %v771, %v776
  %v781 = vrsqrt.pop %v713
  %v782 = vmul.f32 %v781, %v713
  %v783 = vmul.f32 %v782, %v781
  %v784 = vmul.f32 0.5, %v783
  %v785 = vsub.f32 1.5, %v784
  %v786 = vmul.f32 %v781, %v785
  %vm787 = vweird.f32 %v713
  %vm788 = vweird.f32 %v781
  %vm789 = vmor %vm787, %vm788
  %v790 = vsel %vm789, %v781, %v786
  %v791 = vrsqrt.pop %v716
  %v792 = vmul.f32 %v791, %v716
  %v793 = vmul.f32 %v792, %v791
  %v794 = vmul.f32 0.5, %v793
  %v795 = vsub.f32 1.5, %v794
  %v796 = vmul.f32 %v791, %v795
  %vm797 = vweird.f32 %v716
  %vm798 = vweird.f32 %v791
  %vm799 = vmor %vm797, %vm798
  %v800 = vsel %vm799, %v791, %v796
  %v801 = vrsqrt.pop %v719
  %v802 = vmul.f32 %v801, %v719
  %v803 = vmul.f32 %v802, %v801
  %v804 = vmul.f32 0.5, %v803
  %v805 = vsub.f32 1.5, %v804
  %v806 = vmul.f32 %v801, %v805
  %vm807 = vweird.f32 %v719
  %vm808 = vweird.f32 %v801
  %vm809 = vmor %vm807, %vm808
  %v810 = vsel %vm809, %v801, %v806
  %v811 = vrsqrt.pop %v722
  %v812 = vmul.f32 %v811, %v722
  %v813 = vmul.f32 %v812, %v811
  %v814 = vmul.f32 0.5, %v813
  %v815 = vsub.f32 1.5, %v814
  %v816 = vmul.f32 %v811, %v815
  %vm817 = vweird.f32 %v722
  %vm818 = vweird.f32 %v811
  %vm819 = vmor %vm817, %vm818
  %v820 = vsel %vm819, %v811, %v816
  %v821 = vrsqrt.pop %v725
  %v822 = vmul.f32 %v821, %v725
  %v823 = vmul.f32 %v822, %v821
  %v824 = vmul.f32 0.5, %v823
  %v825 = vsub.f32 1.5, %v824
  %v826 = vmul.f32 %v821, %v825
  %vm827 = vweird.f32 %v725
  %vm828 = vweird.f32 %v821
  %vm829 = vmor %vm827, %vm828
  %v830 = vsel %vm829, %v821, %v826
  %v831 = vrsqrt.pop %v728
  %v832 = vmul.f32 %v831, %v728
  %v833 = vmul.f32 %v832, %v831
  %v834 = vmul.f32 0.5, %v833
  %v835 = vsub.f32 1.5, %v834
  %v836 = vmul.f32 %v831, %v835
  %vm837 = vweird.f32 %v728
  %vm838 = vweird.f32 %v831
  %vm839 = vmor %vm837, %vm838
  %v840 = vsel %vm839, %v831, %v836
  %v841 = vrsqrt.pop %v731
  %v842 = vmul.f32 %v841, %v731
  %v843 = vmul.f32 %v842, %v841
  %v844 = vmul.f32 0.5, %v843
  %v845 = vsub.f32 1.5, %v844
  %v846 = vmul.f32 %v841, %v845
  %vm847 = vweird.f32 %v731
  %vm848 = vweird.f32 %v841
  %vm849 = vmor %vm847, %vm848
  %v850 = vsel %vm849, %v841, %v846
  %v851 = vrsqrt.pop %v734
  %v852 = vmul.f32 %v851, %v734
  %v853 = vmul.f32 %v852, %v851
  %v854 = vmul.f32 0.5, %v853
  %v855 = vsub.f32 1.5, %v854
  %v856 = vmul.f32 %v851, %v855
  %vm857 = vweird.f32 %v734
  %vm858 = vweird.f32 %v851
  %vm859 = vmor %vm857, %vm858
  %v860 = vsel %vm859, %v851, %v856
  %v861 = vrsqrt.pop %v737
  %v862 = vmul.f32 %v861, %v737
  %v863 = vmul.f32 %v862, %v861
  %v864 = vmul.f32 0.5, %v863
  %v865 = vsub.f32 1.5, %v864
  %v866 = vmul.f32 %v861, %v865
  %vm867 = vweird.f32 %v737
  %vm868 = vweird.f32 %v861
  %vm869 = vmor %vm867, %vm868
  %v870 = vsel %vm869, %v861, %v866
  %v871 = vrsqrt.pop %v740
  %v872 = vmul.f32 %v871, %v740
  %v873 = vmul.f32 %v872, %v871
  %v874 = vmul.f32 0.5, %v873
  %v875 = vsub.f32 1.5, %v874
  %v876 = vmul.f32 %v871, %v875
  %vm877 = vweird.f32 %v740
  %vm878 = vweird.f32 %v871
  %vm879 = vmor %vm877, %vm878
  %v880 = vsel %vm879, %v871, %v876
  %v881 = vrsqrt.pop %v743
  %v882 = vmul.f32 %v881, %v743
  %v883 = vmul.f32 %v882, %v881
  %v884 = vmul.f32 0.5, %v883
  %v885 = vsub.f32 1.5, %v884
  %v886 = vmul.f32 %v881, %v885
  %vm887 = vweird.f32 %v743
  %vm888 = vweird.f32 %v881
  %vm889 = vmor %vm887, %vm888
  %v890 = vsel %vm889, %v881, %v886
  %v891 = vrsqrt.pop %v746
  %v892 = vmul.f32 %v891, %v746
  %v893 = vmul.f32 %v892, %v891
  %v894 = vmul.f32 0.5, %v893
  %v895 = vsub.f32 1.5, %v894
  %v896 = vmul.f32 %v891, %v895
  %vm897 = vweird.f32 %v746
  %vm898 = vweird.f32 %v891
  %vm899 = vmor %vm897, %vm898
  %v900 = vsel %vm899, %v891, %v896
  %v901 = vrsqrt.pop %v749
  %v902 = vmul.f32 %v901, %v749
  %v903 = vmul.f32 %v902, %v901
  %v904 = vmul.f32 0.5, %v903
  %v905 = vsub.f32 1.5, %v904
  %v906 = vmul.f32 %v901, %v905
  %vm907 = vweird.f32 %v749
  %vm908 = vweird.f32 %v901
  %vm909 = vmor %vm907, %vm908
  %v910 = vsel %vm909, %v901, %v906
  %v911 = vmul.f32 %v597, %v760
  %v912 = vmul.f32 %v598, %v770
  %v913 = vmul.f32 %v599, %v780
  %v914 = vmul.f32 %v600, %v790
  %v915 = vmul.f32 %v601, %v800
  %v916 = vmul.f32 %v602, %v810
  %v917 = vmul.f32 %v603, %v820
  %v918 = vmul.f32 %v604, %v830
  %v919 = vmul.f32 %v605, %v840
  %v920 = vmul.f32 %v606, %v850
  %v921 = vmul.f32 %v607, %v860
  %v922 = vmul.f32 %v608, %v870
  %v923 = vmul.f32 %v609, %v880
  %v924 = vmul.f32 %v610, %v890
  %v925 = vmul.f32 %v611, %v900
  %v926 = vmul.f32 %v612, %v910
  %vm927 = vcmask 64512
  %928 = vst.msk [vmem:[#allocation2] sm:$0xff] %vm927, 0.0
  %vm929 = vcmask 57344
  %930 = vst.msk [vmem:[#allocation2 + $0x8] sm:$0x1] %vm929, 0.0
  %931 = vst.msk [vmem:[#allocation2 + $0x10] sm:$0xff] %vm927, 0.0
  %932 = vst.msk [vmem:[#allocation2 + $0x18] sm:$0x1] %vm929, 0.0
  %933 = vst.msk [vmem:[#allocation2 + $0x20] sm:$0xff] %vm927, 0.0
  %934 = vst.msk [vmem:[#allocation2 + $0x28] sm:$0x1] %vm929, 0.0
  %935 = vst.msk [vmem:[#allocation2 + $0x30] sm:$0xff] %vm927, 0.0
  %936 = vst.msk [vmem:[#allocation2 + $0x38] sm:$0x1] %vm929, 0.0
  %937 = vst.msk [vmem:[#allocation2 + $0x40] sm:$0xff] %vm927, 0.0
  %938 = vst.msk [vmem:[#allocation2 + $0x48] sm:$0x1] %vm929, 0.0
  %939 = vst.msk [vmem:[#allocation2 + $0x50] sm:$0xff] %vm927, 0.0
  %940 = vst.msk [vmem:[#allocation2 + $0x58] sm:$0x1] %vm929, 0.0
  %941 = vst.msk [vmem:[#allocation2 + $0x60] sm:$0xff] %vm927, 0.0
  %942 = vst.msk [vmem:[#allocation2 + $0x68] sm:$0x1] %vm929, 0.0
  %943 = vst.msk [vmem:[#allocation2 + $0x70] sm:$0xff] %vm927, 0.0
  %944 = vst.msk [vmem:[#allocation2 + $0x78] sm:$0x1] %vm929, 0.0
  %945 = vst.msk [vmem:[#allocation2 + $0x80] sm:$0xff] %vm927, 0.0
  %946 = vst.msk [vmem:[#allocation2 + $0x88] sm:$0x1] %vm929, 0.0
  %947 = vst.msk [vmem:[#allocation2 + $0x90] sm:$0xff] %vm927, 0.0
  %948 = vst.msk [vmem:[#allocation2 + $0x98] sm:$0x1] %vm929, 0.0
  %949 = vst.msk [vmem:[#allocation2 + $0xa0] sm:$0xff] %vm927, 0.0
  %950 = vst.msk [vmem:[#allocation2 + $0xa8] sm:$0x1] %vm929, 0.0
  %951 = vst.msk [vmem:[#allocation2 + $0xb0] sm:$0xff] %vm927, 0.0
  %952 = vst.msk [vmem:[#allocation2 + $0xb8] sm:$0x1] %vm929, 0.0
  %953 = vst.msk [vmem:[#allocation2 + $0xc0] sm:$0xff] %vm927, 0.0
  %954 = vst.msk [vmem:[#allocation2 + $0xc8] sm:$0x1] %vm929, 0.0
  %955 = vst.msk [vmem:[#allocation2 + $0xd0] sm:$0xff] %vm927, 0.0
  %956 = vst.msk [vmem:[#allocation2 + $0xd8] sm:$0x1] %vm929, 0.0
  %957 = vst.msk [vmem:[#allocation2 + $0xe0] sm:$0xff] %vm927, 0.0
  %958 = vst.msk [vmem:[#allocation2 + $0xe8] sm:$0x1] %vm929, 0.0
  %959 = vst.msk [vmem:[#allocation2 + $0xf0] sm:$0xff] %vm927, 0.0
  %960 = vst.msk [vmem:[#allocation2 + $0xf8] sm:$0x1] %vm929, 0.0
  %961 = vst.msk [vmem:[#allocation2 + $0x100] sm:$0xff] %vm927, 0.0
  %962 = vst.msk [vmem:[#allocation2 + $0x108] sm:$0x1] %vm929, 0.0
  %963 = vst.msk [vmem:[#allocation2 + $0x110] sm:$0xff] %vm927, 0.0
  %964 = vst.msk [vmem:[#allocation2 + $0x118] sm:$0x1] %vm929, 0.0
  %965 = vst.msk [vmem:[#allocation2 + $0x120] sm:$0xff] %vm927, 0.0
  %966 = vst.msk [vmem:[#allocation2 + $0x128] sm:$0x1] %vm929, 0.0
  %967 = vst.msk [vmem:[#allocation2 + $0x130] sm:$0xff] %vm927, 0.0
  %968 = vst.msk [vmem:[#allocation2 + $0x138] sm:$0x1] %vm929, 0.0
  %969 = vst.msk [vmem:[#allocation2 + $0x140] sm:$0xff] %vm927, 0.0
  %970 = vst.msk [vmem:[#allocation2 + $0x148] sm:$0x1] %vm929, 0.0
  %971 = vst.msk [vmem:[#allocation2 + $0x150] sm:$0xff] %vm927, 0.0
  %972 = vst.msk [vmem:[#allocation2 + $0x158] sm:$0x1] %vm929, 0.0
  %973 = vst.msk [vmem:[#allocation2 + $0x160] sm:$0xff] %vm927, 0.0
  %974 = vst.msk [vmem:[#allocation2 + $0x168] sm:$0x1] %vm929, 0.0
  %975 = vst.msk [vmem:[#allocation2 + $0x170] sm:$0xff] %vm927, 0.0
  %976 = vst.msk [vmem:[#allocation2 + $0x178] sm:$0x1] %vm929, 0.0
  %977 = vst.msk [vmem:[#allocation2 + $0x180] sm:$0xff] %vm927, 0.0
  %978 = vst.msk [vmem:[#allocation2 + $0x188] sm:$0x1] %vm929, 0.0
  %979 = vst.msk [vmem:[#allocation2 + $0x190] sm:$0xff] %vm927, 0.0
  %980 = vst.msk [vmem:[#allocation2 + $0x198] sm:$0x1] %vm929, 0.0
  %981 = vst.msk [vmem:[#allocation2 + $0x1a0] sm:$0xff] %vm927, 0.0
  %982 = vst.msk [vmem:[#allocation2 + $0x1a8] sm:$0x1] %vm929, 0.0
  %983 = vst.msk [vmem:[#allocation2 + $0x1b0] sm:$0xff] %vm927, 0.0
  %984 = vst.msk [vmem:[#allocation2 + $0x1b8] sm:$0x1] %vm929, 0.0
  %985 = vst.msk [vmem:[#allocation2 + $0x1c0] sm:$0xff] %vm927, 0.0
  %986 = vst.msk [vmem:[#allocation2 + $0x1c8] sm:$0x1] %vm929, 0.0
  %987 = vst.msk [vmem:[#allocation2 + $0x1d0] sm:$0xff] %vm927, 0.0
  %988 = vst.msk [vmem:[#allocation2 + $0x1d8] sm:$0x1] %vm929, 0.0
  %989 = vst.msk [vmem:[#allocation2 + $0x1e0] sm:$0xff] %vm927, 0.0
  %990 = vst.msk [vmem:[#allocation2 + $0x1e8] sm:$0x1] %vm929, 0.0
  %991 = vst.msk [vmem:[#allocation2 + $0x1f0] sm:$0xff] %vm927, 0.0
  %992 = vst.msk [vmem:[#allocation2 + $0x1f8] sm:$0x1] %vm929, 0.0
  %993 = vst.msk [vmem:[#allocation2 + $0x200] sm:$0xff] %vm927, 0.0
  %994 = vst.msk [vmem:[#allocation2 + $0x208] sm:$0x1] %vm929, 0.0
  %995 = vst.msk [vmem:[#allocation2 + $0x210] sm:$0xff] %vm927, 0.0
  %996 = vst.msk [vmem:[#allocation2 + $0x218] sm:$0x1] %vm929, 0.0
  %997 = vst.msk [vmem:[#allocation2 + $0x220] sm:$0xff] %vm927, 0.0
  %998 = vst.msk [vmem:[#allocation2 + $0x228] sm:$0x1] %vm929, 0.0
  %999 = vst.msk [vmem:[#allocation2 + $0x230] sm:$0xff] %vm927, 0.0
  %1000 = vst.msk [vmem:[#allocation2 + $0x238] sm:$0x1] %vm929, 0.0
  %1001 = vst.msk [vmem:[#allocation2 + $0x240] sm:$0xff] %vm927, 0.0
  %1002 = vst.msk [vmem:[#allocation2 + $0x248] sm:$0x1] %vm929, 0.0
  %1003 = vst.msk [vmem:[#allocation2 + $0x250] sm:$0xff] %vm927, 0.0
  %1004 = vst.msk [vmem:[#allocation2 + $0x258] sm:$0x1] %vm929, 0.0
  %1005 = vst.msk [vmem:[#allocation2 + $0x260] sm:$0xff] %vm927, 0.0
  %1006 = vst.msk [vmem:[#allocation2 + $0x268] sm:$0x1] %vm929, 0.0
  %1007 = vst.msk [vmem:[#allocation2 + $0x270] sm:$0xff] %vm927, 0.0
  %1008 = vst.msk [vmem:[#allocation2 + $0x278] sm:$0x1] %vm929, 0.0
  %1009 = vst.msk [vmem:[#allocation2 + $0x280] sm:$0xff] %vm927, 0.0
  %1010 = vst.msk [vmem:[#allocation2 + $0x288] sm:$0x1] %vm929, 0.0
  %1011 = vst.msk [vmem:[#allocation2 + $0x290] sm:$0xff] %vm927, 0.0
  %1012 = vst.msk [vmem:[#allocation2 + $0x298] sm:$0x1] %vm929, 0.0
  %1013 = vst.msk [vmem:[#allocation2 + $0x2a0] sm:$0xff] %vm927, 0.0
  %1014 = vst.msk [vmem:[#allocation2 + $0x2a8] sm:$0x1] %vm929, 0.0
  %1015 = vst.msk [vmem:[#allocation2 + $0x2b0] sm:$0xff] %vm927, 0.0
  %1016 = vst.msk [vmem:[#allocation2 + $0x2b8] sm:$0x1] %vm929, 0.0
  %1017 = vst.msk [vmem:[#allocation2 + $0x2c0] sm:$0xff] %vm927, 0.0
  %1018 = vst.msk [vmem:[#allocation2 + $0x2c8] sm:$0x1] %vm929, 0.0
  %1019 = vst.msk [vmem:[#allocation2 + $0x2d0] sm:$0xff] %vm927, 0.0
  %1020 = vst.msk [vmem:[#allocation2 + $0x2d8] sm:$0x1] %vm929, 0.0
  %1021 = vst.msk [vmem:[#allocation2 + $0x2e0] sm:$0xff] %vm927, 0.0
  %1022 = vst.msk [vmem:[#allocation2 + $0x2e8] sm:$0x1] %vm929, 0.0
  %1023 = vst.msk [vmem:[#allocation2 + $0x2f0] sm:$0xff] %vm927, 0.0
  %1024 = vst.msk [vmem:[#allocation2 + $0x2f8] sm:$0x1] %vm929, 0.0
  %1025 = vst.msk [vmem:[#allocation2 + $0x300] sm:$0xff] %vm927, 0.0
  %1026 = vst.msk [vmem:[#allocation2 + $0x308] sm:$0x1] %vm929, 0.0
  %1027 = vst.msk [vmem:[#allocation2 + $0x310] sm:$0xff] %vm927, 0.0
  %1028 = vst.msk [vmem:[#allocation2 + $0x318] sm:$0x1] %vm929, 0.0
  %1029 = vst.msk [vmem:[#allocation2 + $0x320] sm:$0xff] %vm927, 0.0
  %1030 = vst.msk [vmem:[#allocation2 + $0x328] sm:$0x1] %vm929, 0.0
  %1031 = vst.msk [vmem:[#allocation2 + $0x330] sm:$0xff] %vm927, 0.0
  %1032 = vst.msk [vmem:[#allocation2 + $0x338] sm:$0x1] %vm929, 0.0
  %1033 = vst.msk [vmem:[#allocation2 + $0x340] sm:$0xff] %vm927, 0.0
  %1034 = vst.msk [vmem:[#allocation2 + $0x348] sm:$0x1] %vm929, 0.0
  %1035 = vst.msk [vmem:[#allocation2 + $0x350] sm:$0xff] %vm927, 0.0
  %1036 = vst.msk [vmem:[#allocation2 + $0x358] sm:$0x1] %vm929, 0.0
  %1037 = vst.msk [vmem:[#allocation2 + $0x360] sm:$0xff] %vm927, 0.0
  %1038 = vst.msk [vmem:[#allocation2 + $0x368] sm:$0x1] %vm929, 0.0
  %1039 = vst.msk [vmem:[#allocation2 + $0x370] sm:$0xff] %vm927, 0.0
  %1040 = vst.msk [vmem:[#allocation2 + $0x378] sm:$0x1] %vm929, 0.0
  %1041 = vst.msk [vmem:[#allocation2 + $0x380] sm:$0xff] %vm927, 0.0
  %1042 = vst.msk [vmem:[#allocation2 + $0x388] sm:$0x1] %vm929, 0.0
  %1043 = vst.msk [vmem:[#allocation2 + $0x390] sm:$0xff] %vm927, 0.0
  %1044 = vst.msk [vmem:[#allocation2 + $0x398] sm:$0x1] %vm929, 0.0
  %1045 = vst.msk [vmem:[#allocation2 + $0x3a0] sm:$0xff] %vm927, 0.0
  %1046 = vst.msk [vmem:[#allocation2 + $0x3a8] sm:$0x1] %vm929, 0.0
  %1047 = vst.msk [vmem:[#allocation2 + $0x3b0] sm:$0xff] %vm927, 0.0
  %1048 = vst.msk [vmem:[#allocation2 + $0x3b8] sm:$0x1] %vm929, 0.0
  %1049 = vst.msk [vmem:[#allocation2 + $0x3c0] sm:$0xff] %vm927, 0.0
  %1050 = vst.msk [vmem:[#allocation2 + $0x3c8] sm:$0x1] %vm929, 0.0
  %1051 = vst.msk [vmem:[#allocation2 + $0x3d0] sm:$0xff] %vm927, 0.0
  %1052 = vst.msk [vmem:[#allocation2 + $0x3d8] sm:$0x1] %vm929, 0.0
  %1053 = vst.msk [vmem:[#allocation2 + $0x3e0] sm:$0xff] %vm927, 0.0
  %1054 = vst.msk [vmem:[#allocation2 + $0x3e8] sm:$0x1] %vm929, 0.0
  %1055 = vst.msk [vmem:[#allocation2 + $0x3f0] sm:$0xff] %vm927, 0.0
  %1056 = vst.msk [vmem:[#allocation2 + $0x3f8] sm:$0x1] %vm929, 0.0
  %1057 = vst.msk [vmem:[#allocation2 + $0x400] sm:$0xff] %vm927, 0.0
  %1058 = vst.msk [vmem:[#allocation2 + $0x408] sm:$0x1] %vm929, 0.0
  %1059 = vst.msk [vmem:[#allocation2 + $0x410] sm:$0xff] %vm927, 0.0
  %1060 = vst.msk [vmem:[#allocation2 + $0x418] sm:$0x1] %vm929, 0.0
  %1061 = vst.msk [vmem:[#allocation2 + $0x420] sm:$0xff] %vm927, 0.0
  %1062 = vst.msk [vmem:[#allocation2 + $0x428] sm:$0x1] %vm929, 0.0
  %1063 = vst.msk [vmem:[#allocation2 + $0x430] sm:$0xff] %vm927, 0.0
  %1064 = vst.msk [vmem:[#allocation2 + $0x438] sm:$0x1] %vm929, 0.0
  %1065 = vst.msk [vmem:[#allocation2 + $0x440] sm:$0xff] %vm927, 0.0
  %1066 = vst.msk [vmem:[#allocation2 + $0x448] sm:$0x1] %vm929, 0.0
  %1067 = vst.msk [vmem:[#allocation2 + $0x450] sm:$0xff] %vm927, 0.0
  %1068 = vst.msk [vmem:[#allocation2 + $0x458] sm:$0x1] %vm929, 0.0
  %1069 = vst.msk [vmem:[#allocation2 + $0x460] sm:$0xff] %vm927, 0.0
  %1070 = vst.msk [vmem:[#allocation2 + $0x468] sm:$0x1] %vm929, 0.0
  %1071 = vst.msk [vmem:[#allocation2 + $0x470] sm:$0xff] %vm927, 0.0
  %1072 = vst.msk [vmem:[#allocation2 + $0x478] sm:$0x1] %vm929, 0.0
  %1073 = vst.msk [vmem:[#allocation2] sm:$0xff] %vm927, %v911
  %1074 = vst.msk [vmem:[#allocation2 + $0x10] sm:$0xff] %vm927, %v912
  %1075 = vst.msk [vmem:[#allocation2 + $0x20] sm:$0xff] %vm927, %v913
  %1076 = vst.msk [vmem:[#allocation2 + $0x30] sm:$0xff] %vm927, %v914
  %1077 = vst.msk [vmem:[#allocation2 + $0x40] sm:$0xff] %vm927, %v915
  %1078 = vst.msk [vmem:[#allocation2 + $0x50] sm:$0xff] %vm927, %v916
  %1079 = vst.msk [vmem:[#allocation2 + $0x60] sm:$0xff] %vm927, %v917
  %1080 = vst.msk [vmem:[#allocation2 + $0x70] sm:$0xff] %vm927, %v918
  %1081 = vst.msk [vmem:[#allocation2 + $0x90] sm:$0xff] %vm927, %v919
  %1082 = vst.msk [vmem:[#allocation2 + $0xa0] sm:$0xff] %vm927, %v920
  %1083 = vst.msk [vmem:[#allocation2 + $0xb0] sm:$0xff] %vm927, %v921
  %1084 = vst.msk [vmem:[#allocation2 + $0xc0] sm:$0xff] %vm927, %v922
  %1085 = vst.msk [vmem:[#allocation2 + $0xd0] sm:$0xff] %vm927, %v923
  %1086 = vst.msk [vmem:[#allocation2 + $0xe0] sm:$0xff] %vm927, %v924
  %1087 = vst.msk [vmem:[#allocation2 + $0xf0] sm:$0xff] %vm927, %v925
  %1088 = vst.msk [vmem:[#allocation2 + $0x100] sm:$0xff] %vm927, %v926
  %1105 = vrot.lane.b32.xlu0 %v911, 120
  %v1106 = vpop.permute.xlu0 %1105
  %1107 = vrot.lane.b32.xlu0 %v912, 120
  %v1108 = vpop.permute.xlu0 %1107
  %1109 = vrot.lane.b32.xlu0 %v913, 120
  %v1110 = vpop.permute.xlu0 %1109
  %1111 = vrot.lane.b32.xlu0 %v914, 120
  %v1112 = vpop.permute.xlu0 %1111
  %1113 = vrot.lane.b32.xlu0 %v915, 120
  %v1114 = vpop.permute.xlu0 %1113
  %1115 = vrot.lane.b32.xlu0 %v916, 120
  %v1116 = vpop.permute.xlu0 %1115
  %1117 = vrot.lane.b32.xlu0 %v917, 120
  %v1118 = vpop.permute.xlu0 %1117
  %1119 = vrot.lane.b32.xlu0 %v918, 120
  %v1120 = vpop.permute.xlu0 %1119
  %1121 = vrot.lane.b32.xlu0 %v919, 120
  %v1122 = vpop.permute.xlu0 %1121
  %1123 = vrot.lane.b32.xlu0 %v920, 120
  %v1124 = vpop.permute.xlu0 %1123
  %1125 = vrot.lane.b32.xlu0 %v921, 120
  %v1126 = vpop.permute.xlu0 %1125
  %1127 = vrot.lane.b32.xlu0 %v922, 120
  %v1128 = vpop.permute.xlu0 %1127
  %1129 = vrot.lane.b32.xlu0 %v923, 120
  %v1130 = vpop.permute.xlu0 %1129
  %1131 = vrot.lane.b32.xlu0 %v924, 120
  %v1132 = vpop.permute.xlu0 %1131
  %1133 = vrot.lane.b32.xlu0 %v925, 120
  %v1134 = vpop.permute.xlu0 %1133
  %1135 = vrot.lane.b32.xlu0 %v926, 120
  %v1136 = vpop.permute.xlu0 %1135
  %s1153 = scalar_lea.vmem [#allocation2], 288
  %1154 = vst.msk [vmem:[%s1153] sm:$0xff] %vm927, %v1106
  %1155 = vst.msk [vmem:[%s1153 + $0x10] sm:$0xff] %vm927, %v1108
  %1156 = vst.msk [vmem:[%s1153 + $0x20] sm:$0xff] %vm927, %v1110
  %1157 = vst.msk [vmem:[%s1153 + $0x30] sm:$0xff] %vm927, %v1112
  %1158 = vst.msk [vmem:[%s1153 + $0x40] sm:$0xff] %vm927, %v1114
  %1159 = vst.msk [vmem:[%s1153 + $0x50] sm:$0xff] %vm927, %v1116
  %1160 = vst.msk [vmem:[%s1153 + $0x60] sm:$0xff] %vm927, %v1118
  %1161 = vst.msk [vmem:[%s1153 + $0x70] sm:$0xff] %vm927, %v1120
  %1162 = vst.msk [vmem:[%s1153 + $0x90] sm:$0xff] %vm927, %v1122
  %1163 = vst.msk [vmem:[%s1153 + $0xa0] sm:$0xff] %vm927, %v1124
  %1164 = vst.msk [vmem:[%s1153 + $0xb0] sm:$0xff] %vm927, %v1126
  %1165 = vst.msk [vmem:[%s1153 + $0xc0] sm:$0xff] %vm927, %v1128
  %1166 = vst.msk [vmem:[%s1153 + $0xd0] sm:$0xff] %vm927, %v1130
  %1167 = vst.msk [vmem:[%s1153 + $0xe0] sm:$0xff] %vm927, %v1132
  %1168 = vst.msk [vmem:[%s1153 + $0xf0] sm:$0xff] %vm927, %v1134
  %1169 = vst.msk [vmem:[%s1153 + $0x100] sm:$0xff] %vm927, %v1136
  %1170 = vrot.lane.b32.xlu0 %v911, 112
  %v1171 = vpop.permute.xlu0 %1170
  %1172 = vrot.lane.b32.xlu0 %v912, 112
  %v1173 = vpop.permute.xlu0 %1172
  %1174 = vrot.lane.b32.xlu0 %v913, 112
  %v1175 = vpop.permute.xlu0 %1174
  %1176 = vrot.lane.b32.xlu0 %v914, 112
  %v1177 = vpop.permute.xlu0 %1176
  %1178 = vrot.lane.b32.xlu0 %v915, 112
  %v1179 = vpop.permute.xlu0 %1178
  %1180 = vrot.lane.b32.xlu0 %v916, 112
  %v1181 = vpop.permute.xlu0 %1180
  %1182 = vrot.lane.b32.xlu0 %v917, 112
  %v1183 = vpop.permute.xlu0 %1182
  %1184 = vrot.lane.b32.xlu0 %v918, 112
  %v1185 = vpop.permute.xlu0 %1184
  %1186 = vrot.lane.b32.xlu0 %v919, 112
  %v1187 = vpop.permute.xlu0 %1186
  %1188 = vrot.lane.b32.xlu0 %v920, 112
  %v1189 = vpop.permute.xlu0 %1188
  %1190 = vrot.lane.b32.xlu0 %v921, 112
  %v1191 = vpop.permute.xlu0 %1190
  %1192 = vrot.lane.b32.xlu0 %v922, 112
  %v1193 = vpop.permute.xlu0 %1192
  %1194 = vrot.lane.b32.xlu0 %v923, 112
  %v1195 = vpop.permute.xlu0 %1194
  %1196 = vrot.lane.b32.xlu0 %v924, 112
  %v1197 = vpop.permute.xlu0 %1196
  %1198 = vrot.lane.b32.xlu0 %v925, 112
  %v1199 = vpop.permute.xlu0 %1198
  %1200 = vrot.lane.b32.xlu0 %v926, 112
  %v1201 = vpop.permute.xlu0 %1200
  %s1218 = scalar_lea.vmem [#allocation2], 576
  %1219 = vst.msk [vmem:[%s1218] sm:$0xff] %vm927, %v1171
  %1220 = vst.msk [vmem:[%s1218 + $0x10] sm:$0xff] %vm927, %v1173
  %1221 = vst.msk [vmem:[%s1218 + $0x20] sm:$0xff] %vm927, %v1175
  %1222 = vst.msk [vmem:[%s1218 + $0x30] sm:$0xff] %vm927, %v1177
  %1223 = vst.msk [vmem:[%s1218 + $0x40] sm:$0xff] %vm927, %v1179
  %1224 = vst.msk [vmem:[%s1218 + $0x50] sm:$0xff] %vm927, %v1181
  %1225 = vst.msk [vmem:[%s1218 + $0x60] sm:$0xff] %vm927, %v1183
  %1226 = vst.msk [vmem:[%s1218 + $0x70] sm:$0xff] %vm927, %v1185
  %1227 = vst.msk [vmem:[%s1218 + $0x90] sm:$0xff] %vm927, %v1187
  %1228 = vst.msk [vmem:[%s1218 + $0xa0] sm:$0xff] %vm927, %v1189
  %1229 = vst.msk [vmem:[%s1218 + $0xb0] sm:$0xff] %vm927, %v1191
  %1230 = vst.msk [vmem:[%s1218 + $0xc0] sm:$0xff] %vm927, %v1193
  %1231 = vst.msk [vmem:[%s1218 + $0xd0] sm:$0xff] %vm927, %v1195
  %1232 = vst.msk [vmem:[%s1218 + $0xe0] sm:$0xff] %vm927, %v1197
  %1233 = vst.msk [vmem:[%s1218 + $0xf0] sm:$0xff] %vm927, %v1199
  %1234 = vst.msk [vmem:[%s1218 + $0x100] sm:$0xff] %vm927, %v1201
  %1235 = vrot.lane.b32.xlu0 %v911, 104
  %v1236 = vpop.permute.xlu0 %1235
  %1237 = vrot.lane.b32.xlu0 %v912, 104
  %v1238 = vpop.permute.xlu0 %1237
  %1239 = vrot.lane.b32.xlu0 %v913, 104
  %v1240 = vpop.permute.xlu0 %1239
  %1241 = vrot.lane.b32.xlu0 %v914, 104
  %v1242 = vpop.permute.xlu0 %1241
  %1243 = vrot.lane.b32.xlu0 %v915, 104
  %v1244 = vpop.permute.xlu0 %1243
  %1245 = vrot.lane.b32.xlu0 %v916, 104
  %v1246 = vpop.permute.xlu0 %1245
  %1247 = vrot.lane.b32.xlu0 %v917, 104
  %v1248 = vpop.permute.xlu0 %1247
  %1249 = vrot.lane.b32.xlu0 %v918, 104
  %v1250 = vpop.permute.xlu0 %1249
  %1251 = vrot.lane.b32.xlu0 %v919, 104
  %v1252 = vpop.permute.xlu0 %1251
  %1253 = vrot.lane.b32.xlu0 %v920, 104
  %v1254 = vpop.permute.xlu0 %1253
  %1255 = vrot.lane.b32.xlu0 %v921, 104
  %v1256 = vpop.permute.xlu0 %1255
  %1257 = vrot.lane.b32.xlu0 %v922, 104
  %v1258 = vpop.permute.xlu0 %1257
  %1259 = vrot.lane.b32.xlu0 %v923, 104
  %v1260 = vpop.permute.xlu0 %1259
  %1261 = vrot.lane.b32.xlu0 %v924, 104
  %v1262 = vpop.permute.xlu0 %1261
  %1263 = vrot.lane.b32.xlu0 %v925, 104
  %v1264 = vpop.permute.xlu0 %1263
  %1265 = vrot.lane.b32.xlu0 %v926, 104
  %v1266 = vpop.permute.xlu0 %1265
  %s1283 = scalar_lea.vmem [#allocation2], 864
  %1284 = vst.msk [vmem:[%s1283] sm:$0xff] %vm927, %v1236
  %1285 = vst.msk [vmem:[%s1283 + $0x10] sm:$0xff] %vm927, %v1238
  %1286 = vst.msk [vmem:[%s1283 + $0x20] sm:$0xff] %vm927, %v1240
  %1287 = vst.msk [vmem:[%s1283 + $0x30] sm:$0xff] %vm927, %v1242
  %1288 = vst.msk [vmem:[%s1283 + $0x40] sm:$0xff] %vm927, %v1244
  %1289 = vst.msk [vmem:[%s1283 + $0x50] sm:$0xff] %vm927, %v1246
  %1290 = vst.msk [vmem:[%s1283 + $0x60] sm:$0xff] %vm927, %v1248
  %1291 = vst.msk [vmem:[%s1283 + $0x70] sm:$0xff] %vm927, %v1250
  %1292 = vst.msk [vmem:[%s1283 + $0x90] sm:$0xff] %vm927, %v1252
  %1293 = vst.msk [vmem:[%s1283 + $0xa0] sm:$0xff] %vm927, %v1254
  %1294 = vst.msk [vmem:[%s1283 + $0xb0] sm:$0xff] %vm927, %v1256
  %1295 = vst.msk [vmem:[%s1283 + $0xc0] sm:$0xff] %vm927, %v1258
  %1296 = vst.msk [vmem:[%s1283 + $0xd0] sm:$0xff] %vm927, %v1260
  %1297 = vst.msk [vmem:[%s1283 + $0xe0] sm:$0xff] %vm927, %v1262
  %1298 = vst.msk [vmem:[%s1283 + $0xf0] sm:$0xff] %vm927, %v1264
  %1299 = vst.msk [vmem:[%s1283 + $0x100] sm:$0xff] %vm927, %v1266
  %v1300 = vld [vmem:[%s5] sm:$0xff]
  %v1301 = vld [vmem:[%s5 + $0x8] sm:$0xff]
  %v1302 = vld [vmem:[%s5 + $0x10] sm:$0xff]
  %v1303 = vld [vmem:[%s5 + $0x18] sm:$0xff]
  %v1304 = vld [vmem:[%s6] sm:$0x1]
  %v1305 = vld [vmem:[#allocation2] sm:$0xff]
  %v1306 = vld [vmem:[#allocation2 + $0x10] sm:$0xff]
  %v1307 = vld [vmem:[#allocation2 + $0x20] sm:$0xff]
  %v1308 = vld [vmem:[#allocation2 + $0x30] sm:$0xff]
  %v1309 = vld [vmem:[#allocation2 + $0x40] sm:$0xff]
  %v1310 = vld [vmem:[#allocation2 + $0x50] sm:$0xff]
  %v1311 = vld [vmem:[#allocation2 + $0x60] sm:$0xff]
  %v1312 = vld [vmem:[#allocation2 + $0x70] sm:$0xff]
  %v1313 = vld [vmem:[#allocation2 + $0x90] sm:$0xff]
  %v1314 = vld [vmem:[#allocation2 + $0xa0] sm:$0xff]
  %v1315 = vld [vmem:[#allocation2 + $0xb0] sm:$0xff]
  %v1316 = vld [vmem:[#allocation2 + $0xc0] sm:$0xff]
  %v1317 = vld [vmem:[#allocation2 + $0xd0] sm:$0xff]
  %v1318 = vld [vmem:[#allocation2 + $0xe0] sm:$0xff]
  %v1319 = vld [vmem:[#allocation2 + $0xf0] sm:$0xff]
  %v1320 = vld [vmem:[#allocation2 + $0x100] sm:$0xff]
  %v1321 = vld [vmem:[%s1153] sm:$0xff]
  %v1322 = vld [vmem:[%s1153 + $0x10] sm:$0xff]
  %v1323 = vld [vmem:[%s1153 + $0x20] sm:$0xff]
  %v1324 = vld [vmem:[%s1153 + $0x30] sm:$0xff]
  %v1325 = vld [vmem:[%s1153 + $0x40] sm:$0xff]
  %v1326 = vld [vmem:[%s1153 + $0x50] sm:$0xff]
  %v1327 = vld [vmem:[%s1153 + $0x60] sm:$0xff]
  %v1328 = vld [vmem:[%s1153 + $0x70] sm:$0xff]
  %v1329 = vld [vmem:[%s1153 + $0x90] sm:$0xff]
  %v1330 = vld [vmem:[%s1153 + $0xa0] sm:$0xff]
  %v1331 = vld [vmem:[%s1153 + $0xb0] sm:$0xff]
  %v1332 = vld [vmem:[%s1153 + $0xc0] sm:$0xff]
  %v1333 = vld [vmem:[%s1153 + $0xd0] sm:$0xff]
  %v1334 = vld [vmem:[%s1153 + $0xe0] sm:$0xff]
  %v1335 = vld [vmem:[%s1153 + $0xf0] sm:$0xff]
  %v1336 = vld [vmem:[%s1153 + $0x100] sm:$0xff]
  %v1338 = vsel %vm927, %v1321, 0
  %v1341 = vsel %vm927, %v1322, 0
  %v1344 = vsel %vm927, %v1323, 0
  %v1347 = vsel %vm927, %v1324, 0
  %v1350 = vsel %vm927, %v1325, 0
  %v1353 = vsel %vm927, %v1326, 0
  %v1356 = vsel %vm927, %v1327, 0
  %v1359 = vsel %vm927, %v1328, 0
  %v1362 = vsel %vm927, %v1329, 0
  %v1365 = vsel %vm927, %v1330, 0
  %v1368 = vsel %vm927, %v1331, 0
  %v1371 = vsel %vm927, %v1332, 0
  %v1374 = vsel %vm927, %v1333, 0
  %v1377 = vsel %vm927, %v1334, 0
  %v1380 = vsel %vm927, %v1335, 0
  %v1383 = vsel %vm927, %v1336, 0
  %1385 = vmatpush.msra.mxu0 0.0
  %1386 = vmatpush.msra.mxu0 0.0
  %1387 = vmatpush.msra.mxu0 0.0
  %1388 = vmatpush.msra.mxu0 0.0
  %1389 = vmatpush.msra.mxu0 0.0
  %1390 = vmatpush.msra.mxu0 0.0
  %1391 = vmatpush.msra.mxu0 0.0
  %1392 = vmatpush.msra.mxu0 0.0
  %1393 = vmatpush.msra.mxu0 0.0
  %1394 = vmatpush.msra.mxu0 0.0
  %1395 = vmatpush.msra.mxu0 0.0
  %1396 = vmatpush.msra.mxu0 0.0
  %1397 = vmatpush.msra.mxu0 0.0
  %1398 = vmatpush.msra.mxu0 0.0
  %1399 = vmatpush.msra.mxu0 0.0
  %1400 = vmatpush.msra.mxu0 %v1301
  %1401 = vmatmul.f32.gmra.mxu0 %v1338
  %v1402 = vpop.f32.mrf.mxu0
  %v1403 = vadd.f32 0.0, %v1402
  %1404 = vmatmul.f32.gmra.mxu0 %v1341
  %v1405 = vpop.f32.mrf.mxu0
  %v1406 = vadd.f32 0.0, %v1405
  %1407 = vmatmul.f32.gmra.mxu0 %v1344
  %v1408 = vpop.f32.mrf.mxu0
  %v1409 = vadd.f32 0.0, %v1408
  %1410 = vmatmul.f32.gmra.mxu0 %v1347
  %v1411 = vpop.f32.mrf.mxu0
  %v1412 = vadd.f32 0.0, %v1411
  %1413 = vmatmul.f32.gmra.mxu0 %v1350
  %v1414 = vpop.f32.mrf.mxu0
  %v1415 = vadd.f32 0.0, %v1414
  %1416 = vmatmul.f32.gmra.mxu0 %v1353
  %v1417 = vpop.f32.mrf.mxu0
  %v1418 = vadd.f32 0.0, %v1417
  %1419 = vmatmul.f32.gmra.mxu0 %v1356
  %v1420 = vpop.f32.mrf.mxu0
  %v1421 = vadd.f32 0.0, %v1420
  %1422 = vmatmul.f32.gmra.mxu0 %v1359
  %v1423 = vpop.f32.mrf.mxu0
  %v1424 = vadd.f32 0.0, %v1423
  %1425 = vmatmul.f32.gmra.mxu0 %v1362
  %v1426 = vpop.f32.mrf.mxu0
  %v1427 = vadd.f32 0.0, %v1426
  %1428 = vmatmul.f32.gmra.mxu0 %v1365
  %v1429 = vpop.f32.mrf.mxu0
  %v1430 = vadd.f32 0.0, %v1429
  %1431 = vmatmul.f32.gmra.mxu0 %v1368
  %v1432 = vpop.f32.mrf.mxu0
  %v1433 = vadd.f32 0.0, %v1432
  %1434 = vmatmul.f32.gmra.mxu0 %v1371
  %v1435 = vpop.f32.mrf.mxu0
  %v1436 = vadd.f32 0.0, %v1435
  %1437 = vmatmul.f32.gmra.mxu0 %v1374
  %v1438 = vpop.f32.mrf.mxu0
  %v1439 = vadd.f32 0.0, %v1438
  %1440 = vmatmul.f32.gmra.mxu0 %v1377
  %v1441 = vpop.f32.mrf.mxu0
  %v1442 = vadd.f32 0.0, %v1441
  %1443 = vmatmul.f32.gmra.mxu0 %v1380
  %v1444 = vpop.f32.mrf.mxu0
  %v1445 = vadd.f32 0.0, %v1444
  %1446 = vmatmul.f32.gmra.mxu0 %v1383
  %v1447 = vpop.f32.mrf.mxu0
  %v1448 = vadd.f32 0.0, %v1447
  %1449 = vdwg.mxu0
  %v1451 = vsel %vm927, %v1305, 0
  %v1454 = vsel %vm927, %v1306, 0
  %v1457 = vsel %vm927, %v1307, 0
  %v1460 = vsel %vm927, %v1308, 0
  %v1463 = vsel %vm927, %v1309, 0
  %v1466 = vsel %vm927, %v1310, 0
  %v1469 = vsel %vm927, %v1311, 0
  %v1472 = vsel %vm927, %v1312, 0
  %v1475 = vsel %vm927, %v1313, 0
  %v1478 = vsel %vm927, %v1314, 0
  %v1481 = vsel %vm927, %v1315, 0
  %v1484 = vsel %vm927, %v1316, 0
  %v1487 = vsel %vm927, %v1317, 0
  %v1490 = vsel %vm927, %v1318, 0
  %v1493 = vsel %vm927, %v1319, 0
  %v1496 = vsel %vm927, %v1320, 0
  %1498 = vmatpush.msra.mxu0 0.0
  %1499 = vmatpush.msra.mxu0 0.0
  %1500 = vmatpush.msra.mxu0 0.0
  %1501 = vmatpush.msra.mxu0 0.0
  %1502 = vmatpush.msra.mxu0 0.0
  %1503 = vmatpush.msra.mxu0 0.0
  %1504 = vmatpush.msra.mxu0 0.0
  %1505 = vmatpush.msra.mxu0 0.0
  %1506 = vmatpush.msra.mxu0 0.0
  %1507 = vmatpush.msra.mxu0 0.0
  %1508 = vmatpush.msra.mxu0 0.0
  %1509 = vmatpush.msra.mxu0 0.0
  %1510 = vmatpush.msra.mxu0 0.0
  %1511 = vmatpush.msra.mxu0 0.0
  %1512 = vmatpush.msra.mxu0 0.0
  %1513 = vmatpush.msra.mxu0 %v1300
  %1514 = vmatmul.f32.gmra.mxu0 %v1451
  %v1515 = vpop.f32.mrf.mxu0
  %v1516 = vadd.f32 %v1403, %v1515
  %1517 = vmatmul.f32.gmra.mxu0 %v1454
  %v1518 = vpop.f32.mrf.mxu0
  %v1519 = vadd.f32 %v1406, %v1518
  %1520 = vmatmul.f32.gmra.mxu0 %v1457
  %v1521 = vpop.f32.mrf.mxu0
  %v1522 = vadd.f32 %v1409, %v1521
  %1523 = vmatmul.f32.gmra.mxu0 %v1460
  %v1524 = vpop.f32.mrf.mxu0
  %v1525 = vadd.f32 %v1412, %v1524
  %1526 = vmatmul.f32.gmra.mxu0 %v1463
  %v1527 = vpop.f32.mrf.mxu0
  %v1528 = vadd.f32 %v1415, %v1527
  %1529 = vmatmul.f32.gmra.mxu0 %v1466
  %v1530 = vpop.f32.mrf.mxu0
  %v1531 = vadd.f32 %v1418, %v1530
  %1532 = vmatmul.f32.gmra.mxu0 %v1469
  %v1533 = vpop.f32.mrf.mxu0
  %v1534 = vadd.f32 %v1421, %v1533
  %1535 = vmatmul.f32.gmra.mxu0 %v1472
  %v1536 = vpop.f32.mrf.mxu0
  %v1537 = vadd.f32 %v1424, %v1536
  %1538 = vmatmul.f32.gmra.mxu0 %v1475
  %v1539 = vpop.f32.mrf.mxu0
  %v1540 = vadd.f32 %v1427, %v1539
  %1541 = vmatmul.f32.gmra.mxu0 %v1478
  %v1542 = vpop.f32.mrf.mxu0
  %v1543 = vadd.f32 %v1430, %v1542
  %1544 = vmatmul.f32.gmra.mxu0 %v1481
  %v1545 = vpop.f32.mrf.mxu0
  %v1546 = vadd.f32 %v1433, %v1545
  %1547 = vmatmul.f32.gmra.mxu0 %v1484
  %v1548 = vpop.f32.mrf.mxu0
  %v1549 = vadd.f32 %v1436, %v1548
  %1550 = vmatmul.f32.gmra.mxu0 %v1487
  %v1551 = vpop.f32.mrf.mxu0
  %v1552 = vadd.f32 %v1439, %v1551
  %1553 = vmatmul.f32.gmra.mxu0 %v1490
  %v1554 = vpop.f32.mrf.mxu0
  %v1555 = vadd.f32 %v1442, %v1554
  %1556 = vmatmul.f32.gmra.mxu0 %v1493
  %v1557 = vpop.f32.mrf.mxu0
  %v1558 = vadd.f32 %v1445, %v1557
  %1559 = vmatmul.f32.gmra.mxu0 %v1496
  %v1560 = vpop.f32.mrf.mxu0
  %v1561 = vadd.f32 %v1448, %v1560
  %1562 = vdwg.mxu0
  %v1563 = vld [vmem:[%s1218] sm:$0xff]
  %v1564 = vld [vmem:[%s1218 + $0x10] sm:$0xff]
  %v1565 = vld [vmem:[%s1218 + $0x20] sm:$0xff]
  %v1566 = vld [vmem:[%s1218 + $0x30] sm:$0xff]
  %v1567 = vld [vmem:[%s1218 + $0x40] sm:$0xff]
  %v1568 = vld [vmem:[%s1218 + $0x50] sm:$0xff]
  %v1569 = vld [vmem:[%s1218 + $0x60] sm:$0xff]
  %v1570 = vld [vmem:[%s1218 + $0x70] sm:$0xff]
  %v1571 = vld [vmem:[%s1218 + $0x90] sm:$0xff]
  %v1572 = vld [vmem:[%s1218 + $0xa0] sm:$0xff]
  %v1573 = vld [vmem:[%s1218 + $0xb0] sm:$0xff]
  %v1574 = vld [vmem:[%s1218 + $0xc0] sm:$0xff]
  %v1575 = vld [vmem:[%s1218 + $0xd0] sm:$0xff]
  %v1576 = vld [vmem:[%s1218 + $0xe0] sm:$0xff]
  %v1577 = vld [vmem:[%s1218 + $0xf0] sm:$0xff]
  %v1578 = vld [vmem:[%s1218 + $0x100] sm:$0xff]
  %v1580 = vsel %vm927, %v1563, 0
  %v1583 = vsel %vm927, %v1564, 0
  %v1586 = vsel %vm927, %v1565, 0
  %v1589 = vsel %vm927, %v1566, 0
  %v1592 = vsel %vm927, %v1567, 0
  %v1595 = vsel %vm927, %v1568, 0
  %v1598 = vsel %vm927, %v1569, 0
  %v1601 = vsel %vm927, %v1570, 0
  %v1604 = vsel %vm927, %v1571, 0
  %v1607 = vsel %vm927, %v1572, 0
  %v1610 = vsel %vm927, %v1573, 0
  %v1613 = vsel %vm927, %v1574, 0
  %v1616 = vsel %vm927, %v1575, 0
  %v1619 = vsel %vm927, %v1576, 0
  %v1622 = vsel %vm927, %v1577, 0
  %v1625 = vsel %vm927, %v1578, 0
  %1627 = vmatpush.msra.mxu0 0.0
  %1628 = vmatpush.msra.mxu0 0.0
  %1629 = vmatpush.msra.mxu0 0.0
  %1630 = vmatpush.msra.mxu0 0.0
  %1631 = vmatpush.msra.mxu0 0.0
  %1632 = vmatpush.msra.mxu0 0.0
  %1633 = vmatpush.msra.mxu0 0.0
  %1634 = vmatpush.msra.mxu0 0.0
  %1635 = vmatpush.msra.mxu0 0.0
  %1636 = vmatpush.msra.mxu0 0.0
  %1637 = vmatpush.msra.mxu0 0.0
  %1638 = vmatpush.msra.mxu0 0.0
  %1639 = vmatpush.msra.mxu0 0.0
  %1640 = vmatpush.msra.mxu0 0.0
  %1641 = vmatpush.msra.mxu0 0.0
  %1642 = vmatpush.msra.mxu0 %v1302
  %1643 = vmatmul.f32.gmra.mxu0 %v1580
  %v1644 = vpop.f32.mrf.mxu0
  %v1645 = vadd.f32 0.0, %v1644
  %1646 = vmatmul.f32.gmra.mxu0 %v1583
  %v1647 = vpop.f32.mrf.mxu0
  %v1648 = vadd.f32 0.0, %v1647
  %1649 = vmatmul.f32.gmra.mxu0 %v1586
  %v1650 = vpop.f32.mrf.mxu0
  %v1651 = vadd.f32 0.0, %v1650
  %1652 = vmatmul.f32.gmra.mxu0 %v1589
  %v1653 = vpop.f32.mrf.mxu0
  %v1654 = vadd.f32 0.0, %v1653
  %1655 = vmatmul.f32.gmra.mxu0 %v1592
  %v1656 = vpop.f32.mrf.mxu0
  %v1657 = vadd.f32 0.0, %v1656
  %1658 = vmatmul.f32.gmra.mxu0 %v1595
  %v1659 = vpop.f32.mrf.mxu0
  %v1660 = vadd.f32 0.0, %v1659
  %1661 = vmatmul.f32.gmra.mxu0 %v1598
  %v1662 = vpop.f32.mrf.mxu0
  %v1663 = vadd.f32 0.0, %v1662
  %1664 = vmatmul.f32.gmra.mxu0 %v1601
  %v1665 = vpop.f32.mrf.mxu0
  %v1666 = vadd.f32 0.0, %v1665
  %1667 = vmatmul.f32.gmra.mxu0 %v1604
  %v1668 = vpop.f32.mrf.mxu0
  %v1669 = vadd.f32 0.0, %v1668
  %1670 = vmatmul.f32.gmra.mxu0 %v1607
  %v1671 = vpop.f32.mrf.mxu0
  %v1672 = vadd.f32 0.0, %v1671
  %1673 = vmatmul.f32.gmra.mxu0 %v1610
  %v1674 = vpop.f32.mrf.mxu0
  %v1675 = vadd.f32 0.0, %v1674
  %1676 = vmatmul.f32.gmra.mxu0 %v1613
  %v1677 = vpop.f32.mrf.mxu0
  %v1678 = vadd.f32 0.0, %v1677
  %1679 = vmatmul.f32.gmra.mxu0 %v1616
  %v1680 = vpop.f32.mrf.mxu0
  %v1681 = vadd.f32 0.0, %v1680
  %1682 = vmatmul.f32.gmra.mxu0 %v1619
  %v1683 = vpop.f32.mrf.mxu0
  %v1684 = vadd.f32 0.0, %v1683
  %1685 = vmatmul.f32.gmra.mxu0 %v1622
  %v1686 = vpop.f32.mrf.mxu0
  %v1687 = vadd.f32 0.0, %v1686
  %1688 = vmatmul.f32.gmra.mxu0 %v1625
  %v1689 = vpop.f32.mrf.mxu0
  %v1690 = vadd.f32 0.0, %v1689
  %1691 = vdwg.mxu0
  %v1692 = vadd.f32 %v1516, %v1645
  %v1693 = vadd.f32 %v1519, %v1648
  %v1694 = vadd.f32 %v1522, %v1651
  %v1695 = vadd.f32 %v1525, %v1654
  %v1696 = vadd.f32 %v1528, %v1657
  %v1697 = vadd.f32 %v1531, %v1660
  %v1698 = vadd.f32 %v1534, %v1663
  %v1699 = vadd.f32 %v1537, %v1666
  %v1700 = vadd.f32 %v1540, %v1669
  %v1701 = vadd.f32 %v1543, %v1672
  %v1702 = vadd.f32 %v1546, %v1675
  %v1703 = vadd.f32 %v1549, %v1678
  %v1704 = vadd.f32 %v1552, %v1681
  %v1705 = vadd.f32 %v1555, %v1684
  %v1706 = vadd.f32 %v1558, %v1687
  %v1707 = vadd.f32 %v1561, %v1690
  %v1708 = vld [vmem:[%s1283] sm:$0xff]
  %v1709 = vld [vmem:[%s1283 + $0x10] sm:$0xff]
  %v1710 = vld [vmem:[%s1283 + $0x20] sm:$0xff]
  %v1711 = vld [vmem:[%s1283 + $0x30] sm:$0xff]
  %v1712 = vld [vmem:[%s1283 + $0x40] sm:$0xff]
  %v1713 = vld [vmem:[%s1283 + $0x50] sm:$0xff]
  %v1714 = vld [vmem:[%s1283 + $0x60] sm:$0xff]
  %v1715 = vld [vmem:[%s1283 + $0x70] sm:$0xff]
  %v1716 = vld [vmem:[%s1283 + $0x90] sm:$0xff]
  %v1717 = vld [vmem:[%s1283 + $0xa0] sm:$0xff]
  %v1718 = vld [vmem:[%s1283 + $0xb0] sm:$0xff]
  %v1719 = vld [vmem:[%s1283 + $0xc0] sm:$0xff]
  %v1720 = vld [vmem:[%s1283 + $0xd0] sm:$0xff]
  %v1721 = vld [vmem:[%s1283 + $0xe0] sm:$0xff]
  %v1722 = vld [vmem:[%s1283 + $0xf0] sm:$0xff]
  %v1723 = vld [vmem:[%s1283 + $0x100] sm:$0xff]
  %v1725 = vsel %vm927, %v1708, 0
  %v1728 = vsel %vm927, %v1709, 0
  %v1731 = vsel %vm927, %v1710, 0
  %v1734 = vsel %vm927, %v1711, 0
  %v1737 = vsel %vm927, %v1712, 0
  %v1740 = vsel %vm927, %v1713, 0
  %v1743 = vsel %vm927, %v1714, 0
  %v1746 = vsel %vm927, %v1715, 0
  %v1749 = vsel %vm927, %v1716, 0
  %v1752 = vsel %vm927, %v1717, 0
  %v1755 = vsel %vm927, %v1718, 0
  %v1758 = vsel %vm927, %v1719, 0
  %v1761 = vsel %vm927, %v1720, 0
  %v1764 = vsel %vm927, %v1721, 0
  %v1767 = vsel %vm927, %v1722, 0
  %v1770 = vsel %vm927, %v1723, 0
  %1772 = vmatpush.msra.mxu0 0.0
  %1773 = vmatpush.msra.mxu0 0.0
  %1774 = vmatpush.msra.mxu0 0.0
  %1775 = vmatpush.msra.mxu0 0.0
  %1776 = vmatpush.msra.mxu0 0.0
  %1777 = vmatpush.msra.mxu0 0.0
  %1778 = vmatpush.msra.mxu0 0.0
  %1779 = vmatpush.msra.mxu0 0.0
  %1780 = vmatpush.msra.mxu0 0.0
  %1781 = vmatpush.msra.mxu0 0.0
  %1782 = vmatpush.msra.mxu0 0.0
  %1783 = vmatpush.msra.mxu0 0.0
  %1784 = vmatpush.msra.mxu0 0.0
  %1785 = vmatpush.msra.mxu0 0.0
  %1786 = vmatpush.msra.mxu0 0.0
  %1787 = vmatpush.msra.mxu0 %v1303
  %1788 = vmatmul.f32.gmra.mxu0 %v1725
  %v1789 = vpop.f32.mrf.mxu0
  %v1790 = vadd.f32 0.0, %v1789
  %1791 = vmatmul.f32.gmra.mxu0 %v1728
  %v1792 = vpop.f32.mrf.mxu0
  %v1793 = vadd.f32 0.0, %v1792
  %1794 = vmatmul.f32.gmra.mxu0 %v1731
  %v1795 = vpop.f32.mrf.mxu0
  %v1796 = vadd.f32 0.0, %v1795
  %1797 = vmatmul.f32.gmra.mxu0 %v1734
  %v1798 = vpop.f32.mrf.mxu0
  %v1799 = vadd.f32 0.0, %v1798
  %1800 = vmatmul.f32.gmra.mxu0 %v1737
  %v1801 = vpop.f32.mrf.mxu0
  %v1802 = vadd.f32 0.0, %v1801
  %1803 = vmatmul.f32.gmra.mxu0 %v1740
  %v1804 = vpop.f32.mrf.mxu0
  %v1805 = vadd.f32 0.0, %v1804
  %1806 = vmatmul.f32.gmra.mxu0 %v1743
  %v1807 = vpop.f32.mrf.mxu0
  %v1808 = vadd.f32 0.0, %v1807
  %1809 = vmatmul.f32.gmra.mxu0 %v1746
  %v1810 = vpop.f32.mrf.mxu0
  %v1811 = vadd.f32 0.0, %v1810
  %1812 = vmatmul.f32.gmra.mxu0 %v1749
  %v1813 = vpop.f32.mrf.mxu0
  %v1814 = vadd.f32 0.0, %v1813
  %1815 = vmatmul.f32.gmra.mxu0 %v1752
  %v1816 = vpop.f32.mrf.mxu0
  %v1817 = vadd.f32 0.0, %v1816
  %1818 = vmatmul.f32.gmra.mxu0 %v1755
  %v1819 = vpop.f32.mrf.mxu0
  %v1820 = vadd.f32 0.0, %v1819
  %1821 = vmatmul.f32.gmra.mxu0 %v1758
  %v1822 = vpop.f32.mrf.mxu0
  %v1823 = vadd.f32 0.0, %v1822
  %1824 = vmatmul.f32.gmra.mxu0 %v1761
  %v1825 = vpop.f32.mrf.mxu0
  %v1826 = vadd.f32 0.0, %v1825
  %1827 = vmatmul.f32.gmra.mxu0 %v1764
  %v1828 = vpop.f32.mrf.mxu0
  %v1829 = vadd.f32 0.0, %v1828
  %1830 = vmatmul.f32.gmra.mxu0 %v1767
  %v1831 = vpop.f32.mrf.mxu0
  %v1832 = vadd.f32 0.0, %v1831
  %1833 = vmatmul.f32.gmra.mxu0 %v1770
  %v1834 = vpop.f32.mrf.mxu0
  %v1835 = vadd.f32 0.0, %v1834
  %1836 = vdwg.mxu0
  %v1837 = vadd.f32 %v1692, %v1790
  %v1838 = vadd.f32 %v1693, %v1793
  %v1839 = vadd.f32 %v1694, %v1796
  %v1840 = vadd.f32 %v1695, %v1799
  %v1841 = vadd.f32 %v1696, %v1802
  %v1842 = vadd.f32 %v1697, %v1805
  %v1843 = vadd.f32 %v1698, %v1808
  %v1844 = vadd.f32 %v1699, %v1811
  %v1845 = vadd.f32 %v1700, %v1814
  %v1846 = vadd.f32 %v1701, %v1817
  %v1847 = vadd.f32 %v1702, %v1820
  %v1848 = vadd.f32 %v1703, %v1823
  %v1849 = vadd.f32 %v1704, %v1826
  %v1850 = vadd.f32 %v1705, %v1829
  %v1851 = vadd.f32 %v1706, %v1832
  %v1852 = vadd.f32 %v1707, %v1835
  %v1854 = vperm.slane %v1304, 0
  %v1856 = vadd.f32 %v1837, %v1854
  %v1857 = vadd.f32 %v1838, %v1854
  %v1858 = vadd.f32 %v1839, %v1854
  %v1859 = vadd.f32 %v1840, %v1854
  %v1860 = vadd.f32 %v1841, %v1854
  %v1861 = vadd.f32 %v1842, %v1854
  %v1862 = vadd.f32 %v1843, %v1854
  %v1863 = vadd.f32 %v1844, %v1854
  %v1864 = vadd.f32 %v1845, %v1854
  %v1865 = vadd.f32 %v1846, %v1854
  %v1866 = vadd.f32 %v1847, %v1854
  %v1867 = vadd.f32 %v1848, %v1854
  %v1868 = vadd.f32 %v1849, %v1854
  %v1869 = vadd.f32 %v1850, %v1854
  %v1870 = vadd.f32 %v1851, %v1854
  %v1871 = vadd.f32 %v1852, %v1854
  %vm1872 = vcmask 97280
  %1873 = vst.msk [vmem:[%s7] sm:$0xff] %vm1872, %v1856
  %1874 = vst.msk [vmem:[%s7 + $0x8] sm:$0xff] %vm1872, %v1857
  %1875 = vst.msk [vmem:[%s7 + $0x10] sm:$0xff] %vm1872, %v1858
  %1876 = vst.msk [vmem:[%s7 + $0x18] sm:$0xff] %vm1872, %v1859
  %1877 = vst.msk [vmem:[%s7 + $0x20] sm:$0xff] %vm1872, %v1860
  %1878 = vst.msk [vmem:[%s7 + $0x28] sm:$0xff] %vm1872, %v1861
  %1879 = vst.msk [vmem:[%s7 + $0x30] sm:$0xff] %vm1872, %v1862
  %1880 = vst.msk [vmem:[%s7 + $0x38] sm:$0xff] %vm1872, %v1863
  %1881 = vst.msk [vmem:[%s7 + $0x40] sm:$0xff] %vm1872, %v1864
  %1882 = vst.msk [vmem:[%s7 + $0x48] sm:$0xff] %vm1872, %v1865
  %1883 = vst.msk [vmem:[%s7 + $0x50] sm:$0xff] %vm1872, %v1866
  %1884 = vst.msk [vmem:[%s7 + $0x58] sm:$0xff] %vm1872, %v1867
  %1885 = vst.msk [vmem:[%s7 + $0x60] sm:$0xff] %vm1872, %v1868
  %1886 = vst.msk [vmem:[%s7 + $0x68] sm:$0xff] %vm1872, %v1869
  %1887 = vst.msk [vmem:[%s7 + $0x70] sm:$0xff] %vm1872, %v1870
  %1888 = vst.msk [vmem:[%s7 + $0x78] sm:$0xff] %vm1872, %v1871
  %v1889 = vld [vmem:[%s1153] sm:$0xff]
  %v1890 = vld [vmem:[%s1153 + $0x10] sm:$0xff]
  %v1891 = vld [vmem:[%s1153 + $0x20] sm:$0xff]
  %v1892 = vld [vmem:[%s1153 + $0x30] sm:$0xff]
  %v1893 = vld [vmem:[%s1153 + $0x40] sm:$0xff]
  %v1894 = vld [vmem:[%s1153 + $0x50] sm:$0xff]
  %v1895 = vld [vmem:[%s1153 + $0x60] sm:$0xff]
  %v1896 = vld [vmem:[%s1153 + $0x70] sm:$0xff]
  %v1897 = vld [vmem:[%s1153 + $0x90] sm:$0xff]
  %v1898 = vld [vmem:[%s1153 + $0xa0] sm:$0xff]
  %v1899 = vld [vmem:[%s1153 + $0xb0] sm:$0xff]
  %v1900 = vld [vmem:[%s1153 + $0xc0] sm:$0xff]
  %v1901 = vld [vmem:[%s1153 + $0xd0] sm:$0xff]
  %v1902 = vld [vmem:[%s1153 + $0xe0] sm:$0xff]
  %v1903 = vld [vmem:[%s1153 + $0xf0] sm:$0xff]
  %v1904 = vld [vmem:[%s1153 + $0x100] sm:$0xff]
  %v1905 = vld [vmem:[#allocation2 + $0x1] sm:$0xff]
  %v1906 = vld [vmem:[#allocation2 + $0x11] sm:$0xff]
  %v1907 = vld [vmem:[#allocation2 + $0x21] sm:$0xff]
  %v1908 = vld [vmem:[#allocation2 + $0x31] sm:$0xff]
  %v1909 = vld [vmem:[#allocation2 + $0x41] sm:$0xff]
  %v1910 = vld [vmem:[#allocation2 + $0x51] sm:$0xff]
  %v1911 = vld [vmem:[#allocation2 + $0x61] sm:$0xff]
  %v1912 = vld [vmem:[#allocation2 + $0x71] sm:$0xff]
  %v1913 = vld [vmem:[#allocation2 + $0x91] sm:$0xff]
  %v1914 = vld [vmem:[#allocation2 + $0xa1] sm:$0xff]
  %v1915 = vld [vmem:[#allocation2 + $0xb1] sm:$0xff]
  %v1916 = vld [vmem:[#allocation2 + $0xc1] sm:$0xff]
  %v1917 = vld [vmem:[#allocation2 + $0xd1] sm:$0xff]
  %v1918 = vld [vmem:[#allocation2 + $0xe1] sm:$0xff]
  %v1919 = vld [vmem:[#allocation2 + $0xf1] sm:$0xff]
  %v1920 = vld [vmem:[#allocation2 + $0x101] sm:$0xff]
  %v1922 = vsel %vm927, %v1905, 0
  %v1925 = vsel %vm927, %v1906, 0
  %v1928 = vsel %vm927, %v1907, 0
  %v1931 = vsel %vm927, %v1908, 0
  %v1934 = vsel %vm927, %v1909, 0
  %v1937 = vsel %vm927, %v1910, 0
  %v1940 = vsel %vm927, %v1911, 0
  %v1943 = vsel %vm927, %v1912, 0
  %v1946 = vsel %vm927, %v1913, 0
  %v1949 = vsel %vm927, %v1914, 0
  %v1952 = vsel %vm927, %v1915, 0
  %v1955 = vsel %vm927, %v1916, 0
  %v1958 = vsel %vm927, %v1917, 0
  %v1961 = vsel %vm927, %v1918, 0
  %v1964 = vsel %vm927, %v1919, 0
  %v1967 = vsel %vm927, %v1920, 0
  %1969 = vmatpush.msra.mxu0 0.0
  %1970 = vmatpush.msra.mxu0 0.0
  %1971 = vmatpush.msra.mxu0 0.0
  %1972 = vmatpush.msra.mxu0 0.0
  %1973 = vmatpush.msra.mxu0 0.0
  %1974 = vmatpush.msra.mxu0 0.0
  %1975 = vmatpush.msra.mxu0 0.0
  %1976 = vmatpush.msra.mxu0 0.0
  %1977 = vmatpush.msra.mxu0 0.0
  %1978 = vmatpush.msra.mxu0 0.0
  %1979 = vmatpush.msra.mxu0 0.0
  %1980 = vmatpush.msra.mxu0 0.0
  %1981 = vmatpush.msra.mxu0 0.0
  %1982 = vmatpush.msra.mxu0 0.0
  %1983 = vmatpush.msra.mxu0 0.0
  %1984 = vmatpush.msra.mxu0 %v1301
  %1985 = vmatmul.f32.gmra.mxu0 %v1922
  %v1986 = vpop.f32.mrf.mxu0
  %v1987 = vadd.f32 0.0, %v1986
  %1988 = vmatmul.f32.gmra.mxu0 %v1925
  %v1989 = vpop.f32.mrf.mxu0
  %v1990 = vadd.f32 0.0, %v1989
  %1991 = vmatmul.f32.gmra.mxu0 %v1928
  %v1992 = vpop.f32.mrf.mxu0
  %v1993 = vadd.f32 0.0, %v1992
  %1994 = vmatmul.f32.gmra.mxu0 %v1931
  %v1995 = vpop.f32.mrf.mxu0
  %v1996 = vadd.f32 0.0, %v1995
  %1997 = vmatmul.f32.gmra.mxu0 %v1934
  %v1998 = vpop.f32.mrf.mxu0
  %v1999 = vadd.f32 0.0, %v1998
  %2000 = vmatmul.f32.gmra.mxu0 %v1937
  %v2001 = vpop.f32.mrf.mxu0
  %v2002 = vadd.f32 0.0, %v2001
  %2003 = vmatmul.f32.gmra.mxu0 %v1940
  %v2004 = vpop.f32.mrf.mxu0
  %v2005 = vadd.f32 0.0, %v2004
  %2006 = vmatmul.f32.gmra.mxu0 %v1943
  %v2007 = vpop.f32.mrf.mxu0
  %v2008 = vadd.f32 0.0, %v2007
  %2009 = vmatmul.f32.gmra.mxu0 %v1946
  %v2010 = vpop.f32.mrf.mxu0
  %v2011 = vadd.f32 0.0, %v2010
  %2012 = vmatmul.f32.gmra.mxu0 %v1949
  %v2013 = vpop.f32.mrf.mxu0
  %v2014 = vadd.f32 0.0, %v2013
  %2015 = vmatmul.f32.gmra.mxu0 %v1952
  %v2016 = vpop.f32.mrf.mxu0
  %v2017 = vadd.f32 0.0, %v2016
  %2018 = vmatmul.f32.gmra.mxu0 %v1955
  %v2019 = vpop.f32.mrf.mxu0
  %v2020 = vadd.f32 0.0, %v2019
  %2021 = vmatmul.f32.gmra.mxu0 %v1958
  %v2022 = vpop.f32.mrf.mxu0
  %v2023 = vadd.f32 0.0, %v2022
  %2024 = vmatmul.f32.gmra.mxu0 %v1961
  %v2025 = vpop.f32.mrf.mxu0
  %v2026 = vadd.f32 0.0, %v2025
  %2027 = vmatmul.f32.gmra.mxu0 %v1964
  %v2028 = vpop.f32.mrf.mxu0
  %v2029 = vadd.f32 0.0, %v2028
  %2030 = vmatmul.f32.gmra.mxu0 %v1967
  %v2031 = vpop.f32.mrf.mxu0
  %v2032 = vadd.f32 0.0, %v2031
  %2033 = vdwg.mxu0
  %v2035 = vsel %vm927, %v1889, 0
  %v2038 = vsel %vm927, %v1890, 0
  %v2041 = vsel %vm927, %v1891, 0
  %v2044 = vsel %vm927, %v1892, 0
  %v2047 = vsel %vm927, %v1893, 0
  %v2050 = vsel %vm927, %v1894, 0
  %v2053 = vsel %vm927, %v1895, 0
  %v2056 = vsel %vm927, %v1896, 0
  %v2059 = vsel %vm927, %v1897, 0
  %v2062 = vsel %vm927, %v1898, 0
  %v2065 = vsel %vm927, %v1899, 0
  %v2068 = vsel %vm927, %v1900, 0
  %v2071 = vsel %vm927, %v1901, 0
  %v2074 = vsel %vm927, %v1902, 0
  %v2077 = vsel %vm927, %v1903, 0
  %v2080 = vsel %vm927, %v1904, 0
  %2082 = vmatpush.msra.mxu0 0.0
  %2083 = vmatpush.msra.mxu0 0.0
  %2084 = vmatpush.msra.mxu0 0.0
  %2085 = vmatpush.msra.mxu0 0.0
  %2086 = vmatpush.msra.mxu0 0.0
  %2087 = vmatpush.msra.mxu0 0.0
  %2088 = vmatpush.msra.mxu0 0.0
  %2089 = vmatpush.msra.mxu0 0.0
  %2090 = vmatpush.msra.mxu0 0.0
  %2091 = vmatpush.msra.mxu0 0.0
  %2092 = vmatpush.msra.mxu0 0.0
  %2093 = vmatpush.msra.mxu0 0.0
  %2094 = vmatpush.msra.mxu0 0.0
  %2095 = vmatpush.msra.mxu0 0.0
  %2096 = vmatpush.msra.mxu0 0.0
  %2097 = vmatpush.msra.mxu0 %v1300
  %2098 = vmatmul.f32.gmra.mxu0 %v2035
  %v2099 = vpop.f32.mrf.mxu0
  %v2100 = vadd.f32 %v1987, %v2099
  %2101 = vmatmul.f32.gmra.mxu0 %v2038
  %v2102 = vpop.f32.mrf.mxu0
  %v2103 = vadd.f32 %v1990, %v2102
  %2104 = vmatmul.f32.gmra.mxu0 %v2041
  %v2105 = vpop.f32.mrf.mxu0
  %v2106 = vadd.f32 %v1993, %v2105
  %2107 = vmatmul.f32.gmra.mxu0 %v2044
  %v2108 = vpop.f32.mrf.mxu0
  %v2109 = vadd.f32 %v1996, %v2108
  %2110 = vmatmul.f32.gmra.mxu0 %v2047
  %v2111 = vpop.f32.mrf.mxu0
  %v2112 = vadd.f32 %v1999, %v2111
  %2113 = vmatmul.f32.gmra.mxu0 %v2050
  %v2114 = vpop.f32.mrf.mxu0
  %v2115 = vadd.f32 %v2002, %v2114
  %2116 = vmatmul.f32.gmra.mxu0 %v2053
  %v2117 = vpop.f32.mrf.mxu0
  %v2118 = vadd.f32 %v2005, %v2117
  %2119 = vmatmul.f32.gmra.mxu0 %v2056
  %v2120 = vpop.f32.mrf.mxu0
  %v2121 = vadd.f32 %v2008, %v2120
  %2122 = vmatmul.f32.gmra.mxu0 %v2059
  %v2123 = vpop.f32.mrf.mxu0
  %v2124 = vadd.f32 %v2011, %v2123
  %2125 = vmatmul.f32.gmra.mxu0 %v2062
  %v2126 = vpop.f32.mrf.mxu0
  %v2127 = vadd.f32 %v2014, %v2126
  %2128 = vmatmul.f32.gmra.mxu0 %v2065
  %v2129 = vpop.f32.mrf.mxu0
  %v2130 = vadd.f32 %v2017, %v2129
  %2131 = vmatmul.f32.gmra.mxu0 %v2068
  %v2132 = vpop.f32.mrf.mxu0
  %v2133 = vadd.f32 %v2020, %v2132
  %2134 = vmatmul.f32.gmra.mxu0 %v2071
  %v2135 = vpop.f32.mrf.mxu0
  %v2136 = vadd.f32 %v2023, %v2135
  %2137 = vmatmul.f32.gmra.mxu0 %v2074
  %v2138 = vpop.f32.mrf.mxu0
  %v2139 = vadd.f32 %v2026, %v2138
  %2140 = vmatmul.f32.gmra.mxu0 %v2077
  %v2141 = vpop.f32.mrf.mxu0
  %v2142 = vadd.f32 %v2029, %v2141
  %2143 = vmatmul.f32.gmra.mxu0 %v2080
  %v2144 = vpop.f32.mrf.mxu0
  %v2145 = vadd.f32 %v2032, %v2144
  %2146 = vdwg.mxu0
  %v2147 = vld [vmem:[%s1283] sm:$0xff]
  %v2148 = vld [vmem:[%s1283 + $0x10] sm:$0xff]
  %v2149 = vld [vmem:[%s1283 + $0x20] sm:$0xff]
  %v2150 = vld [vmem:[%s1283 + $0x30] sm:$0xff]
  %v2151 = vld [vmem:[%s1283 + $0x40] sm:$0xff]
  %v2152 = vld [vmem:[%s1283 + $0x50] sm:$0xff]
  %v2153 = vld [vmem:[%s1283 + $0x60] sm:$0xff]
  %v2154 = vld [vmem:[%s1283 + $0x70] sm:$0xff]
  %v2155 = vld [vmem:[%s1283 + $0x90] sm:$0xff]
  %v2156 = vld [vmem:[%s1283 + $0xa0] sm:$0xff]
  %v2157 = vld [vmem:[%s1283 + $0xb0] sm:$0xff]
  %v2158 = vld [vmem:[%s1283 + $0xc0] sm:$0xff]
  %v2159 = vld [vmem:[%s1283 + $0xd0] sm:$0xff]
  %v2160 = vld [vmem:[%s1283 + $0xe0] sm:$0xff]
  %v2161 = vld [vmem:[%s1283 + $0xf0] sm:$0xff]
  %v2162 = vld [vmem:[%s1283 + $0x100] sm:$0xff]
  %v2164 = vsel %vm927, %v2147, 0
  %v2167 = vsel %vm927, %v2148, 0
  %v2170 = vsel %vm927, %v2149, 0
  %v2173 = vsel %vm927, %v2150, 0
  %v2176 = vsel %vm927, %v2151, 0
  %v2179 = vsel %vm927, %v2152, 0
  %v2182 = vsel %vm927, %v2153, 0
  %v2185 = vsel %vm927, %v2154, 0
  %v2188 = vsel %vm927, %v2155, 0
  %v2191 = vsel %vm927, %v2156, 0
  %v2194 = vsel %vm927, %v2157, 0
  %v2197 = vsel %vm927, %v2158, 0
  %v2200 = vsel %vm927, %v2159, 0
  %v2203 = vsel %vm927, %v2160, 0
  %v2206 = vsel %vm927, %v2161, 0
  %v2209 = vsel %vm927, %v2162, 0
  %2211 = vmatpush.msra.mxu0 0.0
  %2212 = vmatpush.msra.mxu0 0.0
  %2213 = vmatpush.msra.mxu0 0.0
  %2214 = vmatpush.msra.mxu0 0.0
  %2215 = vmatpush.msra.mxu0 0.0
  %2216 = vmatpush.msra.mxu0 0.0
  %2217 = vmatpush.msra.mxu0 0.0
  %2218 = vmatpush.msra.mxu0 0.0
  %2219 = vmatpush.msra.mxu0 0.0
  %2220 = vmatpush.msra.mxu0 0.0
  %2221 = vmatpush.msra.mxu0 0.0
  %2222 = vmatpush.msra.mxu0 0.0
  %2223 = vmatpush.msra.mxu0 0.0
  %2224 = vmatpush.msra.mxu0 0.0
  %2225 = vmatpush.msra.mxu0 0.0
  %2226 = vmatpush.msra.mxu0 %v1302
  %2227 = vmatmul.f32.gmra.mxu0 %v2164
  %v2228 = vpop.f32.mrf.mxu0
  %v2229 = vadd.f32 0.0, %v2228
  %2230 = vmatmul.f32.gmra.mxu0 %v2167
  %v2231 = vpop.f32.mrf.mxu0
  %v2232 = vadd.f32 0.0, %v2231
  %2233 = vmatmul.f32.gmra.mxu0 %v2170
  %v2234 = vpop.f32.mrf.mxu0
  %v2235 = vadd.f32 0.0, %v2234
  %2236 = vmatmul.f32.gmra.mxu0 %v2173
  %v2237 = vpop.f32.mrf.mxu0
  %v2238 = vadd.f32 0.0, %v2237
  %2239 = vmatmul.f32.gmra.mxu0 %v2176
  %v2240 = vpop.f32.mrf.mxu0
  %v2241 = vadd.f32 0.0, %v2240
  %2242 = vmatmul.f32.gmra.mxu0 %v2179
  %v2243 = vpop.f32.mrf.mxu0
  %v2244 = vadd.f32 0.0, %v2243
  %2245 = vmatmul.f32.gmra.mxu0 %v2182
  %v2246 = vpop.f32.mrf.mxu0
  %v2247 = vadd.f32 0.0, %v2246
  %2248 = vmatmul.f32.gmra.mxu0 %v2185
  %v2249 = vpop.f32.mrf.mxu0
  %v2250 = vadd.f32 0.0, %v2249
  %2251 = vmatmul.f32.gmra.mxu0 %v2188
  %v2252 = vpop.f32.mrf.mxu0
  %v2253 = vadd.f32 0.0, %v2252
  %2254 = vmatmul.f32.gmra.mxu0 %v2191
  %v2255 = vpop.f32.mrf.mxu0
  %v2256 = vadd.f32 0.0, %v2255
  %2257 = vmatmul.f32.gmra.mxu0 %v2194
  %v2258 = vpop.f32.mrf.mxu0
  %v2259 = vadd.f32 0.0, %v2258
  %2260 = vmatmul.f32.gmra.mxu0 %v2197
  %v2261 = vpop.f32.mrf.mxu0
  %v2262 = vadd.f32 0.0, %v2261
  %2263 = vmatmul.f32.gmra.mxu0 %v2200
  %v2264 = vpop.f32.mrf.mxu0
  %v2265 = vadd.f32 0.0, %v2264
  %2266 = vmatmul.f32.gmra.mxu0 %v2203
  %v2267 = vpop.f32.mrf.mxu0
  %v2268 = vadd.f32 0.0, %v2267
  %2269 = vmatmul.f32.gmra.mxu0 %v2206
  %v2270 = vpop.f32.mrf.mxu0
  %v2271 = vadd.f32 0.0, %v2270
  %2272 = vmatmul.f32.gmra.mxu0 %v2209
  %v2273 = vpop.f32.mrf.mxu0
  %v2274 = vadd.f32 0.0, %v2273
  %2275 = vdwg.mxu0
  %v2276 = vadd.f32 %v2100, %v2229
  %v2277 = vadd.f32 %v2103, %v2232
  %v2278 = vadd.f32 %v2106, %v2235
  %v2279 = vadd.f32 %v2109, %v2238
  %v2280 = vadd.f32 %v2112, %v2241
  %v2281 = vadd.f32 %v2115, %v2244
  %v2282 = vadd.f32 %v2118, %v2247
  %v2283 = vadd.f32 %v2121, %v2250
  %v2284 = vadd.f32 %v2124, %v2253
  %v2285 = vadd.f32 %v2127, %v2256
  %v2286 = vadd.f32 %v2130, %v2259
  %v2287 = vadd.f32 %v2133, %v2262
  %v2288 = vadd.f32 %v2136, %v2265
  %v2289 = vadd.f32 %v2139, %v2268
  %v2290 = vadd.f32 %v2142, %v2271
  %v2291 = vadd.f32 %v2145, %v2274
  %v2292 = vld [vmem:[%s1218 + $0x1] sm:$0xff]
  %v2293 = vld [vmem:[%s1218 + $0x11] sm:$0xff]
  %v2294 = vld [vmem:[%s1218 + $0x21] sm:$0xff]
  %v2295 = vld [vmem:[%s1218 + $0x31] sm:$0xff]
  %v2296 = vld [vmem:[%s1218 + $0x41] sm:$0xff]
  %v2297 = vld [vmem:[%s1218 + $0x51] sm:$0xff]
  %v2298 = vld [vmem:[%s1218 + $0x61] sm:$0xff]
  %v2299 = vld [vmem:[%s1218 + $0x71] sm:$0xff]
  %v2300 = vld [vmem:[%s1218 + $0x91] sm:$0xff]
  %v2301 = vld [vmem:[%s1218 + $0xa1] sm:$0xff]
  %v2302 = vld [vmem:[%s1218 + $0xb1] sm:$0xff]
  %v2303 = vld [vmem:[%s1218 + $0xc1] sm:$0xff]
  %v2304 = vld [vmem:[%s1218 + $0xd1] sm:$0xff]
  %v2305 = vld [vmem:[%s1218 + $0xe1] sm:$0xff]
  %v2306 = vld [vmem:[%s1218 + $0xf1] sm:$0xff]
  %v2307 = vld [vmem:[%s1218 + $0x101] sm:$0xff]
  %v2309 = vsel %vm927, %v2292, 0
  %v2312 = vsel %vm927, %v2293, 0
  %v2315 = vsel %vm927, %v2294, 0
  %v2318 = vsel %vm927, %v2295, 0
  %v2321 = vsel %vm927, %v2296, 0
  %v2324 = vsel %vm927, %v2297, 0
  %v2327 = vsel %vm927, %v2298, 0
  %v2330 = vsel %vm927, %v2299, 0
  %v2333 = vsel %vm927, %v2300, 0
  %v2336 = vsel %vm927, %v2301, 0
  %v2339 = vsel %vm927, %v2302, 0
  %v2342 = vsel %vm927, %v2303, 0
  %v2345 = vsel %vm927, %v2304, 0
  %v2348 = vsel %vm927, %v2305, 0
  %v2351 = vsel %vm927, %v2306, 0
  %v2354 = vsel %vm927, %v2307, 0
  %2356 = vmatpush.msra.mxu0 0.0
  %2357 = vmatpush.msra.mxu0 0.0
  %2358 = vmatpush.msra.mxu0 0.0
  %2359 = vmatpush.msra.mxu0 0.0
  %2360 = vmatpush.msra.mxu0 0.0
  %2361 = vmatpush.msra.mxu0 0.0
  %2362 = vmatpush.msra.mxu0 0.0
  %2363 = vmatpush.msra.mxu0 0.0
  %2364 = vmatpush.msra.mxu0 0.0
  %2365 = vmatpush.msra.mxu0 0.0
  %2366 = vmatpush.msra.mxu0 0.0
  %2367 = vmatpush.msra.mxu0 0.0
  %2368 = vmatpush.msra.mxu0 0.0
  %2369 = vmatpush.msra.mxu0 0.0
  %2370 = vmatpush.msra.mxu0 0.0
  %2371 = vmatpush.msra.mxu0 %v1303
  %2372 = vmatmul.f32.gmra.mxu0 %v2309
  %v2373 = vpop.f32.mrf.mxu0
  %v2374 = vadd.f32 0.0, %v2373
  %2375 = vmatmul.f32.gmra.mxu0 %v2312
  %v2376 = vpop.f32.mrf.mxu0
  %v2377 = vadd.f32 0.0, %v2376
  %2378 = vmatmul.f32.gmra.mxu0 %v2315
  %v2379 = vpop.f32.mrf.mxu0
  %v2380 = vadd.f32 0.0, %v2379
  %2381 = vmatmul.f32.gmra.mxu0 %v2318
  %v2382 = vpop.f32.mrf.mxu0
  %v2383 = vadd.f32 0.0, %v2382
  %2384 = vmatmul.f32.gmra.mxu0 %v2321
  %v2385 = vpop.f32.mrf.mxu0
  %v2386 = vadd.f32 0.0, %v2385
  %2387 = vmatmul.f32.gmra.mxu0 %v2324
  %v2388 = vpop.f32.mrf.mxu0
  %v2389 = vadd.f32 0.0, %v2388
  %2390 = vmatmul.f32.gmra.mxu0 %v2327
  %v2391 = vpop.f32.mrf.mxu0
  %v2392 = vadd.f32 0.0, %v2391
  %2393 = vmatmul.f32.gmra.mxu0 %v2330
  %v2394 = vpop.f32.mrf.mxu0
  %v2395 = vadd.f32 0.0, %v2394
  %2396 = vmatmul.f32.gmra.mxu0 %v2333
  %v2397 = vpop.f32.mrf.mxu0
  %v2398 = vadd.f32 0.0, %v2397
  %2399 = vmatmul.f32.gmra.mxu0 %v2336
  %v2400 = vpop.f32.mrf.mxu0
  %v2401 = vadd.f32 0.0, %v2400
  %2402 = vmatmul.f32.gmra.mxu0 %v2339
  %v2403 = vpop.f32.mrf.mxu0
  %v2404 = vadd.f32 0.0, %v2403
  %2405 = vmatmul.f32.gmra.mxu0 %v2342
  %v2406 = vpop.f32.mrf.mxu0
  %v2407 = vadd.f32 0.0, %v2406
  %2408 = vmatmul.f32.gmra.mxu0 %v2345
  %v2409 = vpop.f32.mrf.mxu0
  %v2410 = vadd.f32 0.0, %v2409
  %2411 = vmatmul.f32.gmra.mxu0 %v2348
  %v2412 = vpop.f32.mrf.mxu0
  %v2413 = vadd.f32 0.0, %v2412
  %2414 = vmatmul.f32.gmra.mxu0 %v2351
  %v2415 = vpop.f32.mrf.mxu0
  %v2416 = vadd.f32 0.0, %v2415
  %2417 = vmatmul.f32.gmra.mxu0 %v2354
  %v2418 = vpop.f32.mrf.mxu0
  %v2419 = vadd.f32 0.0, %v2418
  %2420 = vdwg.mxu0
  %v2421 = vadd.f32 %v2276, %v2374
  %v2422 = vadd.f32 %v2277, %v2377
  %v2423 = vadd.f32 %v2278, %v2380
  %v2424 = vadd.f32 %v2279, %v2383
  %v2425 = vadd.f32 %v2280, %v2386
  %v2426 = vadd.f32 %v2281, %v2389
  %v2427 = vadd.f32 %v2282, %v2392
  %v2428 = vadd.f32 %v2283, %v2395
  %v2429 = vadd.f32 %v2284, %v2398
  %v2430 = vadd.f32 %v2285, %v2401
  %v2431 = vadd.f32 %v2286, %v2404
  %v2432 = vadd.f32 %v2287, %v2407
  %v2433 = vadd.f32 %v2288, %v2410
  %v2434 = vadd.f32 %v2289, %v2413
  %v2435 = vadd.f32 %v2290, %v2416
  %v2436 = vadd.f32 %v2291, %v2419
  %v2437 = vadd.f32 %v2421, %v1854
  %v2438 = vadd.f32 %v2422, %v1854
  %v2439 = vadd.f32 %v2423, %v1854
  %v2440 = vadd.f32 %v2424, %v1854
  %v2441 = vadd.f32 %v2425, %v1854
  %v2442 = vadd.f32 %v2426, %v1854
  %v2443 = vadd.f32 %v2427, %v1854
  %v2444 = vadd.f32 %v2428, %v1854
  %v2445 = vadd.f32 %v2429, %v1854
  %v2446 = vadd.f32 %v2430, %v1854
  %v2447 = vadd.f32 %v2431, %v1854
  %v2448 = vadd.f32 %v2432, %v1854
  %v2449 = vadd.f32 %v2433, %v1854
  %v2450 = vadd.f32 %v2434, %v1854
  %v2451 = vadd.f32 %v2435, %v1854
  %v2452 = vadd.f32 %v2436, %v1854
  %s2453 = scalar_lea.vmem %s7, 128
  %2454 = vst.msk [vmem:[%s2453] sm:$0xff] %vm1872, %v2437
  %2455 = vst.msk [vmem:[%s2453 + $0x8] sm:$0xff] %vm1872, %v2438
  %2456 = vst.msk [vmem:[%s2453 + $0x10] sm:$0xff] %vm1872, %v2439
  %2457 = vst.msk [vmem:[%s2453 + $0x18] sm:$0xff] %vm1872, %v2440
  %2458 = vst.msk [vmem:[%s2453 + $0x20] sm:$0xff] %vm1872, %v2441
  %2459 = vst.msk [vmem:[%s2453 + $0x28] sm:$0xff] %vm1872, %v2442
  %2460 = vst.msk [vmem:[%s2453 + $0x30] sm:$0xff] %vm1872, %v2443
  %2461 = vst.msk [vmem:[%s2453 + $0x38] sm:$0xff] %vm1872, %v2444
  %2462 = vst.msk [vmem:[%s2453 + $0x40] sm:$0xff] %vm1872, %v2445
  %2463 = vst.msk [vmem:[%s2453 + $0x48] sm:$0xff] %vm1872, %v2446
  %2464 = vst.msk [vmem:[%s2453 + $0x50] sm:$0xff] %vm1872, %v2447
  %2465 = vst.msk [vmem:[%s2453 + $0x58] sm:$0xff] %vm1872, %v2448
  %2466 = vst.msk [vmem:[%s2453 + $0x60] sm:$0xff] %vm1872, %v2449
  %2467 = vst.msk [vmem:[%s2453 + $0x68] sm:$0xff] %vm1872, %v2450
  %2468 = vst.msk [vmem:[%s2453 + $0x70] sm:$0xff] %vm1872, %v2451
  %2469 = vst.msk [vmem:[%s2453 + $0x78] sm:$0xff] %vm1872, %v2452
  %v2470 = vld [vmem:[%s1218] sm:$0xff]
  %v2471 = vld [vmem:[%s1218 + $0x10] sm:$0xff]
  %v2472 = vld [vmem:[%s1218 + $0x20] sm:$0xff]
  %v2473 = vld [vmem:[%s1218 + $0x30] sm:$0xff]
  %v2474 = vld [vmem:[%s1218 + $0x40] sm:$0xff]
  %v2475 = vld [vmem:[%s1218 + $0x50] sm:$0xff]
  %v2476 = vld [vmem:[%s1218 + $0x60] sm:$0xff]
  %v2477 = vld [vmem:[%s1218 + $0x70] sm:$0xff]
  %v2478 = vld [vmem:[%s1218 + $0x90] sm:$0xff]
  %v2479 = vld [vmem:[%s1218 + $0xa0] sm:$0xff]
  %v2480 = vld [vmem:[%s1218 + $0xb0] sm:$0xff]
  %v2481 = vld [vmem:[%s1218 + $0xc0] sm:$0xff]
  %v2482 = vld [vmem:[%s1218 + $0xd0] sm:$0xff]
  %v2483 = vld [vmem:[%s1218 + $0xe0] sm:$0xff]
  %v2484 = vld [vmem:[%s1218 + $0xf0] sm:$0xff]
  %v2485 = vld [vmem:[%s1218 + $0x100] sm:$0xff]
  %v2486 = vld [vmem:[%s1283] sm:$0xff]
  %v2487 = vld [vmem:[%s1283 + $0x10] sm:$0xff]
  %v2488 = vld [vmem:[%s1283 + $0x20] sm:$0xff]
  %v2489 = vld [vmem:[%s1283 + $0x30] sm:$0xff]
  %v2490 = vld [vmem:[%s1283 + $0x40] sm:$0xff]
  %v2491 = vld [vmem:[%s1283 + $0x50] sm:$0xff]
  %v2492 = vld [vmem:[%s1283 + $0x60] sm:$0xff]
  %v2493 = vld [vmem:[%s1283 + $0x70] sm:$0xff]
  %v2494 = vld [vmem:[%s1283 + $0x90] sm:$0xff]
  %v2495 = vld [vmem:[%s1283 + $0xa0] sm:$0xff]
  %v2496 = vld [vmem:[%s1283 + $0xb0] sm:$0xff]
  %v2497 = vld [vmem:[%s1283 + $0xc0] sm:$0xff]
  %v2498 = vld [vmem:[%s1283 + $0xd0] sm:$0xff]
  %v2499 = vld [vmem:[%s1283 + $0xe0] sm:$0xff]
  %v2500 = vld [vmem:[%s1283 + $0xf0] sm:$0xff]
  %v2501 = vld [vmem:[%s1283 + $0x100] sm:$0xff]
  %v2503 = vsel %vm927, %v2486, 0
  %v2506 = vsel %vm927, %v2487, 0
  %v2509 = vsel %vm927, %v2488, 0
  %v2512 = vsel %vm927, %v2489, 0
  %v2515 = vsel %vm927, %v2490, 0
  %v2518 = vsel %vm927, %v2491, 0
  %v2521 = vsel %vm927, %v2492, 0
  %v2524 = vsel %vm927, %v2493, 0
  %v2527 = vsel %vm927, %v2494, 0
  %v2530 = vsel %vm927, %v2495, 0
  %v2533 = vsel %vm927, %v2496, 0
  %v2536 = vsel %vm927, %v2497, 0
  %v2539 = vsel %vm927, %v2498, 0
  %v2542 = vsel %vm927, %v2499, 0
  %v2545 = vsel %vm927, %v2500, 0
  %v2548 = vsel %vm927, %v2501, 0
  %2550 = vmatpush.msra.mxu0 0.0
  %2551 = vmatpush.msra.mxu0 0.0
  %2552 = vmatpush.msra.mxu0 0.0
  %2553 = vmatpush.msra.mxu0 0.0
  %2554 = vmatpush.msra.mxu0 0.0
  %2555 = vmatpush.msra.mxu0 0.0
  %2556 = vmatpush.msra.mxu0 0.0
  %2557 = vmatpush.msra.mxu0 0.0
  %2558 = vmatpush.msra.mxu0 0.0
  %2559 = vmatpush.msra.mxu0 0.0
  %2560 = vmatpush.msra.mxu0 0.0
  %2561 = vmatpush.msra.mxu0 0.0
  %2562 = vmatpush.msra.mxu0 0.0
  %2563 = vmatpush.msra.mxu0 0.0
  %2564 = vmatpush.msra.mxu0 0.0
  %2565 = vmatpush.msra.mxu0 %v1301
  %2566 = vmatmul.f32.gmra.mxu0 %v2503
  %v2567 = vpop.f32.mrf.mxu0
  %v2568 = vadd.f32 0.0, %v2567
  %2569 = vmatmul.f32.gmra.mxu0 %v2506
  %v2570 = vpop.f32.mrf.mxu0
  %v2571 = vadd.f32 0.0, %v2570
  %2572 = vmatmul.f32.gmra.mxu0 %v2509
  %v2573 = vpop.f32.mrf.mxu0
  %v2574 = vadd.f32 0.0, %v2573
  %2575 = vmatmul.f32.gmra.mxu0 %v2512
  %v2576 = vpop.f32.mrf.mxu0
  %v2577 = vadd.f32 0.0, %v2576
  %2578 = vmatmul.f32.gmra.mxu0 %v2515
  %v2579 = vpop.f32.mrf.mxu0
  %v2580 = vadd.f32 0.0, %v2579
  %2581 = vmatmul.f32.gmra.mxu0 %v2518
  %v2582 = vpop.f32.mrf.mxu0
  %v2583 = vadd.f32 0.0, %v2582
  %2584 = vmatmul.f32.gmra.mxu0 %v2521
  %v2585 = vpop.f32.mrf.mxu0
  %v2586 = vadd.f32 0.0, %v2585
  %2587 = vmatmul.f32.gmra.mxu0 %v2524
  %v2588 = vpop.f32.mrf.mxu0
  %v2589 = vadd.f32 0.0, %v2588
  %2590 = vmatmul.f32.gmra.mxu0 %v2527
  %v2591 = vpop.f32.mrf.mxu0
  %v2592 = vadd.f32 0.0, %v2591
  %2593 = vmatmul.f32.gmra.mxu0 %v2530
  %v2594 = vpop.f32.mrf.mxu0
  %v2595 = vadd.f32 0.0, %v2594
  %2596 = vmatmul.f32.gmra.mxu0 %v2533
  %v2597 = vpop.f32.mrf.mxu0
  %v2598 = vadd.f32 0.0, %v2597
  %2599 = vmatmul.f32.gmra.mxu0 %v2536
  %v2600 = vpop.f32.mrf.mxu0
  %v2601 = vadd.f32 0.0, %v2600
  %2602 = vmatmul.f32.gmra.mxu0 %v2539
  %v2603 = vpop.f32.mrf.mxu0
  %v2604 = vadd.f32 0.0, %v2603
  %2605 = vmatmul.f32.gmra.mxu0 %v2542
  %v2606 = vpop.f32.mrf.mxu0
  %v2607 = vadd.f32 0.0, %v2606
  %2608 = vmatmul.f32.gmra.mxu0 %v2545
  %v2609 = vpop.f32.mrf.mxu0
  %v2610 = vadd.f32 0.0, %v2609
  %2611 = vmatmul.f32.gmra.mxu0 %v2548
  %v2612 = vpop.f32.mrf.mxu0
  %v2613 = vadd.f32 0.0, %v2612
  %2614 = vdwg.mxu0
  %v2616 = vsel %vm927, %v2470, 0
  %v2619 = vsel %vm927, %v2471, 0
  %v2622 = vsel %vm927, %v2472, 0
  %v2625 = vsel %vm927, %v2473, 0
  %v2628 = vsel %vm927, %v2474, 0
  %v2631 = vsel %vm927, %v2475, 0
  %v2634 = vsel %vm927, %v2476, 0
  %v2637 = vsel %vm927, %v2477, 0
  %v2640 = vsel %vm927, %v2478, 0
  %v2643 = vsel %vm927, %v2479, 0
  %v2646 = vsel %vm927, %v2480, 0
  %v2649 = vsel %vm927, %v2481, 0
  %v2652 = vsel %vm927, %v2482, 0
  %v2655 = vsel %vm927, %v2483, 0
  %v2658 = vsel %vm927, %v2484, 0
  %v2661 = vsel %vm927, %v2485, 0
  %2663 = vmatpush.msra.mxu0 0.0
  %2664 = vmatpush.msra.mxu0 0.0
  %2665 = vmatpush.msra.mxu0 0.0
  %2666 = vmatpush.msra.mxu0 0.0
  %2667 = vmatpush.msra.mxu0 0.0
  %2668 = vmatpush.msra.mxu0 0.0
  %2669 = vmatpush.msra.mxu0 0.0
  %2670 = vmatpush.msra.mxu0 0.0
  %2671 = vmatpush.msra.mxu0 0.0
  %2672 = vmatpush.msra.mxu0 0.0
  %2673 = vmatpush.msra.mxu0 0.0
  %2674 = vmatpush.msra.mxu0 0.0
  %2675 = vmatpush.msra.mxu0 0.0
  %2676 = vmatpush.msra.mxu0 0.0
  %2677 = vmatpush.msra.mxu0 0.0
  %2678 = vmatpush.msra.mxu0 %v1300
  %2679 = vmatmul.f32.gmra.mxu0 %v2616
  %v2680 = vpop.f32.mrf.mxu0
  %v2681 = vadd.f32 %v2568, %v2680
  %2682 = vmatmul.f32.gmra.mxu0 %v2619
  %v2683 = vpop.f32.mrf.mxu0
  %v2684 = vadd.f32 %v2571, %v2683
  %2685 = vmatmul.f32.gmra.mxu0 %v2622
  %v2686 = vpop.f32.mrf.mxu0
  %v2687 = vadd.f32 %v2574, %v2686
  %2688 = vmatmul.f32.gmra.mxu0 %v2625
  %v2689 = vpop.f32.mrf.mxu0
  %v2690 = vadd.f32 %v2577, %v2689
  %2691 = vmatmul.f32.gmra.mxu0 %v2628
  %v2692 = vpop.f32.mrf.mxu0
  %v2693 = vadd.f32 %v2580, %v2692
  %2694 = vmatmul.f32.gmra.mxu0 %v2631
  %v2695 = vpop.f32.mrf.mxu0
  %v2696 = vadd.f32 %v2583, %v2695
  %2697 = vmatmul.f32.gmra.mxu0 %v2634
  %v2698 = vpop.f32.mrf.mxu0
  %v2699 = vadd.f32 %v2586, %v2698
  %2700 = vmatmul.f32.gmra.mxu0 %v2637
  %v2701 = vpop.f32.mrf.mxu0
  %v2702 = vadd.f32 %v2589, %v2701
  %2703 = vmatmul.f32.gmra.mxu0 %v2640
  %v2704 = vpop.f32.mrf.mxu0
  %v2705 = vadd.f32 %v2592, %v2704
  %2706 = vmatmul.f32.gmra.mxu0 %v2643
  %v2707 = vpop.f32.mrf.mxu0
  %v2708 = vadd.f32 %v2595, %v2707
  %2709 = vmatmul.f32.gmra.mxu0 %v2646
  %v2710 = vpop.f32.mrf.mxu0
  %v2711 = vadd.f32 %v2598, %v2710
  %2712 = vmatmul.f32.gmra.mxu0 %v2649
  %v2713 = vpop.f32.mrf.mxu0
  %v2714 = vadd.f32 %v2601, %v2713
  %2715 = vmatmul.f32.gmra.mxu0 %v2652
  %v2716 = vpop.f32.mrf.mxu0
  %v2717 = vadd.f32 %v2604, %v2716
  %2718 = vmatmul.f32.gmra.mxu0 %v2655
  %v2719 = vpop.f32.mrf.mxu0
  %v2720 = vadd.f32 %v2607, %v2719
  %2721 = vmatmul.f32.gmra.mxu0 %v2658
  %v2722 = vpop.f32.mrf.mxu0
  %v2723 = vadd.f32 %v2610, %v2722
  %2724 = vmatmul.f32.gmra.mxu0 %v2661
  %v2725 = vpop.f32.mrf.mxu0
  %v2726 = vadd.f32 %v2613, %v2725
  %2727 = vdwg.mxu0
  %s2728 = scalar_lea.vmem [#allocation2], 16
  %v2729 = vld [vmem:[%s2728] sm:$0xff]
  %v2730 = vld [vmem:[%s2728 + $0x10] sm:$0xff]
  %v2731 = vld [vmem:[%s2728 + $0x20] sm:$0xff]
  %v2732 = vld [vmem:[%s2728 + $0x30] sm:$0xff]
  %v2733 = vld [vmem:[%s2728 + $0x40] sm:$0xff]
  %v2734 = vld [vmem:[%s2728 + $0x50] sm:$0xff]
  %v2735 = vld [vmem:[%s2728 + $0x60] sm:$0xff]
  %v2736 = vld [vmem:[%s2728 + $0x70] sm:$0xff]
  %v2737 = vld [vmem:[%s2728 + $0x90] sm:$0xff]
  %v2738 = vld [vmem:[%s2728 + $0xa0] sm:$0xff]
  %v2739 = vld [vmem:[%s2728 + $0xb0] sm:$0xff]
  %v2740 = vld [vmem:[%s2728 + $0xc0] sm:$0xff]
  %v2741 = vld [vmem:[%s2728 + $0xd0] sm:$0xff]
  %v2742 = vld [vmem:[%s2728 + $0xe0] sm:$0xff]
  %v2743 = vld [vmem:[%s2728 + $0xf0] sm:$0xff]
  %v2744 = vld [vmem:[%s2728 + $0x100] sm:$0xff]
  %v2746 = vsel %vm927, %v2729, 0
  %v2749 = vsel %vm927, %v2730, 0
  %v2752 = vsel %vm927, %v2731, 0
  %v2755 = vsel %vm927, %v2732, 0
  %v2758 = vsel %vm927, %v2733, 0
  %v2761 = vsel %vm927, %v2734, 0
  %v2764 = vsel %vm927, %v2735, 0
  %v2767 = vsel %vm927, %v2736, 0
  %v2770 = vsel %vm927, %v2737, 0
  %v2773 = vsel %vm927, %v2738, 0
  %v2776 = vsel %vm927, %v2739, 0
  %v2779 = vsel %vm927, %v2740, 0
  %v2782 = vsel %vm927, %v2741, 0
  %v2785 = vsel %vm927, %v2742, 0
  %v2788 = vsel %vm927, %v2743, 0
  %v2791 = vsel %vm927, %v2744, 0
  %2793 = vmatpush.msra.mxu0 0.0
  %2794 = vmatpush.msra.mxu0 0.0
  %2795 = vmatpush.msra.mxu0 0.0
  %2796 = vmatpush.msra.mxu0 0.0
  %2797 = vmatpush.msra.mxu0 0.0
  %2798 = vmatpush.msra.mxu0 0.0
  %2799 = vmatpush.msra.mxu0 0.0
  %2800 = vmatpush.msra.mxu0 0.0
  %2801 = vmatpush.msra.mxu0 0.0
  %2802 = vmatpush.msra.mxu0 0.0
  %2803 = vmatpush.msra.mxu0 0.0
  %2804 = vmatpush.msra.mxu0 0.0
  %2805 = vmatpush.msra.mxu0 0.0
  %2806 = vmatpush.msra.mxu0 0.0
  %2807 = vmatpush.msra.mxu0 0.0
  %2808 = vmatpush.msra.mxu0 %v1302
  %2809 = vmatmul.f32.gmra.mxu0 %v2746
  %v2810 = vpop.f32.mrf.mxu0
  %v2811 = vadd.f32 0.0, %v2810
  %2812 = vmatmul.f32.gmra.mxu0 %v2749
  %v2813 = vpop.f32.mrf.mxu0
  %v2814 = vadd.f32 0.0, %v2813
  %2815 = vmatmul.f32.gmra.mxu0 %v2752
  %v2816 = vpop.f32.mrf.mxu0
  %v2817 = vadd.f32 0.0, %v2816
  %2818 = vmatmul.f32.gmra.mxu0 %v2755
  %v2819 = vpop.f32.mrf.mxu0
  %v2820 = vadd.f32 0.0, %v2819
  %2821 = vmatmul.f32.gmra.mxu0 %v2758
  %v2822 = vpop.f32.mrf.mxu0
  %v2823 = vadd.f32 0.0, %v2822
  %2824 = vmatmul.f32.gmra.mxu0 %v2761
  %v2825 = vpop.f32.mrf.mxu0
  %v2826 = vadd.f32 0.0, %v2825
  %2827 = vmatmul.f32.gmra.mxu0 %v2764
  %v2828 = vpop.f32.mrf.mxu0
  %v2829 = vadd.f32 0.0, %v2828
  %2830 = vmatmul.f32.gmra.mxu0 %v2767
  %v2831 = vpop.f32.mrf.mxu0
  %v2832 = vadd.f32 0.0, %v2831
  %2833 = vmatmul.f32.gmra.mxu0 %v2770
  %v2834 = vpop.f32.mrf.mxu0
  %v2835 = vadd.f32 0.0, %v2834
  %2836 = vmatmul.f32.gmra.mxu0 %v2773
  %v2837 = vpop.f32.mrf.mxu0
  %v2838 = vadd.f32 0.0, %v2837
  %2839 = vmatmul.f32.gmra.mxu0 %v2776
  %v2840 = vpop.f32.mrf.mxu0
  %v2841 = vadd.f32 0.0, %v2840
  %2842 = vmatmul.f32.gmra.mxu0 %v2779
  %v2843 = vpop.f32.mrf.mxu0
  %v2844 = vadd.f32 0.0, %v2843
  %2845 = vmatmul.f32.gmra.mxu0 %v2782
  %v2846 = vpop.f32.mrf.mxu0
  %v2847 = vadd.f32 0.0, %v2846
  %2848 = vmatmul.f32.gmra.mxu0 %v2785
  %v2849 = vpop.f32.mrf.mxu0
  %v2850 = vadd.f32 0.0, %v2849
  %2851 = vmatmul.f32.gmra.mxu0 %v2788
  %v2852 = vpop.f32.mrf.mxu0
  %v2853 = vadd.f32 0.0, %v2852
  %2854 = vmatmul.f32.gmra.mxu0 %v2791
  %v2855 = vpop.f32.mrf.mxu0
  %v2856 = vadd.f32 0.0, %v2855
  %2857 = vdwg.mxu0
  %v2858 = vadd.f32 %v2681, %v2811
  %v2859 = vadd.f32 %v2684, %v2814
  %v2860 = vadd.f32 %v2687, %v2817
  %v2861 = vadd.f32 %v2690, %v2820
  %v2862 = vadd.f32 %v2693, %v2823
  %v2863 = vadd.f32 %v2696, %v2826
  %v2864 = vadd.f32 %v2699, %v2829
  %v2865 = vadd.f32 %v2702, %v2832
  %v2866 = vadd.f32 %v2705, %v2835
  %v2867 = vadd.f32 %v2708, %v2838
  %v2868 = vadd.f32 %v2711, %v2841
  %v2869 = vadd.f32 %v2714, %v2844
  %v2870 = vadd.f32 %v2717, %v2847
  %v2871 = vadd.f32 %v2720, %v2850
  %v2872 = vadd.f32 %v2723, %v2853
  %v2873 = vadd.f32 %v2726, %v2856
  %s2874 = scalar_lea.vmem [#allocation2], 304
  %v2875 = vld [vmem:[%s2874] sm:$0xff]
  %v2876 = vld [vmem:[%s2874 + $0x10] sm:$0xff]
  %v2877 = vld [vmem:[%s2874 + $0x20] sm:$0xff]
  %v2878 = vld [vmem:[%s2874 + $0x30] sm:$0xff]
  %v2879 = vld [vmem:[%s2874 + $0x40] sm:$0xff]
  %v2880 = vld [vmem:[%s2874 + $0x50] sm:$0xff]
  %v2881 = vld [vmem:[%s2874 + $0x60] sm:$0xff]
  %v2882 = vld [vmem:[%s2874 + $0x70] sm:$0xff]
  %v2883 = vld [vmem:[%s2874 + $0x90] sm:$0xff]
  %v2884 = vld [vmem:[%s2874 + $0xa0] sm:$0xff]
  %v2885 = vld [vmem:[%s2874 + $0xb0] sm:$0xff]
  %v2886 = vld [vmem:[%s2874 + $0xc0] sm:$0xff]
  %v2887 = vld [vmem:[%s2874 + $0xd0] sm:$0xff]
  %v2888 = vld [vmem:[%s2874 + $0xe0] sm:$0xff]
  %v2889 = vld [vmem:[%s2874 + $0xf0] sm:$0xff]
  %v2890 = vld [vmem:[%s2874 + $0x100] sm:$0xff]
  %v2892 = vsel %vm927, %v2875, 0
  %v2895 = vsel %vm927, %v2876, 0
  %v2898 = vsel %vm927, %v2877, 0
  %v2901 = vsel %vm927, %v2878, 0
  %v2904 = vsel %vm927, %v2879, 0
  %v2907 = vsel %vm927, %v2880, 0
  %v2910 = vsel %vm927, %v2881, 0
  %v2913 = vsel %vm927, %v2882, 0
  %v2916 = vsel %vm927, %v2883, 0
  %v2919 = vsel %vm927, %v2884, 0
  %v2922 = vsel %vm927, %v2885, 0
  %v2925 = vsel %vm927, %v2886, 0
  %v2928 = vsel %vm927, %v2887, 0
  %v2931 = vsel %vm927, %v2888, 0
  %v2934 = vsel %vm927, %v2889, 0
  %v2937 = vsel %vm927, %v2890, 0
  %2939 = vmatpush.msra.mxu0 0.0
  %2940 = vmatpush.msra.mxu0 0.0
  %2941 = vmatpush.msra.mxu0 0.0
  %2942 = vmatpush.msra.mxu0 0.0
  %2943 = vmatpush.msra.mxu0 0.0
  %2944 = vmatpush.msra.mxu0 0.0
  %2945 = vmatpush.msra.mxu0 0.0
  %2946 = vmatpush.msra.mxu0 0.0
  %2947 = vmatpush.msra.mxu0 0.0
  %2948 = vmatpush.msra.mxu0 0.0
  %2949 = vmatpush.msra.mxu0 0.0
  %2950 = vmatpush.msra.mxu0 0.0
  %2951 = vmatpush.msra.mxu0 0.0
  %2952 = vmatpush.msra.mxu0 0.0
  %2953 = vmatpush.msra.mxu0 0.0
  %2954 = vmatpush.msra.mxu0 %v1303
  %2955 = vmatmul.f32.gmra.mxu0 %v2892
  %v2956 = vpop.f32.mrf.mxu0
  %v2957 = vadd.f32 0.0, %v2956
  %2958 = vmatmul.f32.gmra.mxu0 %v2895
  %v2959 = vpop.f32.mrf.mxu0
  %v2960 = vadd.f32 0.0, %v2959
  %2961 = vmatmul.f32.gmra.mxu0 %v2898
  %v2962 = vpop.f32.mrf.mxu0
  %v2963 = vadd.f32 0.0, %v2962
  %2964 = vmatmul.f32.gmra.mxu0 %v2901
  %v2965 = vpop.f32.mrf.mxu0
  %v2966 = vadd.f32 0.0, %v2965
  %2967 = vmatmul.f32.gmra.mxu0 %v2904
  %v2968 = vpop.f32.mrf.mxu0
  %v2969 = vadd.f32 0.0, %v2968
  %2970 = vmatmul.f32.gmra.mxu0 %v2907
  %v2971 = vpop.f32.mrf.mxu0
  %v2972 = vadd.f32 0.0, %v2971
  %2973 = vmatmul.f32.gmra.mxu0 %v2910
  %v2974 = vpop.f32.mrf.mxu0
  %v2975 = vadd.f32 0.0, %v2974
  %2976 = vmatmul.f32.gmra.mxu0 %v2913
  %v2977 = vpop.f32.mrf.mxu0
  %v2978 = vadd.f32 0.0, %v2977
  %2979 = vmatmul.f32.gmra.mxu0 %v2916
  %v2980 = vpop.f32.mrf.mxu0
  %v2981 = vadd.f32 0.0, %v2980
  %2982 = vmatmul.f32.gmra.mxu0 %v2919
  %v2983 = vpop.f32.mrf.mxu0
  %v2984 = vadd.f32 0.0, %v2983
  %2985 = vmatmul.f32.gmra.mxu0 %v2922
  %v2986 = vpop.f32.mrf.mxu0
  %v2987 = vadd.f32 0.0, %v2986
  %2988 = vmatmul.f32.gmra.mxu0 %v2925
  %v2989 = vpop.f32.mrf.mxu0
  %v2990 = vadd.f32 0.0, %v2989
  %2991 = vmatmul.f32.gmra.mxu0 %v2928
  %v2992 = vpop.f32.mrf.mxu0
  %v2993 = vadd.f32 0.0, %v2992
  %2994 = vmatmul.f32.gmra.mxu0 %v2931
  %v2995 = vpop.f32.mrf.mxu0
  %v2996 = vadd.f32 0.0, %v2995
  %2997 = vmatmul.f32.gmra.mxu0 %v2934
  %v2998 = vpop.f32.mrf.mxu0
  %v2999 = vadd.f32 0.0, %v2998
  %3000 = vmatmul.f32.gmra.mxu0 %v2937
  %v3001 = vpop.f32.mrf.mxu0
  %v3002 = vadd.f32 0.0, %v3001
  %3003 = vdwg.mxu0
  %v3004 = vadd.f32 %v2858, %v2957
  %v3005 = vadd.f32 %v2859, %v2960
  %v3006 = vadd.f32 %v2860, %v2963
  %v3007 = vadd.f32 %v2861, %v2966
  %v3008 = vadd.f32 %v2862, %v2969
  %v3009 = vadd.f32 %v2863, %v2972
  %v3010 = vadd.f32 %v2864, %v2975
  %v3011 = vadd.f32 %v2865, %v2978
  %v3012 = vadd.f32 %v2866, %v2981
  %v3013 = vadd.f32 %v2867, %v2984
  %v3014 = vadd.f32 %v2868, %v2987
  %v3015 = vadd.f32 %v2869, %v2990
  %v3016 = vadd.f32 %v2870, %v2993
  %v3017 = vadd.f32 %v2871, %v2996
  %v3018 = vadd.f32 %v2872, %v2999
  %v3019 = vadd.f32 %v2873, %v3002
  %v3020 = vadd.f32 %v3004, %v1854
  %v3021 = vadd.f32 %v3005, %v1854
  %v3022 = vadd.f32 %v3006, %v1854
  %v3023 = vadd.f32 %v3007, %v1854
  %v3024 = vadd.f32 %v3008, %v1854
  %v3025 = vadd.f32 %v3009, %v1854
  %v3026 = vadd.f32 %v3010, %v1854
  %v3027 = vadd.f32 %v3011, %v1854
  %v3028 = vadd.f32 %v3012, %v1854
  %v3029 = vadd.f32 %v3013, %v1854
  %v3030 = vadd.f32 %v3014, %v1854
  %v3031 = vadd.f32 %v3015, %v1854
  %v3032 = vadd.f32 %v3016, %v1854
  %v3033 = vadd.f32 %v3017, %v1854
  %v3034 = vadd.f32 %v3018, %v1854
  %v3035 = vadd.f32 %v3019, %v1854
  %s3036 = scalar_lea.vmem %s7, 256
  %3037 = vst.msk [vmem:[%s3036] sm:$0xff] %vm1872, %v3020
  %3038 = vst.msk [vmem:[%s3036 + $0x8] sm:$0xff] %vm1872, %v3021
  %3039 = vst.msk [vmem:[%s3036 + $0x10] sm:$0xff] %vm1872, %v3022
  %3040 = vst.msk [vmem:[%s3036 + $0x18] sm:$0xff] %vm1872, %v3023
  %3041 = vst.msk [vmem:[%s3036 + $0x20] sm:$0xff] %vm1872, %v3024
  %3042 = vst.msk [vmem:[%s3036 + $0x28] sm:$0xff] %vm1872, %v3025
  %3043 = vst.msk [vmem:[%s3036 + $0x30] sm:$0xff] %vm1872, %v3026
  %3044 = vst.msk [vmem:[%s3036 + $0x38] sm:$0xff] %vm1872, %v3027
  %3045 = vst.msk [vmem:[%s3036 + $0x40] sm:$0xff] %vm1872, %v3028
  %3046 = vst.msk [vmem:[%s3036 + $0x48] sm:$0xff] %vm1872, %v3029
  %3047 = vst.msk [vmem:[%s3036 + $0x50] sm:$0xff] %vm1872, %v3030
  %3048 = vst.msk [vmem:[%s3036 + $0x58] sm:$0xff] %vm1872, %v3031
  %3049 = vst.msk [vmem:[%s3036 + $0x60] sm:$0xff] %vm1872, %v3032
  %3050 = vst.msk [vmem:[%s3036 + $0x68] sm:$0xff] %vm1872, %v3033
  %3051 = vst.msk [vmem:[%s3036 + $0x70] sm:$0xff] %vm1872, %v3034
  %3052 = vst.msk [vmem:[%s3036 + $0x78] sm:$0xff] %vm1872, %v3035
  %v3053 = vld [vmem:[%s1283] sm:$0xff]
  %v3054 = vld [vmem:[%s1283 + $0x10] sm:$0xff]
  %v3055 = vld [vmem:[%s1283 + $0x20] sm:$0xff]
  %v3056 = vld [vmem:[%s1283 + $0x30] sm:$0xff]
  %v3057 = vld [vmem:[%s1283 + $0x40] sm:$0xff]
  %v3058 = vld [vmem:[%s1283 + $0x50] sm:$0xff]
  %v3059 = vld [vmem:[%s1283 + $0x60] sm:$0xff]
  %v3060 = vld [vmem:[%s1283 + $0x70] sm:$0xff]
  %v3061 = vld [vmem:[%s1283 + $0x90] sm:$0xff]
  %v3062 = vld [vmem:[%s1283 + $0xa0] sm:$0xff]
  %v3063 = vld [vmem:[%s1283 + $0xb0] sm:$0xff]
  %v3064 = vld [vmem:[%s1283 + $0xc0] sm:$0xff]
  %v3065 = vld [vmem:[%s1283 + $0xd0] sm:$0xff]
  %v3066 = vld [vmem:[%s1283 + $0xe0] sm:$0xff]
  %v3067 = vld [vmem:[%s1283 + $0xf0] sm:$0xff]
  %v3068 = vld [vmem:[%s1283 + $0x100] sm:$0xff]
  %v3069 = vld [vmem:[%s1218 + $0x1] sm:$0xff]
  %v3070 = vld [vmem:[%s1218 + $0x11] sm:$0xff]
  %v3071 = vld [vmem:[%s1218 + $0x21] sm:$0xff]
  %v3072 = vld [vmem:[%s1218 + $0x31] sm:$0xff]
  %v3073 = vld [vmem:[%s1218 + $0x41] sm:$0xff]
  %v3074 = vld [vmem:[%s1218 + $0x51] sm:$0xff]
  %v3075 = vld [vmem:[%s1218 + $0x61] sm:$0xff]
  %v3076 = vld [vmem:[%s1218 + $0x71] sm:$0xff]
  %v3077 = vld [vmem:[%s1218 + $0x91] sm:$0xff]
  %v3078 = vld [vmem:[%s1218 + $0xa1] sm:$0xff]
  %v3079 = vld [vmem:[%s1218 + $0xb1] sm:$0xff]
  %v3080 = vld [vmem:[%s1218 + $0xc1] sm:$0xff]
  %v3081 = vld [vmem:[%s1218 + $0xd1] sm:$0xff]
  %v3082 = vld [vmem:[%s1218 + $0xe1] sm:$0xff]
  %v3083 = vld [vmem:[%s1218 + $0xf1] sm:$0xff]
  %v3084 = vld [vmem:[%s1218 + $0x101] sm:$0xff]
  %v3086 = vsel %vm927, %v3069, 0
  %v3089 = vsel %vm927, %v3070, 0
  %v3092 = vsel %vm927, %v3071, 0
  %v3095 = vsel %vm927, %v3072, 0
  %v3098 = vsel %vm927, %v3073, 0
  %v3101 = vsel %vm927, %v3074, 0
  %v3104 = vsel %vm927, %v3075, 0
  %v3107 = vsel %vm927, %v3076, 0
  %v3110 = vsel %vm927, %v3077, 0
  %v3113 = vsel %vm927, %v3078, 0
  %v3116 = vsel %vm927, %v3079, 0
  %v3119 = vsel %vm927, %v3080, 0
  %v3122 = vsel %vm927, %v3081, 0
  %v3125 = vsel %vm927, %v3082, 0
  %v3128 = vsel %vm927, %v3083, 0
  %v3131 = vsel %vm927, %v3084, 0
  %3133 = vmatpush.msra.mxu0 0.0
  %3134 = vmatpush.msra.mxu0 0.0
  %3135 = vmatpush.msra.mxu0 0.0
  %3136 = vmatpush.msra.mxu0 0.0
  %3137 = vmatpush.msra.mxu0 0.0
  %3138 = vmatpush.msra.mxu0 0.0
  %3139 = vmatpush.msra.mxu0 0.0
  %3140 = vmatpush.msra.mxu0 0.0
  %3141 = vmatpush.msra.mxu0 0.0
  %3142 = vmatpush.msra.mxu0 0.0
  %3143 = vmatpush.msra.mxu0 0.0
  %3144 = vmatpush.msra.mxu0 0.0
  %3145 = vmatpush.msra.mxu0 0.0
  %3146 = vmatpush.msra.mxu0 0.0
  %3147 = vmatpush.msra.mxu0 0.0
  %3148 = vmatpush.msra.mxu0 %v1301
  %3149 = vmatmul.f32.gmra.mxu0 %v3086
  %v3150 = vpop.f32.mrf.mxu0
  %v3151 = vadd.f32 0.0, %v3150
  %3152 = vmatmul.f32.gmra.mxu0 %v3089
  %v3153 = vpop.f32.mrf.mxu0
  %v3154 = vadd.f32 0.0, %v3153
  %3155 = vmatmul.f32.gmra.mxu0 %v3092
  %v3156 = vpop.f32.mrf.mxu0
  %v3157 = vadd.f32 0.0, %v3156
  %3158 = vmatmul.f32.gmra.mxu0 %v3095
  %v3159 = vpop.f32.mrf.mxu0
  %v3160 = vadd.f32 0.0, %v3159
  %3161 = vmatmul.f32.gmra.mxu0 %v3098
  %v3162 = vpop.f32.mrf.mxu0
  %v3163 = vadd.f32 0.0, %v3162
  %3164 = vmatmul.f32.gmra.mxu0 %v3101
  %v3165 = vpop.f32.mrf.mxu0
  %v3166 = vadd.f32 0.0, %v3165
  %3167 = vmatmul.f32.gmra.mxu0 %v3104
  %v3168 = vpop.f32.mrf.mxu0
  %v3169 = vadd.f32 0.0, %v3168
  %3170 = vmatmul.f32.gmra.mxu0 %v3107
  %v3171 = vpop.f32.mrf.mxu0
  %v3172 = vadd.f32 0.0, %v3171
  %3173 = vmatmul.f32.gmra.mxu0 %v3110
  %v3174 = vpop.f32.mrf.mxu0
  %v3175 = vadd.f32 0.0, %v3174
  %3176 = vmatmul.f32.gmra.mxu0 %v3113
  %v3177 = vpop.f32.mrf.mxu0
  %v3178 = vadd.f32 0.0, %v3177
  %3179 = vmatmul.f32.gmra.mxu0 %v3116
  %v3180 = vpop.f32.mrf.mxu0
  %v3181 = vadd.f32 0.0, %v3180
  %3182 = vmatmul.f32.gmra.mxu0 %v3119
  %v3183 = vpop.f32.mrf.mxu0
  %v3184 = vadd.f32 0.0, %v3183
  %3185 = vmatmul.f32.gmra.mxu0 %v3122
  %v3186 = vpop.f32.mrf.mxu0
  %v3187 = vadd.f32 0.0, %v3186
  %3188 = vmatmul.f32.gmra.mxu0 %v3125
  %v3189 = vpop.f32.mrf.mxu0
  %v3190 = vadd.f32 0.0, %v3189
  %3191 = vmatmul.f32.gmra.mxu0 %v3128
  %v3192 = vpop.f32.mrf.mxu0
  %v3193 = vadd.f32 0.0, %v3192
  %3194 = vmatmul.f32.gmra.mxu0 %v3131
  %v3195 = vpop.f32.mrf.mxu0
  %v3196 = vadd.f32 0.0, %v3195
  %3197 = vdwg.mxu0
  %v3199 = vsel %vm927, %v3053, 0
  %v3202 = vsel %vm927, %v3054, 0
  %v3205 = vsel %vm927, %v3055, 0
  %v3208 = vsel %vm927, %v3056, 0
  %v3211 = vsel %vm927, %v3057, 0
  %v3214 = vsel %vm927, %v3058, 0
  %v3217 = vsel %vm927, %v3059, 0
  %v3220 = vsel %vm927, %v3060, 0
  %v3223 = vsel %vm927, %v3061, 0
  %v3226 = vsel %vm927, %v3062, 0
  %v3229 = vsel %vm927, %v3063, 0
  %v3232 = vsel %vm927, %v3064, 0
  %v3235 = vsel %vm927, %v3065, 0
  %v3238 = vsel %vm927, %v3066, 0
  %v3241 = vsel %vm927, %v3067, 0
  %v3244 = vsel %vm927, %v3068, 0
  %3246 = vmatpush.msra.mxu0 0.0
  %3247 = vmatpush.msra.mxu0 0.0
  %3248 = vmatpush.msra.mxu0 0.0
  %3249 = vmatpush.msra.mxu0 0.0
  %3250 = vmatpush.msra.mxu0 0.0
  %3251 = vmatpush.msra.mxu0 0.0
  %3252 = vmatpush.msra.mxu0 0.0
  %3253 = vmatpush.msra.mxu0 0.0
  %3254 = vmatpush.msra.mxu0 0.0
  %3255 = vmatpush.msra.mxu0 0.0
  %3256 = vmatpush.msra.mxu0 0.0
  %3257 = vmatpush.msra.mxu0 0.0
  %3258 = vmatpush.msra.mxu0 0.0
  %3259 = vmatpush.msra.mxu0 0.0
  %3260 = vmatpush.msra.mxu0 0.0
  %3261 = vmatpush.msra.mxu0 %v1300
  %3262 = vmatmul.f32.gmra.mxu0 %v3199
  %v3263 = vpop.f32.mrf.mxu0
  %v3264 = vadd.f32 %v3151, %v3263
  %3265 = vmatmul.f32.gmra.mxu0 %v3202
  %v3266 = vpop.f32.mrf.mxu0
  %v3267 = vadd.f32 %v3154, %v3266
  %3268 = vmatmul.f32.gmra.mxu0 %v3205
  %v3269 = vpop.f32.mrf.mxu0
  %v3270 = vadd.f32 %v3157, %v3269
  %3271 = vmatmul.f32.gmra.mxu0 %v3208
  %v3272 = vpop.f32.mrf.mxu0
  %v3273 = vadd.f32 %v3160, %v3272
  %3274 = vmatmul.f32.gmra.mxu0 %v3211
  %v3275 = vpop.f32.mrf.mxu0
  %v3276 = vadd.f32 %v3163, %v3275
  %3277 = vmatmul.f32.gmra.mxu0 %v3214
  %v3278 = vpop.f32.mrf.mxu0
  %v3279 = vadd.f32 %v3166, %v3278
  %3280 = vmatmul.f32.gmra.mxu0 %v3217
  %v3281 = vpop.f32.mrf.mxu0
  %v3282 = vadd.f32 %v3169, %v3281
  %3283 = vmatmul.f32.gmra.mxu0 %v3220
  %v3284 = vpop.f32.mrf.mxu0
  %v3285 = vadd.f32 %v3172, %v3284
  %3286 = vmatmul.f32.gmra.mxu0 %v3223
  %v3287 = vpop.f32.mrf.mxu0
  %v3288 = vadd.f32 %v3175, %v3287
  %3289 = vmatmul.f32.gmra.mxu0 %v3226
  %v3290 = vpop.f32.mrf.mxu0
  %v3291 = vadd.f32 %v3178, %v3290
  %3292 = vmatmul.f32.gmra.mxu0 %v3229
  %v3293 = vpop.f32.mrf.mxu0
  %v3294 = vadd.f32 %v3181, %v3293
  %3295 = vmatmul.f32.gmra.mxu0 %v3232
  %v3296 = vpop.f32.mrf.mxu0
  %v3297 = vadd.f32 %v3184, %v3296
  %3298 = vmatmul.f32.gmra.mxu0 %v3235
  %v3299 = vpop.f32.mrf.mxu0
  %v3300 = vadd.f32 %v3187, %v3299
  %3301 = vmatmul.f32.gmra.mxu0 %v3238
  %v3302 = vpop.f32.mrf.mxu0
  %v3303 = vadd.f32 %v3190, %v3302
  %3304 = vmatmul.f32.gmra.mxu0 %v3241
  %v3305 = vpop.f32.mrf.mxu0
  %v3306 = vadd.f32 %v3193, %v3305
  %3307 = vmatmul.f32.gmra.mxu0 %v3244
  %v3308 = vpop.f32.mrf.mxu0
  %v3309 = vadd.f32 %v3196, %v3308
  %3310 = vdwg.mxu0
  %v3311 = vld [vmem:[%s2874] sm:$0xff]
  %v3312 = vld [vmem:[%s2874 + $0x10] sm:$0xff]
  %v3313 = vld [vmem:[%s2874 + $0x20] sm:$0xff]
  %v3314 = vld [vmem:[%s2874 + $0x30] sm:$0xff]
  %v3315 = vld [vmem:[%s2874 + $0x40] sm:$0xff]
  %v3316 = vld [vmem:[%s2874 + $0x50] sm:$0xff]
  %v3317 = vld [vmem:[%s2874 + $0x60] sm:$0xff]
  %v3318 = vld [vmem:[%s2874 + $0x70] sm:$0xff]
  %v3319 = vld [vmem:[%s2874 + $0x90] sm:$0xff]
  %v3320 = vld [vmem:[%s2874 + $0xa0] sm:$0xff]
  %v3321 = vld [vmem:[%s2874 + $0xb0] sm:$0xff]
  %v3322 = vld [vmem:[%s2874 + $0xc0] sm:$0xff]
  %v3323 = vld [vmem:[%s2874 + $0xd0] sm:$0xff]
  %v3324 = vld [vmem:[%s2874 + $0xe0] sm:$0xff]
  %v3325 = vld [vmem:[%s2874 + $0xf0] sm:$0xff]
  %v3326 = vld [vmem:[%s2874 + $0x100] sm:$0xff]
  %v3328 = vsel %vm927, %v3311, 0
  %v3331 = vsel %vm927, %v3312, 0
  %v3334 = vsel %vm927, %v3313, 0
  %v3337 = vsel %vm927, %v3314, 0
  %v3340 = vsel %vm927, %v3315, 0
  %v3343 = vsel %vm927, %v3316, 0
  %v3346 = vsel %vm927, %v3317, 0
  %v3349 = vsel %vm927, %v3318, 0
  %v3352 = vsel %vm927, %v3319, 0
  %v3355 = vsel %vm927, %v3320, 0
  %v3358 = vsel %vm927, %v3321, 0
  %v3361 = vsel %vm927, %v3322, 0
  %v3364 = vsel %vm927, %v3323, 0
  %v3367 = vsel %vm927, %v3324, 0
  %v3370 = vsel %vm927, %v3325, 0
  %v3373 = vsel %vm927, %v3326, 0
  %3375 = vmatpush.msra.mxu0 0.0
  %3376 = vmatpush.msra.mxu0 0.0
  %3377 = vmatpush.msra.mxu0 0.0
  %3378 = vmatpush.msra.mxu0 0.0
  %3379 = vmatpush.msra.mxu0 0.0
  %3380 = vmatpush.msra.mxu0 0.0
  %3381 = vmatpush.msra.mxu0 0.0
  %3382 = vmatpush.msra.mxu0 0.0
  %3383 = vmatpush.msra.mxu0 0.0
  %3384 = vmatpush.msra.mxu0 0.0
  %3385 = vmatpush.msra.mxu0 0.0
  %3386 = vmatpush.msra.mxu0 0.0
  %3387 = vmatpush.msra.mxu0 0.0
  %3388 = vmatpush.msra.mxu0 0.0
  %3389 = vmatpush.msra.mxu0 0.0
  %3390 = vmatpush.msra.mxu0 %v1302
  %3391 = vmatmul.f32.gmra.mxu0 %v3328
  %v3392 = vpop.f32.mrf.mxu0
  %v3393 = vadd.f32 0.0, %v3392
  %3394 = vmatmul.f32.gmra.mxu0 %v3331
  %v3395 = vpop.f32.mrf.mxu0
  %v3396 = vadd.f32 0.0, %v3395
  %3397 = vmatmul.f32.gmra.mxu0 %v3334
  %v3398 = vpop.f32.mrf.mxu0
  %v3399 = vadd.f32 0.0, %v3398
  %3400 = vmatmul.f32.gmra.mxu0 %v3337
  %v3401 = vpop.f32.mrf.mxu0
  %v3402 = vadd.f32 0.0, %v3401
  %3403 = vmatmul.f32.gmra.mxu0 %v3340
  %v3404 = vpop.f32.mrf.mxu0
  %v3405 = vadd.f32 0.0, %v3404
  %3406 = vmatmul.f32.gmra.mxu0 %v3343
  %v3407 = vpop.f32.mrf.mxu0
  %v3408 = vadd.f32 0.0, %v3407
  %3409 = vmatmul.f32.gmra.mxu0 %v3346
  %v3410 = vpop.f32.mrf.mxu0
  %v3411 = vadd.f32 0.0, %v3410
  %3412 = vmatmul.f32.gmra.mxu0 %v3349
  %v3413 = vpop.f32.mrf.mxu0
  %v3414 = vadd.f32 0.0, %v3413
  %3415 = vmatmul.f32.gmra.mxu0 %v3352
  %v3416 = vpop.f32.mrf.mxu0
  %v3417 = vadd.f32 0.0, %v3416
  %3418 = vmatmul.f32.gmra.mxu0 %v3355
  %v3419 = vpop.f32.mrf.mxu0
  %v3420 = vadd.f32 0.0, %v3419
  %3421 = vmatmul.f32.gmra.mxu0 %v3358
  %v3422 = vpop.f32.mrf.mxu0
  %v3423 = vadd.f32 0.0, %v3422
  %3424 = vmatmul.f32.gmra.mxu0 %v3361
  %v3425 = vpop.f32.mrf.mxu0
  %v3426 = vadd.f32 0.0, %v3425
  %3427 = vmatmul.f32.gmra.mxu0 %v3364
  %v3428 = vpop.f32.mrf.mxu0
  %v3429 = vadd.f32 0.0, %v3428
  %3430 = vmatmul.f32.gmra.mxu0 %v3367
  %v3431 = vpop.f32.mrf.mxu0
  %v3432 = vadd.f32 0.0, %v3431
  %3433 = vmatmul.f32.gmra.mxu0 %v3370
  %v3434 = vpop.f32.mrf.mxu0
  %v3435 = vadd.f32 0.0, %v3434
  %3436 = vmatmul.f32.gmra.mxu0 %v3373
  %v3437 = vpop.f32.mrf.mxu0
  %v3438 = vadd.f32 0.0, %v3437
  %3439 = vdwg.mxu0
  %v3440 = vadd.f32 %v3264, %v3393
  %v3441 = vadd.f32 %v3267, %v3396
  %v3442 = vadd.f32 %v3270, %v3399
  %v3443 = vadd.f32 %v3273, %v3402
  %v3444 = vadd.f32 %v3276, %v3405
  %v3445 = vadd.f32 %v3279, %v3408
  %v3446 = vadd.f32 %v3282, %v3411
  %v3447 = vadd.f32 %v3285, %v3414
  %v3448 = vadd.f32 %v3288, %v3417
  %v3449 = vadd.f32 %v3291, %v3420
  %v3450 = vadd.f32 %v3294, %v3423
  %v3451 = vadd.f32 %v3297, %v3426
  %v3452 = vadd.f32 %v3300, %v3429
  %v3453 = vadd.f32 %v3303, %v3432
  %v3454 = vadd.f32 %v3306, %v3435
  %v3455 = vadd.f32 %v3309, %v3438
  %v3456 = vld [vmem:[%s2728 + $0x1] sm:$0xff]
  %v3457 = vld [vmem:[%s2728 + $0x11] sm:$0xff]
  %v3458 = vld [vmem:[%s2728 + $0x21] sm:$0xff]
  %v3459 = vld [vmem:[%s2728 + $0x31] sm:$0xff]
  %v3460 = vld [vmem:[%s2728 + $0x41] sm:$0xff]
  %v3461 = vld [vmem:[%s2728 + $0x51] sm:$0xff]
  %v3462 = vld [vmem:[%s2728 + $0x61] sm:$0xff]
  %v3463 = vld [vmem:[%s2728 + $0x71] sm:$0xff]
  %v3464 = vld [vmem:[%s2728 + $0x91] sm:$0xff]
  %v3465 = vld [vmem:[%s2728 + $0xa1] sm:$0xff]
  %v3466 = vld [vmem:[%s2728 + $0xb1] sm:$0xff]
  %v3467 = vld [vmem:[%s2728 + $0xc1] sm:$0xff]
  %v3468 = vld [vmem:[%s2728 + $0xd1] sm:$0xff]
  %v3469 = vld [vmem:[%s2728 + $0xe1] sm:$0xff]
  %v3470 = vld [vmem:[%s2728 + $0xf1] sm:$0xff]
  %v3471 = vld [vmem:[%s2728 + $0x101] sm:$0xff]
  %v3473 = vsel %vm927, %v3456, 0
  %v3476 = vsel %vm927, %v3457, 0
  %v3479 = vsel %vm927, %v3458, 0
  %v3482 = vsel %vm927, %v3459, 0
  %v3485 = vsel %vm927, %v3460, 0
  %v3488 = vsel %vm927, %v3461, 0
  %v3491 = vsel %vm927, %v3462, 0
  %v3494 = vsel %vm927, %v3463, 0
  %v3497 = vsel %vm927, %v3464, 0
  %v3500 = vsel %vm927, %v3465, 0
  %v3503 = vsel %vm927, %v3466, 0
  %v3506 = vsel %vm927, %v3467, 0
  %v3509 = vsel %vm927, %v3468, 0
  %v3512 = vsel %vm927, %v3469, 0
  %v3515 = vsel %vm927, %v3470, 0
  %v3518 = vsel %vm927, %v3471, 0
  %3520 = vmatpush.msra.mxu0 0.0
  %3521 = vmatpush.msra.mxu0 0.0
  %3522 = vmatpush.msra.mxu0 0.0
  %3523 = vmatpush.msra.mxu0 0.0
  %3524 = vmatpush.msra.mxu0 0.0
  %3525 = vmatpush.msra.mxu0 0.0
  %3526 = vmatpush.msra.mxu0 0.0
  %3527 = vmatpush.msra.mxu0 0.0
  %3528 = vmatpush.msra.mxu0 0.0
  %3529 = vmatpush.msra.mxu0 0.0
  %3530 = vmatpush.msra.mxu0 0.0
  %3531 = vmatpush.msra.mxu0 0.0
  %3532 = vmatpush.msra.mxu0 0.0
  %3533 = vmatpush.msra.mxu0 0.0
  %3534 = vmatpush.msra.mxu0 0.0
  %3535 = vmatpush.msra.mxu0 %v1303
  %3536 = vmatmul.f32.gmra.mxu0 %v3473
  %v3537 = vpop.f32.mrf.mxu0
  %v3538 = vadd.f32 0.0, %v3537
  %3539 = vmatmul.f32.gmra.mxu0 %v3476
  %v3540 = vpop.f32.mrf.mxu0
  %v3541 = vadd.f32 0.0, %v3540
  %3542 = vmatmul.f32.gmra.mxu0 %v3479
  %v3543 = vpop.f32.mrf.mxu0
  %v3544 = vadd.f32 0.0, %v3543
  %3545 = vmatmul.f32.gmra.mxu0 %v3482
  %v3546 = vpop.f32.mrf.mxu0
  %v3547 = vadd.f32 0.0, %v3546
  %3548 = vmatmul.f32.gmra.mxu0 %v3485
  %v3549 = vpop.f32.mrf.mxu0
  %v3550 = vadd.f32 0.0, %v3549
  %3551 = vmatmul.f32.gmra.mxu0 %v3488
  %v3552 = vpop.f32.mrf.mxu0
  %v3553 = vadd.f32 0.0, %v3552
  %3554 = vmatmul.f32.gmra.mxu0 %v3491
  %v3555 = vpop.f32.mrf.mxu0
  %v3556 = vadd.f32 0.0, %v3555
  %3557 = vmatmul.f32.gmra.mxu0 %v3494
  %v3558 = vpop.f32.mrf.mxu0
  %v3559 = vadd.f32 0.0, %v3558
  %3560 = vmatmul.f32.gmra.mxu0 %v3497
  %v3561 = vpop.f32.mrf.mxu0
  %v3562 = vadd.f32 0.0, %v3561
  %3563 = vmatmul.f32.gmra.mxu0 %v3500
  %v3564 = vpop.f32.mrf.mxu0
  %v3565 = vadd.f32 0.0, %v3564
  %3566 = vmatmul.f32.gmra.mxu0 %v3503
  %v3567 = vpop.f32.mrf.mxu0
  %v3568 = vadd.f32 0.0, %v3567
  %3569 = vmatmul.f32.gmra.mxu0 %v3506
  %v3570 = vpop.f32.mrf.mxu0
  %v3571 = vadd.f32 0.0, %v3570
  %3572 = vmatmul.f32.gmra.mxu0 %v3509
  %v3573 = vpop.f32.mrf.mxu0
  %v3574 = vadd.f32 0.0, %v3573
  %3575 = vmatmul.f32.gmra.mxu0 %v3512
  %v3576 = vpop.f32.mrf.mxu0
  %v3577 = vadd.f32 0.0, %v3576
  %3578 = vmatmul.f32.gmra.mxu0 %v3515
  %v3579 = vpop.f32.mrf.mxu0
  %v3580 = vadd.f32 0.0, %v3579
  %3581 = vmatmul.f32.gmra.mxu0 %v3518
  %v3582 = vpop.f32.mrf.mxu0
  %v3583 = vadd.f32 0.0, %v3582
  %3584 = vdwg.mxu0
  %v3585 = vadd.f32 %v3440, %v3538
  %v3586 = vadd.f32 %v3441, %v3541
  %v3587 = vadd.f32 %v3442, %v3544
  %v3588 = vadd.f32 %v3443, %v3547
  %v3589 = vadd.f32 %v3444, %v3550
  %v3590 = vadd.f32 %v3445, %v3553
  %v3591 = vadd.f32 %v3446, %v3556
  %v3592 = vadd.f32 %v3447, %v3559
  %v3593 = vadd.f32 %v3448, %v3562
  %v3594 = vadd.f32 %v3449, %v3565
  %v3595 = vadd.f32 %v3450, %v3568
  %v3596 = vadd.f32 %v3451, %v3571
  %v3597 = vadd.f32 %v3452, %v3574
  %v3598 = vadd.f32 %v3453, %v3577
  %v3599 = vadd.f32 %v3454, %v3580
  %v3600 = vadd.f32 %v3455, %v3583
  %v3601 = vadd.f32 %v3585, %v1854
  %v3602 = vadd.f32 %v3586, %v1854
  %v3603 = vadd.f32 %v3587, %v1854
  %v3604 = vadd.f32 %v3588, %v1854
  %v3605 = vadd.f32 %v3589, %v1854
  %v3606 = vadd.f32 %v3590, %v1854
  %v3607 = vadd.f32 %v3591, %v1854
  %v3608 = vadd.f32 %v3592, %v1854
  %v3609 = vadd.f32 %v3593, %v1854
  %v3610 = vadd.f32 %v3594, %v1854
  %v3611 = vadd.f32 %v3595, %v1854
  %v3612 = vadd.f32 %v3596, %v1854
  %v3613 = vadd.f32 %v3597, %v1854
  %v3614 = vadd.f32 %v3598, %v1854
  %v3615 = vadd.f32 %v3599, %v1854
  %v3616 = vadd.f32 %v3600, %v1854
  %s3617 = scalar_lea.vmem %s7, 384
  %3618 = vst.msk [vmem:[%s3617] sm:$0xff] %vm1872, %v3601
  %3619 = vst.msk [vmem:[%s3617 + $0x8] sm:$0xff] %vm1872, %v3602
  %3620 = vst.msk [vmem:[%s3617 + $0x10] sm:$0xff] %vm1872, %v3603
  %3621 = vst.msk [vmem:[%s3617 + $0x18] sm:$0xff] %vm1872, %v3604
  %3622 = vst.msk [vmem:[%s3617 + $0x20] sm:$0xff] %vm1872, %v3605
  %3623 = vst.msk [vmem:[%s3617 + $0x28] sm:$0xff] %vm1872, %v3606
  %3624 = vst.msk [vmem:[%s3617 + $0x30] sm:$0xff] %vm1872, %v3607
  %3625 = vst.msk [vmem:[%s3617 + $0x38] sm:$0xff] %vm1872, %v3608
  %3626 = vst.msk [vmem:[%s3617 + $0x40] sm:$0xff] %vm1872, %v3609
  %3627 = vst.msk [vmem:[%s3617 + $0x48] sm:$0xff] %vm1872, %v3610
  %3628 = vst.msk [vmem:[%s3617 + $0x50] sm:$0xff] %vm1872, %v3611
  %3629 = vst.msk [vmem:[%s3617 + $0x58] sm:$0xff] %vm1872, %v3612
  %3630 = vst.msk [vmem:[%s3617 + $0x60] sm:$0xff] %vm1872, %v3613
  %3631 = vst.msk [vmem:[%s3617 + $0x68] sm:$0xff] %vm1872, %v3614
  %3632 = vst.msk [vmem:[%s3617 + $0x70] sm:$0xff] %vm1872, %v3615
  %3633 = vst.msk [vmem:[%s3617 + $0x78] sm:$0xff] %vm1872, %v3616
  // Predicated region
  $region30: #{_lambda_.1} parent=0 // pred_check
    _
  $region31: #{_lambda_.1} parent=0 // pred_check_branch
    %3635 = sbr.rel (0) target = $region33
  $region32: #{_lambda_.1} parent=0 // pred_region
    _
  $region33: #{_lambda_.1} parent=0 // pred_fallthru
    _
  // Predicated region
  $region34: #{_lambda_.1} parent=0 // pred_check
    _
  $region35: #{_lambda_.1} parent=0 // pred_check_branch
    %3637 = sbr.rel (0) target = $region37
  $region36: #{_lambda_.1} parent=0 // pred_region
    _
  $region37: #{_lambda_.1} parent=0 // pred_fallthru
    _

</llo_original>
